<compile_context>
chip_gen: v6e
topology: v6e:2x2x1
jax: 0.10.0
libtpu: 0.0.40
codegen_flags: <defaults>
</compile_context>

<pallas_src>
import functools

import jax
import jax.numpy as jnp
from jax.experimental import pallas as pl
from jax.experimental.pallas import tpu as pltpu

_LANE = 128   # channel padding target (TPU lane width)
_SLACK = 8    # spare sublanes at the end of the flat scratch buffers (wrap-around reads)


def _round_up(x, m):
    return (x + m - 1) // m * m


def _pick_row_tile(H, W, max_rows=16):
    Wp = W + 2
    for r in range(min(H, max_rows), 0, -1):
        if H % r == 0 and (r == H or (r * Wp) % 8 == 0):
            return r
    return H


# ---------------------------------------------------------------------------
# fused kernel: conv1+BN+SiLU -> conv2+BN+SiLU (-> +residual) for one row tile
# ---------------------------------------------------------------------------
def _bottleneck_kernel(x_hbm, w1_ref, s1_ref, b1_ref, w2_ref, s2_ref, b2_ref,
                       o_ref, xb, yb, dma_sem, *, R, H, W, shortcut):
    """
    x_hbm : (N, (H+4)*(W+2), Cin_p)  zero-padded input, rows*cols flattened, in HBM.
    w*_ref: (9, Cin_p, Cout_p)       conv taps (index = kh*3+kw), compute dtype.
    s*/b* : (1, Cout_p)              folded BatchNorm scale / bias, f32.
    o_ref : (1, R*(W+2), Cout_p)     output tile (left-aligned, 2 junk cols per row).
    xb/yb : VMEM scratch: input window with 2-row halo / intermediate rows (+1-row halo).
    """
    Wp = W + 2
    L_in = (R + 4) * Wp      # input rows DMA'd per tile (2-row halo each side)
    L_mid = (R + 2) * Wp     # conv1 rows needed by conv2 (1-row halo each side)
    L_out = R * Wp           # rows produced by this tile
    taps = [kh * Wp + kw for kh in range(3) for kw in range(3)]

    n = pl.program_id(0)
    r = pl.program_id(1)

    # ---- fetch the halo'd input row window: padded-image rows [r*R, r*R + R + 4).
    cp = pltpu.make_async_copy(
        x_hbm.at[n, pl.ds(r * (R * Wp), L_in), :],
        xb.at[pl.ds(0, L_in), :],
        dma_sem,
    )
    cp.start()
    cp.wait()
    # zero the slack tail (only ever read into discarded wrap-around columns).
    xb[pl.ds(L_in, _SLACK), :] = jnp.zeros((_SLACK, xb.shape[1]), xb.dtype)

    # ---- conv1: 9 contiguous flat-offset slices @ (Cin_p, Cout_p) on the MXU.
    co1 = w1_ref.shape[2]
    acc = jnp.zeros((L_mid, co1), jnp.float32)
    for t, off in enumerate(taps):
        acc = acc + jnp.dot(xb[pl.ds(off, L_mid), :], w1_ref[t],
                            preferred_element_type=jnp.float32)
    z = acc * s1_ref[...] + b1_ref[...]          # folded BN affine (f32)
    y1 = z * jax.nn.sigmoid(z)                   # SiLU (f32)

    # Zero the 2 wrap-around columns per row and the out-of-image halo rows so the
    # intermediate behaves like a properly zero-padded feature map for conv2.
    idx = jax.lax.broadcasted_iota(jnp.int32, (L_mid, 1), 0)
    col_ok = (idx % Wp) < W
    lo = jnp.maximum(0, 1 - r * R) * Wp              # first valid flat position
    hi = jnp.minimum(R + 2, H - r * R + 1) * Wp      # one past the last valid row
    y1 = jnp.where(col_ok & (idx >= lo) & (idx < hi), y1, 0.0).astype(yb.dtype)

    # Store shifted by one element: yb becomes a left/right zero-padded buffer.
    yb[pl.ds(0, 1), :] = jnp.zeros((1, yb.shape[1]), yb.dtype)
    yb[pl.ds(1, L_mid), :] = y1
    yb[pl.ds(1 + L_mid, _SLACK), :] = jnp.zeros((_SLACK, yb.shape[1]), yb.dtype)

    # ---- conv2: same scheme, reading the VMEM-resident intermediate.
    co2 = w2_ref.shape[2]
    acc2 = jnp.zeros((L_out, co2), jnp.float32)
    for t, off in enumerate(taps):
        acc2 = acc2 + jnp.dot(yb[pl.ds(off, L_out), :], w2_ref[t],
                              preferred_element_type=jnp.float32)
    z2 = acc2 * s2_ref[...] + b2_ref[...]
    y2 = z2 * jax.nn.sigmoid(z2)

    if shortcut:
        # residual = this tile's own input rows, already resident in xb.
        y2 = y2 + xb[pl.ds(2 * Wp + 1, L_out), :].astype(jnp.float32)

    o_ref[0] = y2.astype(o_ref.dtype)


# ---------------------------------------------------------------------------
# parameter preparation (hoisted out of the forward pass)
# ---------------------------------------------------------------------------
def _conv_taps(w_oihw, cin_p, cout_p, dtype):
    """(Cout, Cin, 3, 3) OIHW -> (9, Cin_p, Cout_p), zero-padded, compute dtype."""
    cout, cin = w_oihw.shape[0], w_oihw.shape[1]
    w = jnp.transpose(w_oihw, (2, 3, 1, 0)).reshape(9, cin, cout)
    w = jnp.pad(w, ((0, 0), (0, cin_p - cin), (0, cout_p - cout)))
    return w.astype(dtype)


def prepare_bottleneck_params(params, compute_dtype=jnp.bfloat16):
    """One-time weight re-layout: taps-major, lane-padded channels, compute dtype."""
    cout, cin = params["w1"].shape[0], params["w1"].shape[1]
    ci, co = _round_up(cin, _LANE), _round_up(cout, _LANE)

    def pad_vec(v):
        return jnp.pad(v.astype(jnp.float32), ((0, 0), (0, co - v.shape[1])))

    return {
        "w1": _conv_taps(params["w1"], ci, co, compute_dtype),
        "w2": _conv_taps(params["w2"], co, co, compute_dtype),
        "s1": pad_vec(params["s1"]), "b1": pad_vec(params["b1"]),
        "s2": pad_vec(params["s2"]), "b2": pad_vec(params["b2"]),
    }


# ---------------------------------------------------------------------------
# forward pass wrappers
# ---------------------------------------------------------------------------
def bottleneck_forward_nhwc(prepped, x_nhwc, *, out_channels, shortcut=True,
                            row_tile=None):
    N, H, W, Cin = x_nhwc.shape
    Cout = out_channels
    Ci, Co = prepped["w1"].shape[1], prepped["w1"].shape[2]
    cdtype = prepped["w1"].dtype
    if shortcut and Cin != Cout:
        raise ValueError("shortcut requires in_channels == out_channels")
    if Ci != _round_up(Cin, _LANE) or Co < Cout:
        raise ValueError("prepared params do not match the input shape")

    Wp = W + 2
    R = row_tile if row_tile is not None else _pick_row_tile(H, W)
    if H % R != 0 or not (R == H or (R * Wp) % 8 == 0):
        raise ValueError(f"invalid row_tile {R} for H={H}, W={W}")
    L_in, L_mid, L_out = (R + 4) * Wp, (R + 2) * Wp, R * Wp

    # Single HBM prep pass: cast to compute dtype, lane-pad channels, 1 zero col and
    # 2 zero rows on each side; flatten (rows, cols) -> layout-preserving reshape.
    xp = jnp.pad(x_nhwc.astype(cdtype), ((0, 0), (2, 2), (1, 1), (0, Ci - Cin)))
    xp = xp.reshape(N, (H + 4) * Wp, Ci)

    out_dtype = x_nhwc.dtype
    kernel = functools.partial(_bottleneck_kernel, R=R, H=H, W=W, shortcut=shortcut)

    csize = jnp.dtype(cdtype).itemsize
    osize = jnp.dtype(out_dtype).itemsize
    vmem_est = ((L_in + _SLACK) * Ci * csize                 # xb scratch
                + (1 + L_mid + _SLACK) * Co * csize          # yb scratch
                + 2 * 9 * (Ci + Co) * Co * csize             # weight blocks (dbl buffered)
                + 8 * Co * 4                                 # scale / bias blocks
                + 2 * L_out * Co * osize                     # output blocks (dbl buffered)
                + (L_mid + L_out) * Co * 4)                  # f32 accumulators
    vmem_limit = int(min(max(2 * vmem_est, 32 * 1024 * 1024), 64 * 1024 * 1024))

    cost = pl.CostEstimate(
        flops=int(2 * 9 * N * H * W * (Cin * Cout + Cout * Cout)),
        transcendentals=int(2 * N * H * W * Cout),
        bytes_accessed=int(xp.size * csize + N * H * Wp * Co * osize
                           + 9 * (Ci + Co) * Co * csize),
    )

    out = pl.pallas_call(
        kernel,
        out_shape=jax.ShapeDtypeStruct((N, H * Wp, Co), out_dtype),
        grid=(N, H // R),
        in_specs=[
            pl.BlockSpec(memory_space=pl.ANY),                    # x stays in HBM (manual DMA)
            pl.BlockSpec((9, Ci, Co), lambda n, r: (0, 0, 0)),    # w1 taps
            pl.BlockSpec((1, Co), lambda n, r: (0, 0)),           # scale1
            pl.BlockSpec((1, Co), lambda n, r: (0, 0)),           # bias1
            pl.BlockSpec((9, Co, Co), lambda n, r: (0, 0, 0)),    # w2 taps
            pl.BlockSpec((1, Co), lambda n, r: (0, 0)),           # scale2
            pl.BlockSpec((1, Co), lambda n, r: (0, 0)),           # bias2
        ],
        out_specs=pl.BlockSpec((1, L_out, Co), lambda n, r: (n, r, 0)),
        scratch_shapes=[
            pltpu.VMEM((L_in + _SLACK, Ci), cdtype),              # input window + halo
            pltpu.VMEM((1 + L_mid + _SLACK, Co), cdtype),         # intermediate rows
            pltpu.SemaphoreType.DMA(()),
        ],
        compiler_params=pltpu.CompilerParams(
            dimension_semantics=("parallel", "parallel"),
            vmem_limit_bytes=vmem_limit),
        cost_estimate=cost,
    )(xp, prepped["w1"], prepped["s1"], prepped["b1"],
      prepped["w2"], prepped["s2"], prepped["b2"])

    # crop the 2 wrap-around columns per row and the channel padding.
    return out.reshape(N, H, Wp, Co)[:, :, :W, :Cout]


@functools.partial(jax.jit, static_argnames=("out_channels", "shortcut", "row_tile"))
def bottleneck_forward(prepped, x_nchw, *, out_channels, shortcut=True, row_tile=None):
    """Matches Bottleneck.forward with NCHW input/output (PyTorch convention).
    Prefer bottleneck_forward_nhwc directly to keep a whole network channels-last."""
    x = jnp.transpose(x_nchw, (0, 2, 3, 1))
    y = bottleneck_forward_nhwc(prepped, x, out_channels=out_channels,
                                shortcut=shortcut, row_tile=row_tile)
    return jnp.transpose(y, (0, 3, 1, 2))


# ---------------------------------------------------------------------------
# synthetic parameters + pure-JAX reference
# ---------------------------------------------------------------------------
def init_bottleneck_params(key, in_channels, out_channels, eps=1e-5):
    """Deterministic synthetic params. Conv weights OIHW (PyTorch), BN folded (eval)."""
    ks = jax.random.split(key, 10)

    def bn_fold(kg, kb, km, kv, c):
        gamma = 1.0 + 0.1 * jax.random.normal(kg, (c,), jnp.float32)
        beta = 0.1 * jax.random.normal(kb, (c,), jnp.float32)
        mean = 0.1 * jax.random.normal(km, (c,), jnp.float32)
        var = 1.0 + jnp.abs(jax.random.normal(kv, (c,), jnp.float32))
        scale = gamma / jnp.sqrt(var + eps)
        bias = beta - mean * scale
        return scale[None, :], bias[None, :]

    w1 = 0.2 * jax.random.normal(ks[0], (out_channels, in_channels, 3, 3), jnp.float32)
    w2 = 0.2 * jax.random.normal(ks[1], (out_channels, out_channels, 3, 3), jnp.float32)
    s1, b1 = bn_fold(ks[2], ks[3], ks[4], ks[5], out_channels)
    s2, b2 = bn_fold(ks[6], ks[7], ks[8], ks[9], out_channels)
    return {"w1": w1, "s1": s1, "b1": b1, "w2": w2, "s2": s2, "b2": b2}


def bottleneck_reference(params, x_nchw, shortcut=True):
    """Pure-JAX reference (lax conv) for correctness check."""
    def conv(x, w, scale, bias):
        y = jax.lax.conv_general_dilated(
            x, w, (1, 1), ((1, 1), (1, 1)),
            dimension_numbers=("NCHW", "OIHW", "NCHW"))
        y = y * scale[0][None, :, None, None] + bias[0][None, :, None, None]
        return y * jax.nn.sigmoid(y)

    y = conv(x_nchw, params["w1"], params["s1"], params["b1"])
    y = conv(y, params["w2"], params["s2"], params["b2"])
    if shortcut:
        y = y + x_nchw
    return y


if __name__ == "__main__":
    key = jax.random.PRNGKey(0)
    k_x, k_p = jax.random.split(key)

    N, C, H, W = 2, 4, 16, 16          # in_channels == out_channels (shortcut valid)
    x = jax.random.normal(k_x, (N, C, H, W), jnp.float32)
    params = init_bottleneck_params(k_p, in_channels=C, out_channels=C)
    ref = bottleneck_reference(params, x, shortcut=True)

    # f32 compute path, 2 row tiles (exercises halo / masking), tight check.
    pp32 = prepare_bottleneck_params(params, compute_dtype=jnp.float32)
    out32 = jax.block_until_ready(
        bottleneck_forward(pp32, x, out_channels=C, shortcut=True, row_tile=8))
    assert out32.shape == (N, C, H, W)
    assert jnp.allclose(out32, ref, atol=5e-4, rtol=5e-4), \
        f"f32 max abs err {jnp.max(jnp.abs(out32 - ref))}"

    # bf16 compute path (production configuration), single row tile.
    ppbf = prepare_bottleneck_params(params, compute_dtype=jnp.bfloat16)
    outbf = jax.block_until_ready(
        bottleneck_forward(ppbf, x, out_channels=C, shortcut=True, row_tile=16))
    assert outbf.shape == (N, C, H, W)
    assert jnp.allclose(outbf, ref, atol=1e-1, rtol=5e-2), \
        f"bf16 max abs err {jnp.max(jnp.abs(outbf - ref))}"

    print("KERNEL_OK")
</pallas_src>

<mosaic_0001>
module attributes {stable_mosaic.version = 11 : i64} {
  func.func @_bottleneck_kernel(%arg0: i32, %arg1: i32, %arg2: memref<2x360x128xf32, #tpu.memory_space<any>>, %arg3: memref<9x128x128xf32, #tpu.memory_space<vmem>>, %arg4: memref<1x128xf32, #tpu.memory_space<vmem>>, %arg5: memref<1x128xf32, #tpu.memory_space<vmem>>, %arg6: memref<9x128x128xf32, #tpu.memory_space<vmem>>, %arg7: memref<1x128xf32, #tpu.memory_space<vmem>>, %arg8: memref<1x128xf32, #tpu.memory_space<vmem>>, %arg9: memref<1x144x128xf32, #tpu.memory_space<vmem>>, %arg10: memref<224x128xf32, #tpu.memory_space<vmem>>, %arg11: memref<189x128xf32, #tpu.memory_space<vmem>>, %arg12: memref<!tpu.dma_semaphore, #tpu.memory_space<semaphore_mem>>) attributes {dimension_semantics = [#tpu.dimension_semantics<parallel>, #tpu.dimension_semantics<parallel>], iteration_bounds = array<i64: 2, 2>, scalar_prefetch = 0 : i64, scratch_operands = 3 : i64, tpu.core_type = #tpu.core_type<tc>, window_params = [{}, {pipeline_mode = #tpu.pipeline_mode<synchronous>, transform_indices = @transform_1, window_bounds = array<i64: 9, 128, 128>}, {pipeline_mode = #tpu.pipeline_mode<synchronous>, transform_indices = @transform_2, window_bounds = array<i64: 1, 128>}, {pipeline_mode = #tpu.pipeline_mode<synchronous>, transform_indices = @transform_3, window_bounds = array<i64: 1, 128>}, {pipeline_mode = #tpu.pipeline_mode<synchronous>, transform_indices = @transform_4, window_bounds = array<i64: 9, 128, 128>}, {pipeline_mode = #tpu.pipeline_mode<synchronous>, transform_indices = @transform_5, window_bounds = array<i64: 1, 128>}, {pipeline_mode = #tpu.pipeline_mode<synchronous>, transform_indices = @transform_6, window_bounds = array<i64: 1, 128>}, {transform_indices = @transform_7, window_bounds = array<i64: 1, 144, 128>}]} {
    %c144_i32 = arith.constant 144 : i32
    %0 = arith.muli %arg1, %c144_i32 : i32
    %c0_i32 = arith.constant 0 : i32
    %1 = tpu.memref_slice %arg2[%arg0, %0, %c0_i32] : memref<2x360x128xf32, #tpu.memory_space<any>> -> memref<1x216x128xf32, #tpu.memory_space<any>>
    %2 = tpu.memref_squeeze %1 : memref<1x216x128xf32, #tpu.memory_space<any>> -> memref<216x128xf32, #tpu.memory_space<any>>
    %c0_i32_0 = arith.constant 0 : i32
    %c0_i32_1 = arith.constant 0 : i32
    %3 = tpu.memref_slice %arg10[%c0_i32_0, %c0_i32_1] : memref<224x128xf32, #tpu.memory_space<vmem>> -> memref<216x128xf32, #tpu.memory_space<vmem>>
    tpu.enqueue_dma source(%2 : memref<216x128xf32, #tpu.memory_space<any>>) target(%3 : memref<216x128xf32, #tpu.memory_space<vmem>>) target_semaphore(%arg12 : memref<!tpu.dma_semaphore, #tpu.memory_space<semaphore_mem>>)
    %c0_i32_2 = arith.constant 0 : i32
    %4 = tpu.memref_slice %arg2[%arg0, %0, %c0_i32_2] : memref<2x360x128xf32, #tpu.memory_space<any>> -> memref<1x216x128xf32, #tpu.memory_space<any>>
    %5 = tpu.memref_squeeze %4 : memref<1x216x128xf32, #tpu.memory_space<any>> -> memref<216x128xf32, #tpu.memory_space<any>>
    %c0_i32_3 = arith.constant 0 : i32
    %c0_i32_4 = arith.constant 0 : i32
    %6 = tpu.memref_slice %arg10[%c0_i32_3, %c0_i32_4] : memref<224x128xf32, #tpu.memory_space<vmem>> -> memref<216x128xf32, #tpu.memory_space<vmem>>
    tpu.wait_dma2 semaphore(%arg12 : memref<!tpu.dma_semaphore, #tpu.memory_space<semaphore_mem>>) src(%5 : memref<216x128xf32, #tpu.memory_space<any>>) dst(%6 : memref<216x128xf32, #tpu.memory_space<vmem>>)
    %cst = arith.constant 0.000000e+00 : f32
    %7 = vector.broadcast %cst : f32 to vector<8x128xf32>
    %c216 = arith.constant 216 : index
    %c0 = arith.constant 0 : index
    %8 = vector.load %arg10[%c216, %c0] : memref<224x128xf32, #tpu.memory_space<vmem>>, vector<8x128xf32>
    tpu.vector_store %arg10[%c216, %c0], %7 {strides = array<i32>} : memref<224x128xf32, #tpu.memory_space<vmem>>, vector<8x128xf32>,
    %cst_5 = arith.constant 0.000000e+00 : f32
    %9 = vector.broadcast %cst_5 : f32 to vector<180x128xf32>
    %c0_6 = arith.constant 0 : index
    %c0_7 = arith.constant 0 : index
    %10 = vector.load %arg10[%c0_6, %c0_7] : memref<224x128xf32, #tpu.memory_space<vmem>>, vector<180x128xf32>
    %c0_8 = arith.constant 0 : index
    %c0_9 = arith.constant 0 : index
    %c0_10 = arith.constant 0 : index
    %11 = vector.load %arg3[%c0_8, %c0_9, %c0_10] : memref<9x128x128xf32, #tpu.memory_space<vmem>>, vector<1x128x128xf32>
    %12 = vector.shape_cast %11 : vector<1x128x128xf32> to vector<128x128xf32>
    %cst_11 = arith.constant dense<0.000000e+00> : vector<180x128xf32>
    %13 = tpu.matmul %10, %12, %cst_11 {dimension_numbers = #tpu.dot_dimension_numbers<[1], [0], [0], [1], [0, 0, 1, 1], [], []>} : vector<180x128xf32>, vector<128x128xf32>, vector<180x128xf32> -> vector<180x128xf32>
    %14 = arith.addf %9, %13 : vector<180x128xf32>
    %c1 = arith.constant 1 : index
    %c0_12 = arith.constant 0 : index
    %15 = vector.load %arg10[%c1, %c0_12] : memref<224x128xf32, #tpu.memory_space<vmem>>, vector<180x128xf32>
    %c1_13 = arith.constant 1 : index
    %c0_14 = arith.constant 0 : index
    %c0_15 = arith.constant 0 : index
    %16 = vector.load %arg3[%c1_13, %c0_14, %c0_15] : memref<9x128x128xf32, #tpu.memory_space<vmem>>, vector<1x128x128xf32>
    %17 = vector.shape_cast %16 : vector<1x128x128xf32> to vector<128x128xf32>
    %cst_16 = arith.constant dense<0.000000e+00> : vector<180x128xf32>
    %18 = tpu.matmul %15, %17, %cst_16 {dimension_numbers = #tpu.dot_dimension_numbers<[1], [0], [0], [1], [0, 0, 1, 1], [], []>} : vector<180x128xf32>, vector<128x128xf32>, vector<180x128xf32> -> vector<180x128xf32>
    %19 = arith.addf %14, %18 : vector<180x128xf32>
    %c2 = arith.constant 2 : index
    %c0_17 = arith.constant 0 : index
    %20 = vector.load %arg10[%c2, %c0_17] : memref<224x128xf32, #tpu.memory_space<vmem>>, vector<180x128xf32>
    %c2_18 = arith.constant 2 : index
    %c0_19 = arith.constant 0 : index
    %c0_20 = arith.constant 0 : index
    %21 = vector.load %arg3[%c2_18, %c0_19, %c0_20] : memref<9x128x128xf32, #tpu.memory_space<vmem>>, vector<1x128x128xf32>
    %22 = vector.shape_cast %21 : vector<1x128x128xf32> to vector<128x128xf32>
    %cst_21 = arith.constant dense<0.000000e+00> : vector<180x128xf32>
    %23 = tpu.matmul %20, %22, %cst_21 {dimension_numbers = #tpu.dot_dimension_numbers<[1], [0], [0], [1], [0, 0, 1, 1], [], []>} : vector<180x128xf32>, vector<128x128xf32>, vector<180x128xf32> -> vector<180x128xf32>
    %24 = arith.addf %19, %23 : vector<180x128xf32>
    %c18 = arith.constant 18 : index
    %c0_22 = arith.constant 0 : index
    %25 = vector.load %arg10[%c18, %c0_22] : memref<224x128xf32, #tpu.memory_space<vmem>>, vector<180x128xf32>
    %c3 = arith.constant 3 : index
    %c0_23 = arith.constant 0 : index
    %c0_24 = arith.constant 0 : index
    %26 = vector.load %arg3[%c3, %c0_23, %c0_24] : memref<9x128x128xf32, #tpu.memory_space<vmem>>, vector<1x128x128xf32>
    %27 = vector.shape_cast %26 : vector<1x128x128xf32> to vector<128x128xf32>
    %cst_25 = arith.constant dense<0.000000e+00> : vector<180x128xf32>
    %28 = tpu.matmul %25, %27, %cst_25 {dimension_numbers = #tpu.dot_dimension_numbers<[1], [0], [0], [1], [0, 0, 1, 1], [], []>} : vector<180x128xf32>, vector<128x128xf32>, vector<180x128xf32> -> vector<180x128xf32>
    %29 = arith.addf %24, %28 : vector<180x128xf32>
    %c19 = arith.constant 19 : index
    %c0_26 = arith.constant 0 : index
    %30 = vector.load %arg10[%c19, %c0_26] : memref<224x128xf32, #tpu.memory_space<vmem>>, vector<180x128xf32>
    %c4 = arith.constant 4 : index
    %c0_27 = arith.constant 0 : index
    %c0_28 = arith.constant 0 : index
    %31 = vector.load %arg3[%c4, %c0_27, %c0_28] : memref<9x128x128xf32, #tpu.memory_space<vmem>>, vector<1x128x128xf32>
    %32 = vector.shape_cast %31 : vector<1x128x128xf32> to vector<128x128xf32>
    %cst_29 = arith.constant dense<0.000000e+00> : vector<180x128xf32>
    %33 = tpu.matmul %30, %32, %cst_29 {dimension_numbers = #tpu.dot_dimension_numbers<[1], [0], [0], [1], [0, 0, 1, 1], [], []>} : vector<180x128xf32>, vector<128x128xf32>, vector<180x128xf32> -> vector<180x128xf32>
    %34 = arith.addf %29, %33 : vector<180x128xf32>
    %c20 = arith.constant 20 : index
    %c0_30 = arith.constant 0 : index
    %35 = vector.load %arg10[%c20, %c0_30] : memref<224x128xf32, #tpu.memory_space<vmem>>, vector<180x128xf32>
    %c5 = arith.constant 5 : index
    %c0_31 = arith.constant 0 : index
    %c0_32 = arith.constant 0 : index
    %36 = vector.load %arg3[%c5, %c0_31, %c0_32] : memref<9x128x128xf32, #tpu.memory_space<vmem>>, vector<1x128x128xf32>
    %37 = vector.shape_cast %36 : vector<1x128x128xf32> to vector<128x128xf32>
    %cst_33 = arith.constant dense<0.000000e+00> : vector<180x128xf32>
    %38 = tpu.matmul %35, %37, %cst_33 {dimension_numbers = #tpu.dot_dimension_numbers<[1], [0], [0], [1], [0, 0, 1, 1], [], []>} : vector<180x128xf32>, vector<128x128xf32>, vector<180x128xf32> -> vector<180x128xf32>
    %39 = arith.addf %34, %38 : vector<180x128xf32>
    %c36 = arith.constant 36 : index
    %c0_34 = arith.constant 0 : index
    %40 = vector.load %arg10[%c36, %c0_34] : memref<224x128xf32, #tpu.memory_space<vmem>>, vector<180x128xf32>
    %c6 = arith.constant 6 : index
    %c0_35 = arith.constant 0 : index
    %c0_36 = arith.constant 0 : index
    %41 = vector.load %arg3[%c6, %c0_35, %c0_36] : memref<9x128x128xf32, #tpu.memory_space<vmem>>, vector<1x128x128xf32>
    %42 = vector.shape_cast %41 : vector<1x128x128xf32> to vector<128x128xf32>
    %cst_37 = arith.constant dense<0.000000e+00> : vector<180x128xf32>
    %43 = tpu.matmul %40, %42, %cst_37 {dimension_numbers = #tpu.dot_dimension_numbers<[1], [0], [0], [1], [0, 0, 1, 1], [], []>} : vector<180x128xf32>, vector<128x128xf32>, vector<180x128xf32> -> vector<180x128xf32>
    %44 = arith.addf %39, %43 : vector<180x128xf32>
    %c37 = arith.constant 37 : index
    %c0_38 = arith.constant 0 : index
    %45 = vector.load %arg10[%c37, %c0_38] : memref<224x128xf32, #tpu.memory_space<vmem>>, vector<180x128xf32>
    %c7 = arith.constant 7 : index
    %c0_39 = arith.constant 0 : index
    %c0_40 = arith.constant 0 : index
    %46 = vector.load %arg3[%c7, %c0_39, %c0_40] : memref<9x128x128xf32, #tpu.memory_space<vmem>>, vector<1x128x128xf32>
    %47 = vector.shape_cast %46 : vector<1x128x128xf32> to vector<128x128xf32>
    %cst_41 = arith.constant dense<0.000000e+00> : vector<180x128xf32>
    %48 = tpu.matmul %45, %47, %cst_41 {dimension_numbers = #tpu.dot_dimension_numbers<[1], [0], [0], [1], [0, 0, 1, 1], [], []>} : vector<180x128xf32>, vector<128x128xf32>, vector<180x128xf32> -> vector<180x128xf32>
    %49 = arith.addf %44, %48 : vector<180x128xf32>
    %c38 = arith.constant 38 : index
    %c0_42 = arith.constant 0 : index
    %50 = vector.load %arg10[%c38, %c0_42] : memref<224x128xf32, #tpu.memory_space<vmem>>, vector<180x128xf32>
    %c8 = arith.constant 8 : index
    %c0_43 = arith.constant 0 : index
    %c0_44 = arith.constant 0 : index
    %51 = vector.load %arg3[%c8, %c0_43, %c0_44] : memref<9x128x128xf32, #tpu.memory_space<vmem>>, vector<1x128x128xf32>
    %52 = vector.shape_cast %51 : vector<1x128x128xf32> to vector<128x128xf32>
    %cst_45 = arith.constant dense<0.000000e+00> : vector<180x128xf32>
    %53 = tpu.matmul %50, %52, %cst_45 {dimension_numbers = #tpu.dot_dimension_numbers<[1], [0], [0], [1], [0, 0, 1, 1], [], []>} : vector<180x128xf32>, vector<128x128xf32>, vector<180x128xf32> -> vector<180x128xf32>
    %54 = arith.addf %49, %53 : vector<180x128xf32>
    %c0_46 = arith.constant 0 : index
    %c0_47 = arith.constant 0 : index
    %55 = vector.load %arg4[%c0_46, %c0_47] : memref<1x128xf32, #tpu.memory_space<vmem>>, vector<1x128xf32>
    %56 = vector.broadcast %55 : vector<1x128xf32> to vector<180x128xf32>
    %57 = arith.mulf %54, %56 : vector<180x128xf32>
    %c0_48 = arith.constant 0 : index
    %c0_49 = arith.constant 0 : index
    %58 = vector.load %arg5[%c0_48, %c0_49] : memref<1x128xf32, #tpu.memory_space<vmem>>, vector<1x128xf32>
    %59 = vector.broadcast %58 : vector<1x128xf32> to vector<180x128xf32>
    %60 = arith.addf %57, %59 : vector<180x128xf32>
    %61 = arith.negf %60 : vector<180x128xf32>
    %62 = math.exp %61 : vector<180x128xf32>
    %cst_50 = arith.constant 1.000000e+00 : f32
    %63 = vector.broadcast %cst_50 : f32 to vector<180x128xf32>
    %64 = arith.addf %63, %62 : vector<180x128xf32>
    %65 = arith.divf %63, %64 : vector<180x128xf32>
    %66 = arith.mulf %60, %65 : vector<180x128xf32>
    %67 = tpu.iota {dimensions = array<i32: 0>} : vector<180x1xi32>
    %c18_i32 = arith.constant 18 : i32
    %c0_i32_51 = arith.constant 0 : i32
    %68 = arith.cmpi eq, %c18_i32, %c0_i32_51 : i32
    %c1_i32 = arith.constant 1 : i32
    %69 = arith.select %68, %c1_i32, %c18_i32 : i32
    %70 = vector.broadcast %69 : i32 to vector<180x1xi32>
    %71 = arith.remsi %67, %70 : vector<180x1xi32>
    %c0_i32_52 = arith.constant 0 : i32
    %72 = vector.broadcast %c0_i32_52 : i32 to vector<180x1xi32>
    %73 = arith.cmpi ne, %71, %72 : vector<180x1xi32>
    %c0_i32_53 = arith.constant 0 : i32
    %74 = vector.broadcast %c0_i32_53 : i32 to vector<180x1xi32>
    %75 = arith.cmpi slt, %71, %74 : vector<180x1xi32>
    %c0_i32_54 = arith.constant 0 : i32
    %76 = arith.cmpi slt, %69, %c0_i32_54 : i32
    %77 = vector.broadcast %76 : i1 to vector<180x1xi1>
    %78 = vector.broadcast %77 : vector<180x1xi1> to vector<180x1xi1>
    %79 = arith.xori %75, %78 : vector<180x1xi1>
    %80 = arith.andi %79, %73 : vector<180x1xi1>
    %81 = vector.broadcast %69 : i32 to vector<180x1xi32>
    %82 = arith.addi %71, %81 : vector<180x1xi32>
    %83 = arith.select %80, %82, %71 : vector<180x1xi1>, vector<180x1xi32>
    %c16_i32 = arith.constant 16 : i32
    %84 = vector.broadcast %c16_i32 : i32 to vector<180x1xi32>
    %85 = arith.cmpi slt, %83, %84 : vector<180x1xi32>
    %c8_i32 = arith.constant 8 : i32
    %86 = arith.muli %arg1, %c8_i32 : i32
    %c1_i32_55 = arith.constant 1 : i32
    %87 = arith.subi %c1_i32_55, %86 : i32
    %c0_i32_56 = arith.constant 0 : i32
    %88 = arith.maxsi %c0_i32_56, %87 : i32
    %c18_i32_57 = arith.constant 18 : i32
    %89 = arith.muli %88, %c18_i32_57 : i32
    %c8_i32_58 = arith.constant 8 : i32
    %90 = arith.muli %arg1, %c8_i32_58 : i32
    %c16_i32_59 = arith.constant 16 : i32
    %91 = arith.subi %c16_i32_59, %90 : i32
    %c1_i32_60 = arith.constant 1 : i32
    %92 = arith.addi %91, %c1_i32_60 : i32
    %c10_i32 = arith.constant 10 : i32
    %93 = arith.minsi %c10_i32, %92 : i32
    %c18_i32_61 = arith.constant 18 : i32
    %94 = arith.muli %93, %c18_i32_61 : i32
    %95 = vector.broadcast %89 : i32 to vector<180x1xi32>
    %96 = arith.cmpi sge, %67, %95 : vector<180x1xi32>
    %97 = arith.andi %85, %96 : vector<180x1xi1>
    %98 = vector.broadcast %94 : i32 to vector<180x1xi32>
    %99 = arith.cmpi slt, %67, %98 : vector<180x1xi32>
    %100 = arith.andi %97, %99 : vector<180x1xi1>
    %cst_62 = arith.constant 0.000000e+00 : f32
    %101 = vector.shape_cast %100 : vector<180x1xi1> to vector<180x1xi1>
    %102 = vector.broadcast %101 : vector<180x1xi1> to vector<180x128xi1>
    %103 = vector.broadcast %cst_62 : f32 to vector<180x128xf32>
    %104 = arith.select %102, %66, %103 : vector<180x128xi1>, vector<180x128xf32>
    %cst_63 = arith.constant 0.000000e+00 : f32
    %105 = vector.broadcast %cst_63 : f32 to vector<1x128xf32>
    %c0_64 = arith.constant 0 : index
    %c0_65 = arith.constant 0 : index
    %106 = vector.load %arg11[%c0_64, %c0_65] : memref<189x128xf32, #tpu.memory_space<vmem>>, vector<1x128xf32>
    tpu.vector_store %arg11[%c0_64, %c0_65], %105 {strides = array<i32>} : memref<189x128xf32, #tpu.memory_space<vmem>>, vector<1x128xf32>,
    %c1_66 = arith.constant 1 : index
    %c0_67 = arith.constant 0 : index
    %107 = vector.load %arg11[%c1_66, %c0_67] : memref<189x128xf32, #tpu.memory_space<vmem>>, vector<180x128xf32>
    tpu.vector_store %arg11[%c1_66, %c0_67], %104 {strides = array<i32>} : memref<189x128xf32, #tpu.memory_space<vmem>>, vector<180x128xf32>,
    %cst_68 = arith.constant 0.000000e+00 : f32
    %108 = vector.broadcast %cst_68 : f32 to vector<8x128xf32>
    %c181 = arith.constant 181 : index
    %c0_69 = arith.constant 0 : index
    %109 = vector.load %arg11[%c181, %c0_69] : memref<189x128xf32, #tpu.memory_space<vmem>>, vector<8x128xf32>
    tpu.vector_store %arg11[%c181, %c0_69], %108 {strides = array<i32>} : memref<189x128xf32, #tpu.memory_space<vmem>>, vector<8x128xf32>,
    %cst_70 = arith.constant 0.000000e+00 : f32
    %110 = vector.broadcast %cst_70 : f32 to vector<144x128xf32>
    %c0_71 = arith.constant 0 : index
    %c0_72 = arith.constant 0 : index
    %111 = vector.load %arg11[%c0_71, %c0_72] : memref<189x128xf32, #tpu.memory_space<vmem>>, vector<144x128xf32>
    %c0_73 = arith.constant 0 : index
    %c0_74 = arith.constant 0 : index
    %c0_75 = arith.constant 0 : index
    %112 = vector.load %arg6[%c0_73, %c0_74, %c0_75] : memref<9x128x128xf32, #tpu.memory_space<vmem>>, vector<1x128x128xf32>
    %113 = vector.shape_cast %112 : vector<1x128x128xf32> to vector<128x128xf32>
    %cst_76 = arith.constant dense<0.000000e+00> : vector<144x128xf32>
    %114 = tpu.matmul %111, %113, %cst_76 {dimension_numbers = #tpu.dot_dimension_numbers<[1], [0], [0], [1], [0, 0, 1, 1], [], []>} : vector<144x128xf32>, vector<128x128xf32>, vector<144x128xf32> -> vector<144x128xf32>
    %115 = arith.addf %110, %114 : vector<144x128xf32>
    %c1_77 = arith.constant 1 : index
    %c0_78 = arith.constant 0 : index
    %116 = vector.load %arg11[%c1_77, %c0_78] : memref<189x128xf32, #tpu.memory_space<vmem>>, vector<144x128xf32>
    %c1_79 = arith.constant 1 : index
    %c0_80 = arith.constant 0 : index
    %c0_81 = arith.constant 0 : index
    %117 = vector.load %arg6[%c1_79, %c0_80, %c0_81] : memref<9x128x128xf32, #tpu.memory_space<vmem>>, vector<1x128x128xf32>
    %118 = vector.shape_cast %117 : vector<1x128x128xf32> to vector<128x128xf32>
    %cst_82 = arith.constant dense<0.000000e+00> : vector<144x128xf32>
    %119 = tpu.matmul %116, %118, %cst_82 {dimension_numbers = #tpu.dot_dimension_numbers<[1], [0], [0], [1], [0, 0, 1, 1], [], []>} : vector<144x128xf32>, vector<128x128xf32>, vector<144x128xf32> -> vector<144x128xf32>
    %120 = arith.addf %115, %119 : vector<144x128xf32>
    %c2_83 = arith.constant 2 : index
    %c0_84 = arith.constant 0 : index
    %121 = vector.load %arg11[%c2_83, %c0_84] : memref<189x128xf32, #tpu.memory_space<vmem>>, vector<144x128xf32>
    %c2_85 = arith.constant 2 : index
    %c0_86 = arith.constant 0 : index
    %c0_87 = arith.constant 0 : index
    %122 = vector.load %arg6[%c2_85, %c0_86, %c0_87] : memref<9x128x128xf32, #tpu.memory_space<vmem>>, vector<1x128x128xf32>
    %123 = vector.shape_cast %122 : vector<1x128x128xf32> to vector<128x128xf32>
    %cst_88 = arith.constant dense<0.000000e+00> : vector<144x128xf32>
    %124 = tpu.matmul %121, %123, %cst_88 {dimension_numbers = #tpu.dot_dimension_numbers<[1], [0], [0], [1], [0, 0, 1, 1], [], []>} : vector<144x128xf32>, vector<128x128xf32>, vector<144x128xf32> -> vector<144x128xf32>
    %125 = arith.addf %120, %124 : vector<144x128xf32>
    %c18_89 = arith.constant 18 : index
    %c0_90 = arith.constant 0 : index
    %126 = vector.load %arg11[%c18_89, %c0_90] : memref<189x128xf32, #tpu.memory_space<vmem>>, vector<144x128xf32>
    %c3_91 = arith.constant 3 : index
    %c0_92 = arith.constant 0 : index
    %c0_93 = arith.constant 0 : index
    %127 = vector.load %arg6[%c3_91, %c0_92, %c0_93] : memref<9x128x128xf32, #tpu.memory_space<vmem>>, vector<1x128x128xf32>
    %128 = vector.shape_cast %127 : vector<1x128x128xf32> to vector<128x128xf32>
    %cst_94 = arith.constant dense<0.000000e+00> : vector<144x128xf32>
    %129 = tpu.matmul %126, %128, %cst_94 {dimension_numbers = #tpu.dot_dimension_numbers<[1], [0], [0], [1], [0, 0, 1, 1], [], []>} : vector<144x128xf32>, vector<128x128xf32>, vector<144x128xf32> -> vector<144x128xf32>
    %130 = arith.addf %125, %129 : vector<144x128xf32>
    %c19_95 = arith.constant 19 : index
    %c0_96 = arith.constant 0 : index
    %131 = vector.load %arg11[%c19_95, %c0_96] : memref<189x128xf32, #tpu.memory_space<vmem>>, vector<144x128xf32>
    %c4_97 = arith.constant 4 : index
    %c0_98 = arith.constant 0 : index
    %c0_99 = arith.constant 0 : index
    %132 = vector.load %arg6[%c4_97, %c0_98, %c0_99] : memref<9x128x128xf32, #tpu.memory_space<vmem>>, vector<1x128x128xf32>
    %133 = vector.shape_cast %132 : vector<1x128x128xf32> to vector<128x128xf32>
    %cst_100 = arith.constant dense<0.000000e+00> : vector<144x128xf32>
    %134 = tpu.matmul %131, %133, %cst_100 {dimension_numbers = #tpu.dot_dimension_numbers<[1], [0], [0], [1], [0, 0, 1, 1], [], []>} : vector<144x128xf32>, vector<128x128xf32>, vector<144x128xf32> -> vector<144x128xf32>
    %135 = arith.addf %130, %134 : vector<144x128xf32>
    %c20_101 = arith.constant 20 : index
    %c0_102 = arith.constant 0 : index
    %136 = vector.load %arg11[%c20_101, %c0_102] : memref<189x128xf32, #tpu.memory_space<vmem>>, vector<144x128xf32>
    %c5_103 = arith.constant 5 : index
    %c0_104 = arith.constant 0 : index
    %c0_105 = arith.constant 0 : index
    %137 = vector.load %arg6[%c5_103, %c0_104, %c0_105] : memref<9x128x128xf32, #tpu.memory_space<vmem>>, vector<1x128x128xf32>
    %138 = vector.shape_cast %137 : vector<1x128x128xf32> to vector<128x128xf32>
    %cst_106 = arith.constant dense<0.000000e+00> : vector<144x128xf32>
    %139 = tpu.matmul %136, %138, %cst_106 {dimension_numbers = #tpu.dot_dimension_numbers<[1], [0], [0], [1], [0, 0, 1, 1], [], []>} : vector<144x128xf32>, vector<128x128xf32>, vector<144x128xf32> -> vector<144x128xf32>
    %140 = arith.addf %135, %139 : vector<144x128xf32>
    %c36_107 = arith.constant 36 : index
    %c0_108 = arith.constant 0 : index
    %141 = vector.load %arg11[%c36_107, %c0_108] : memref<189x128xf32, #tpu.memory_space<vmem>>, vector<144x128xf32>
    %c6_109 = arith.constant 6 : index
    %c0_110 = arith.constant 0 : index
    %c0_111 = arith.constant 0 : index
    %142 = vector.load %arg6[%c6_109, %c0_110, %c0_111] : memref<9x128x128xf32, #tpu.memory_space<vmem>>, vector<1x128x128xf32>
    %143 = vector.shape_cast %142 : vector<1x128x128xf32> to vector<128x128xf32>
    %cst_112 = arith.constant dense<0.000000e+00> : vector<144x128xf32>
    %144 = tpu.matmul %141, %143, %cst_112 {dimension_numbers = #tpu.dot_dimension_numbers<[1], [0], [0], [1], [0, 0, 1, 1], [], []>} : vector<144x128xf32>, vector<128x128xf32>, vector<144x128xf32> -> vector<144x128xf32>
    %145 = arith.addf %140, %144 : vector<144x128xf32>
    %c37_113 = arith.constant 37 : index
    %c0_114 = arith.constant 0 : index
    %146 = vector.load %arg11[%c37_113, %c0_114] : memref<189x128xf32, #tpu.memory_space<vmem>>, vector<144x128xf32>
    %c7_115 = arith.constant 7 : index
    %c0_116 = arith.constant 0 : index
    %c0_117 = arith.constant 0 : index
    %147 = vector.load %arg6[%c7_115, %c0_116, %c0_117] : memref<9x128x128xf32, #tpu.memory_space<vmem>>, vector<1x128x128xf32>
    %148 = vector.shape_cast %147 : vector<1x128x128xf32> to vector<128x128xf32>
    %cst_118 = arith.constant dense<0.000000e+00> : vector<144x128xf32>
    %149 = tpu.matmul %146, %148, %cst_118 {dimension_numbers = #tpu.dot_dimension_numbers<[1], [0], [0], [1], [0, 0, 1, 1], [], []>} : vector<144x128xf32>, vector<128x128xf32>, vector<144x128xf32> -> vector<144x128xf32>
    %150 = arith.addf %145, %149 : vector<144x128xf32>
    %c38_119 = arith.constant 38 : index
    %c0_120 = arith.constant 0 : index
    %151 = vector.load %arg11[%c38_119, %c0_120] : memref<189x128xf32, #tpu.memory_space<vmem>>, vector<144x128xf32>
    %c8_121 = arith.constant 8 : index
    %c0_122 = arith.constant 0 : index
    %c0_123 = arith.constant 0 : index
    %152 = vector.load %arg6[%c8_121, %c0_122, %c0_123] : memref<9x128x128xf32, #tpu.memory_space<vmem>>, vector<1x128x128xf32>
    %153 = vector.shape_cast %152 : vector<1x128x128xf32> to vector<128x128xf32>
    %cst_124 = arith.constant dense<0.000000e+00> : vector<144x128xf32>
    %154 = tpu.matmul %151, %153, %cst_124 {dimension_numbers = #tpu.dot_dimension_numbers<[1], [0], [0], [1], [0, 0, 1, 1], [], []>} : vector<144x128xf32>, vector<128x128xf32>, vector<144x128xf32> -> vector<144x128xf32>
    %155 = arith.addf %150, %154 : vector<144x128xf32>
    %c0_125 = arith.constant 0 : index
    %c0_126 = arith.constant 0 : index
    %156 = vector.load %arg7[%c0_125, %c0_126] : memref<1x128xf32, #tpu.memory_space<vmem>>, vector<1x128xf32>
    %157 = vector.broadcast %156 : vector<1x128xf32> to vector<144x128xf32>
    %158 = arith.mulf %155, %157 : vector<144x128xf32>
    %c0_127 = arith.constant 0 : index
    %c0_128 = arith.constant 0 : index
    %159 = vector.load %arg8[%c0_127, %c0_128] : memref<1x128xf32, #tpu.memory_space<vmem>>, vector<1x128xf32>
    %160 = vector.broadcast %159 : vector<1x128xf32> to vector<144x128xf32>
    %161 = arith.addf %158, %160 : vector<144x128xf32>
    %162 = arith.negf %161 : vector<144x128xf32>
    %163 = math.exp %162 : vector<144x128xf32>
    %cst_129 = arith.constant 1.000000e+00 : f32
    %164 = vector.broadcast %cst_129 : f32 to vector<144x128xf32>
    %165 = arith.addf %164, %163 : vector<144x128xf32>
    %166 = arith.divf %164, %165 : vector<144x128xf32>
    %167 = arith.mulf %161, %166 : vector<144x128xf32>
    %c37_130 = arith.constant 37 : index
    %c0_131 = arith.constant 0 : index
    %168 = vector.load %arg10[%c37_130, %c0_131] : memref<224x128xf32, #tpu.memory_space<vmem>>, vector<144x128xf32>
    %169 = arith.addf %167, %168 : vector<144x128xf32>
    %c0_132 = arith.constant 0 : index
    %c0_133 = arith.constant 0 : index
    %c0_134 = arith.constant 0 : index
    %170 = vector.load %arg9[%c0_132, %c0_133, %c0_134] : memref<1x144x128xf32, #tpu.memory_space<vmem>>, vector<1x144x128xf32>
    %171 = vector.shape_cast %170 : vector<1x144x128xf32> to vector<144x128xf32>
    %172 = vector.shape_cast %169 : vector<144x128xf32> to vector<1x144x128xf32>
    tpu.vector_store %arg9[%c0_132, %c0_133, %c0_134], %172 {strides = array<i32>} : memref<1x144x128xf32, #tpu.memory_space<vmem>>, vector<1x144x128xf32>,
    return
  }
  func.func @transform_1(%arg0: i32, %arg1: i32) -> (i32, i32, i32) {
    %c0_i32 = arith.constant 0 : i32
    %c0_i32_0 = arith.constant 0 : i32
    %c0_i32_1 = arith.constant 0 : i32
    %c0_i32_2 = arith.constant 0 : i32
    return %c0_i32, %c0_i32_0, %c0_i32_1 : i32, i32, i32
  }
  func.func @transform_2(%arg0: i32, %arg1: i32) -> (i32, i32) {
    %c0_i32 = arith.constant 0 : i32
    %c0_i32_0 = arith.constant 0 : i32
    %c0_i32_1 = arith.constant 0 : i32
    return %c0_i32, %c0_i32_0 : i32, i32
  }
  func.func @transform_3(%arg0: i32, %arg1: i32) -> (i32, i32) {
    %c0_i32 = arith.constant 0 : i32
    %c0_i32_0 = arith.constant 0 : i32
    %c0_i32_1 = arith.constant 0 : i32
    return %c0_i32, %c0_i32_0 : i32, i32
  }
  func.func @transform_4(%arg0: i32, %arg1: i32) -> (i32, i32, i32) {
    %c0_i32 = arith.constant 0 : i32
    %c0_i32_0 = arith.constant 0 : i32
    %c0_i32_1 = arith.constant 0 : i32
    %c0_i32_2 = arith.constant 0 : i32
    return %c0_i32, %c0_i32_0, %c0_i32_1 : i32, i32, i32
  }
  func.func @transform_5(%arg0: i32, %arg1: i32) -> (i32, i32) {
    %c0_i32 = arith.constant 0 : i32
    %c0_i32_0 = arith.constant 0 : i32
    %c0_i32_1 = arith.constant 0 : i32
    return %c0_i32, %c0_i32_0 : i32, i32
  }
  func.func @transform_6(%arg0: i32, %arg1: i32) -> (i32, i32) {
    %c0_i32 = arith.constant 0 : i32
    %c0_i32_0 = arith.constant 0 : i32
    %c0_i32_1 = arith.constant 0 : i32
    return %c0_i32, %c0_i32_0 : i32, i32
  }
  func.func @transform_7(%arg0: i32, %arg1: i32) -> (i32, i32, i32) {
    %c0_i32 = arith.constant 0 : i32
    %c0_i32_0 = arith.constant 0 : i32
    return %arg0, %arg1, %c0_i32 : i32, i32, i32
  }
}

</mosaic_0001>

<llo_original>
// kernel: bottleneck_forward.1
$region0: #{bottleneck_forward.1}
  #allocation0 [shape = 'u32[]', space=smem, size = 0x4, offset = 0x4, fixed_abs, tag = 'smem constant byte address 0x4 - core index']
  #allocation1 [shape = 'u32[144,128]{1,0:T(1,128)}', space=vmem, size = 0x12000, scoped, tag = 'internal scratch']
  #allocation2 [shape = 'f32[224,128]{1,0:T(8,128)}', space=vmem, size = 0x1c000, scoped, tag = 'scratch operand']
  #allocation3 [shape = 'f32[189,128]{1,0:T(8,128)}', space=vmem, size = 0x18000, scoped, tag = 'scratch operand']
  #allocation4 [shape = 's32[1]{0}', space=sflag, size = 0x4, scoped, tag = 'scratch operand']
  #allocation5 [shape = 's32[]', space=sflag, size = 0x4, offset = 0, fixed_abs, tag = 'sflag constant byte address 0x0 - dummy sync flag']
  %s0 = inlined_call_operand.vmem [shape: f32[2,360,128], index: 0, kind: input, shape index: {}]
  %s1 = inlined_call_operand.vmem [shape: f32[9,128,128], index: 1, kind: input, shape index: {}]
  %s2 = inlined_call_operand.vmem [shape: f32[1,128], index: 2, kind: input, shape index: {}]
  %s3 = inlined_call_operand.vmem [shape: f32[1,128], index: 3, kind: input, shape index: {}]
  %s4 = inlined_call_operand.vmem [shape: f32[9,128,128], index: 4, kind: input, shape index: {}]
  %s5 = inlined_call_operand.vmem [shape: f32[1,128], index: 5, kind: input, shape index: {}]
  %s6 = inlined_call_operand.vmem [shape: f32[1,128], index: 6, kind: input, shape index: {}]
  %s7 = inlined_call_operand.vmem [shape: f32[2,288,128], index: 7, kind: output, shape index: {}]
  %s8 = sld [smem:[#allocation0]]
  $region91: #{bottleneck_forward.1} parent=0
    _
  %s10 = ssub.s32 1, %s8
  %s11 = scalar_select 0, %s10, %s8
  loop: start=0, step=1, limit=6
  $region2: #{bottleneck_forward.1} parent=0 // loop_pre_header
    _
  $region3: #{bottleneck_forward.1} parent=0 // loop_header
    %s13 = sphi 0, %s17
    %p14 = scmp.ge.s32.totalorder %s13, 6
    %s20 = sphi 0, %s32
    %s21 = sphi 0, %s28
    %s22 = sphi 0, %s20
    %s23 = sphi 0, %s21
    %s24 = sphi 0, %s22
    %s25 = sphi 0, %s23
    %s33 = sphi 0, %s33
    %s35 = sphi 0, %s33
    %s36 = sphi 0, %s35
    %s50 = sphi 0, %s36
    %s54 = sphi 0, %s54
    %s56 = sphi 0, %s54
    %s57 = sphi 0, %s56
    %s71 = sphi 0, %s57
    %s75 = sphi 0, %s75
    %s77 = sphi 0, %s75
    %s78 = sphi 0, %s77
    %s92 = sphi 0, %s78
    %s96 = sphi 0, %s96
    %s98 = sphi 0, %s96
    %s99 = sphi 0, %s98
    %s113 = sphi 0, %s99
    %s117 = sphi 0, %s117
    %s119 = sphi 0, %s117
    %s120 = sphi 0, %s119
    %s134 = sphi 0, %s120
    %s138 = sphi 0, %s138
    %s140 = sphi 0, %s138
    %s141 = sphi 0, %s140
    %s155 = sphi 0, %s141
    %s163 = sphi 0, %s165
    %s166 = sphi 0, %s163
    %s167 = sphi 0, %s166
    %s183 = sphi 0, %s167
  $region4: #{bottleneck_forward.1} parent=0 // loop_header_branch
    %16 = sbr.rel (%p14) target = $region8
  $region5: #{bottleneck_forward.1} parent=0 // loop_body
    %s18 = ssub.s32 %s13, 1
    %s19 = ssub.s32 %s13, 2
    %s26 = sadd.s32 1, %s21
    %p27 = scmp.ge.s32.totalorder %s26, 2
    %s28 = scalar_select %p27, 0, %s26
    %s29 = sadd.s32 1, %s20
    %s30 = scalar_select %p27, %s29, %s20
    %p31 = scmp.ge.s32.totalorder %s30, 2
    %s32 = scalar_select %p31, 0, %s30
    %s34 = sadd.s32 %s33, 1
    %p37 = scmp.eq.s32.totalorder %s13, 3
    %p38 = scmp.ne.s32.totalorder %s33, %s35
    %p39 = scmp.eq.s32.totalorder %s13, 0
    %p40 = por %p38, %p39
    %p41 = scmp.ne.s32.totalorder %s33, %s35
    %p42 = scmp.eq.s32.totalorder %s18, 3
    %p43 = por %p41, %p42
    %p44 = scmp.ne.s32.totalorder %s35, %s36
    %p45 = scmp.eq.s32.totalorder %s18, 0
    %p46 = por %p44, %p45
    %p47 = scmp.ne.s32.totalorder %s35, %s36
    %p48 = scmp.eq.s32.totalorder %s19, 3
    %p49 = por %p47, %p48
    %p51 = scmp.ne.s32.totalorder %s36, %s50
    %p52 = scmp.eq.s32.totalorder %s19, 0
    %p53 = por %p51, %p52
    %s55 = sadd.s32 %s54, 1
    %p58 = scmp.eq.s32.totalorder %s13, 3
    %p59 = scmp.ne.s32.totalorder %s54, %s56
    %p60 = scmp.eq.s32.totalorder %s13, 0
    %p61 = por %p59, %p60
    %p62 = scmp.ne.s32.totalorder %s54, %s56
    %p63 = scmp.eq.s32.totalorder %s18, 3
    %p64 = por %p62, %p63
    %p65 = scmp.ne.s32.totalorder %s56, %s57
    %p66 = scmp.eq.s32.totalorder %s18, 0
    %p67 = por %p65, %p66
    %p68 = scmp.ne.s32.totalorder %s56, %s57
    %p69 = scmp.eq.s32.totalorder %s19, 3
    %p70 = por %p68, %p69
    %p72 = scmp.ne.s32.totalorder %s57, %s71
    %p73 = scmp.eq.s32.totalorder %s19, 0
    %p74 = por %p72, %p73
    %s76 = sadd.s32 %s75, 1
    %p79 = scmp.eq.s32.totalorder %s13, 3
    %p80 = scmp.ne.s32.totalorder %s75, %s77
    %p81 = scmp.eq.s32.totalorder %s13, 0
    %p82 = por %p80, %p81
    %p83 = scmp.ne.s32.totalorder %s75, %s77
    %p84 = scmp.eq.s32.totalorder %s18, 3
    %p85 = por %p83, %p84
    %p86 = scmp.ne.s32.totalorder %s77, %s78
    %p87 = scmp.eq.s32.totalorder %s18, 0
    %p88 = por %p86, %p87
    %p89 = scmp.ne.s32.totalorder %s77, %s78
    %p90 = scmp.eq.s32.totalorder %s19, 3
    %p91 = por %p89, %p90
    %p93 = scmp.ne.s32.totalorder %s78, %s92
    %p94 = scmp.eq.s32.totalorder %s19, 0
    %p95 = por %p93, %p94
    %s97 = sadd.s32 %s96, 1
    %p100 = scmp.eq.s32.totalorder %s13, 3
    %p101 = scmp.ne.s32.totalorder %s96, %s98
    %p102 = scmp.eq.s32.totalorder %s13, 0
    %p103 = por %p101, %p102
    %p104 = scmp.ne.s32.totalorder %s96, %s98
    %p105 = scmp.eq.s32.totalorder %s18, 3
    %p106 = por %p104, %p105
    %p107 = scmp.ne.s32.totalorder %s98, %s99
    %p108 = scmp.eq.s32.totalorder %s18, 0
    %p109 = por %p107, %p108
    %p110 = scmp.ne.s32.totalorder %s98, %s99
    %p111 = scmp.eq.s32.totalorder %s19, 3
    %p112 = por %p110, %p111
    %p114 = scmp.ne.s32.totalorder %s99, %s113
    %p115 = scmp.eq.s32.totalorder %s19, 0
    %p116 = por %p114, %p115
    %s118 = sadd.s32 %s117, 1
    %p121 = scmp.eq.s32.totalorder %s13, 3
    %p122 = scmp.ne.s32.totalorder %s117, %s119
    %p123 = scmp.eq.s32.totalorder %s13, 0
    %p124 = por %p122, %p123
    %p125 = scmp.ne.s32.totalorder %s117, %s119
    %p126 = scmp.eq.s32.totalorder %s18, 3
    %p127 = por %p125, %p126
    %p128 = scmp.ne.s32.totalorder %s119, %s120
    %p129 = scmp.eq.s32.totalorder %s18, 0
    %p130 = por %p128, %p129
    %p131 = scmp.ne.s32.totalorder %s119, %s120
    %p132 = scmp.eq.s32.totalorder %s19, 3
    %p133 = por %p131, %p132
    %p135 = scmp.ne.s32.totalorder %s120, %s134
    %p136 = scmp.eq.s32.totalorder %s19, 0
    %p137 = por %p135, %p136
    %s139 = sadd.s32 %s138, 1
    %p142 = scmp.eq.s32.totalorder %s13, 3
    %p143 = scmp.ne.s32.totalorder %s138, %s140
    %p144 = scmp.eq.s32.totalorder %s13, 0
    %p145 = por %p143, %p144
    %p146 = scmp.ne.s32.totalorder %s138, %s140
    %p147 = scmp.eq.s32.totalorder %s18, 3
    %p148 = por %p146, %p147
    %p149 = scmp.ne.s32.totalorder %s140, %s141
    %p150 = scmp.eq.s32.totalorder %s18, 0
    %p151 = por %p149, %p150
    %p152 = scmp.ne.s32.totalorder %s140, %s141
    %p153 = scmp.eq.s32.totalorder %s19, 3
    %p154 = por %p152, %p153
    %p156 = scmp.ne.s32.totalorder %s141, %s155
    %p157 = scmp.eq.s32.totalorder %s19, 0
    %p158 = por %p156, %p157
    %s159 = ssub.s32 %s20, %s32
    %s160 = ssub.s32 %s21, %s28
    %s161 = sor.u32 %s159, %s160
    %p162 = scmp.eq.s32.totalorder %s161, 0
    %s164 = sadd.s32 %s163, 1
    %s165 = scalar_select %p162, %s163, %s164
    %p168 = pneg %p162
    %p169 = scmp.eq.s32.totalorder %s13, 3
    %p170 = por %p168, %p169
    %p171 = scmp.ne.s32.totalorder %s163, %s166
    %p172 = scmp.eq.s32.totalorder %s13, 0
    %p173 = por %p171, %p172
    %p174 = scmp.ne.s32.totalorder %s163, %s166
    %p175 = scmp.eq.s32.totalorder %s18, 3
    %p176 = por %p174, %p175
    %p177 = scmp.ne.s32.totalorder %s166, %s167
    %p178 = scmp.eq.s32.totalorder %s18, 0
    %p179 = por %p177, %p178
    %p180 = scmp.ne.s32.totalorder %s166, %s167
    %p181 = scmp.eq.s32.totalorder %s19, 3
    %p182 = por %p180, %p181
    %p184 = scmp.ne.s32.totalorder %s167, %s183
    %p185 = scmp.eq.s32.totalorder %s19, 0
    %p186 = por %p184, %p185
    %p187 = scmp.le.s32.totalorder 1, %s13
    %p188 = scmp.lt.s32.totalorder %s13, 5
    %p189 = pnand %p187, %p188
    %p190 = pneg %p189
    // Predicated region
    $region9: #{bottleneck_forward.1} parent=5 // pred_check
      _
    $region10: #{bottleneck_forward.1} parent=5 // pred_check_branch
      %192 = sbr.rel (%p189) target = $region12
    $region11: #{bottleneck_forward.1} parent=5 // pred_region
      %s193 = ssub.s32 %s13, 1
      // Predicated region
      $region13: #{bottleneck_forward.1} parent=11 // pred_check
        %p194 = pneg %p46
      $region14: #{bottleneck_forward.1} parent=11 // pred_check_branch
        %196 = sbr.rel (%p194) target = $region16
      $region15: #{bottleneck_forward.1} parent=11 // pred_region
        _
      $region16: #{bottleneck_forward.1} parent=11 // pred_fallthru
        _
      // Predicated region
      $region17: #{bottleneck_forward.1} parent=11 // pred_check
        %p197 = pneg %p67
      $region18: #{bottleneck_forward.1} parent=11 // pred_check_branch
        %199 = sbr.rel (%p197) target = $region20
      $region19: #{bottleneck_forward.1} parent=11 // pred_region
        _
      $region20: #{bottleneck_forward.1} parent=11 // pred_fallthru
        _
      // Predicated region
      $region21: #{bottleneck_forward.1} parent=11 // pred_check
        %p200 = pneg %p88
      $region22: #{bottleneck_forward.1} parent=11 // pred_check_branch
        %202 = sbr.rel (%p200) target = $region24
      $region23: #{bottleneck_forward.1} parent=11 // pred_region
        _
      $region24: #{bottleneck_forward.1} parent=11 // pred_fallthru
        _
      // Predicated region
      $region25: #{bottleneck_forward.1} parent=11 // pred_check
        %p203 = pneg %p109
      $region26: #{bottleneck_forward.1} parent=11 // pred_check_branch
        %205 = sbr.rel (%p203) target = $region28
      $region27: #{bottleneck_forward.1} parent=11 // pred_region
        _
      $region28: #{bottleneck_forward.1} parent=11 // pred_fallthru
        _
      // Predicated region
      $region29: #{bottleneck_forward.1} parent=11 // pred_check
        %p206 = pneg %p130
      $region30: #{bottleneck_forward.1} parent=11 // pred_check_branch
        %208 = sbr.rel (%p206) target = $region32
      $region31: #{bottleneck_forward.1} parent=11 // pred_region
        _
      $region32: #{bottleneck_forward.1} parent=11 // pred_fallthru
        _
      // Predicated region
      $region33: #{bottleneck_forward.1} parent=11 // pred_check
        %p209 = pneg %p151
      $region34: #{bottleneck_forward.1} parent=11 // pred_check_branch
        %211 = sbr.rel (%p209) target = $region36
      $region35: #{bottleneck_forward.1} parent=11 // pred_region
        _
      $region36: #{bottleneck_forward.1} parent=11 // pred_fallthru
        _
    $region12: #{bottleneck_forward.1} parent=5 // pred_fallthru
      _
    %p212 = scmp.lt.s32.totalorder %s13, 4
    // Predicated region
    $region37: #{bottleneck_forward.1} parent=5 // pred_check
      %p213 = pneg %p212
    $region38: #{bottleneck_forward.1} parent=5 // pred_check_branch
      %215 = sbr.rel (%p213) target = $region40
    $region39: #{bottleneck_forward.1} parent=5 // pred_region
      _
    $region40: #{bottleneck_forward.1} parent=5 // pred_fallthru
      _
    %p216 = scmp.le.s32.totalorder 1, %s13
    %p217 = scmp.lt.s32.totalorder %s13, 5
    %p218 = pnand %p216, %p217
    %p219 = pneg %p218
    // Predicated region
    $region41: #{bottleneck_forward.1} parent=5 // pred_check
      _
    $region42: #{bottleneck_forward.1} parent=5 // pred_check_branch
      %221 = sbr.rel (%p218) target = $region44
    $region43: #{bottleneck_forward.1} parent=5 // pred_region
      %s222 = ssub.s32 %s13, 1
      %p223 = pneg %p46
      %p224 = pneg %p43
      %p225 = pneg %p67
      %p226 = pneg %p64
      %p227 = pneg %p88
      %p228 = pneg %p85
      %p229 = pneg %p109
      %p230 = pneg %p106
      %p231 = pneg %p130
      %p232 = pneg %p127
      %p233 = pneg %p151
      %p234 = pneg %p148
      %p235 = pneg %p179
      %p236 = pneg %p176
      %s237 = smul.u32 18, %s23
      %p238 = scmp.lt.s32.totalorder %s22, 1
      %s239 = scalar_select %p238, %s22, 1
      %p240 = scmp.lt.s32.totalorder %s237, 35
      %s241 = scalar_select %p240, %s237, 35
      %s242 = smul.addr %s239, 36
      %s243 = sadd.s32 %s241, %s242
      %s244 = smul.addr %s243, 8
      %s245 = scalar_lea.vmem %s7, %s244
      %s246 = smul.u32 18, %s23
      %p247 = scmp.lt.s32.totalorder %s22, 1
      %s248 = scalar_select %p247, %s22, 1
      %p249 = scmp.lt.s32.totalorder %s246, 35
      %s250 = scalar_select %p249, %s246, 35
      %s251 = smul.addr %s248, 36
      %s252 = sadd.s32 %s250, %s251
      %s253 = smul.addr %s252, 8
      %s254 = scalar_lea.vmem %s7, %s253
      %s255 = smul.u32 18, %s23
      %s256 = smul.u32 %s23, 144
      %s257 = smul.u32 %s22, 360
      %s258 = sadd.s32 %s256, %s257
      %s259 = scalar_lea.vmem %s0, %s258
      %p261 = scmp.lt.u32.totalorder 216, 8
      %p262 = pneg %p261
      // Predicated region
      $region45: #{bottleneck_forward.1} parent=43 // pred_check
        _
      $region46: #{bottleneck_forward.1} parent=43 // pred_check_branch
        %264 = sbr.rel (%p261) target = $region48
      $region47: #{bottleneck_forward.1} parent=43 // pred_region
        %s280 = sand.u32 216, 7
        %p281 = scmp.eq.s32.totalorder %s280, 0
        // Predicated region
        $region60: #{bottleneck_forward.1} parent=47 // pred_check
          %p282 = pneg %p281
        $region61: #{bottleneck_forward.1} parent=47 // pred_check_branch
          %284 = sbr.rel (%p282) target = $region63
        $region62: #{bottleneck_forward.1} parent=47 // pred_region
          loop: start=0, step=1, limit=1
          $region64: #{bottleneck_forward.1} parent=62 // loop_pre_header
            _
          $region65: #{bottleneck_forward.1} parent=62 // loop_header
            %s286 = sphi 0, %s290
            %p287 = scmp.ge.s32.totalorder %s286, 1
            %s291 = sphi %s259, %s259
            %s292 = sphi [#allocation2], [#allocation2]
          $region66: #{bottleneck_forward.1} parent=62 // loop_header_branch
            %289 = sbr.rel (%p287) target = $region70
          $region67: #{bottleneck_forward.1} parent=62 // loop_body
            %v293 = vld [vmem:[%s291] sm:$0xff]
            %294 = vst [vmem:[%s292] sm:$0xff] %v293
            %v295 = vld [vmem:[%s291 + $0x8] sm:$0xff]
            %296 = vst [vmem:[%s292 + $0x8] sm:$0xff] %v295
            %v297 = vld [vmem:[%s291 + $0x10] sm:$0xff]
            %298 = vst [vmem:[%s292 + $0x10] sm:$0xff] %v297
            %v299 = vld [vmem:[%s291 + $0x18] sm:$0xff]
            %300 = vst [vmem:[%s292 + $0x18] sm:$0xff] %v299
            %v301 = vld [vmem:[%s291 + $0x20] sm:$0xff]
            %302 = vst [vmem:[%s292 + $0x20] sm:$0xff] %v301
            %v303 = vld [vmem:[%s291 + $0x28] sm:$0xff]
            %304 = vst [vmem:[%s292 + $0x28] sm:$0xff] %v303
            %v305 = vld [vmem:[%s291 + $0x30] sm:$0xff]
            %306 = vst [vmem:[%s292 + $0x30] sm:$0xff] %v305
            %v307 = vld [vmem:[%s291 + $0x38] sm:$0xff]
            %308 = vst [vmem:[%s292 + $0x38] sm:$0xff] %v307
            %v309 = vld [vmem:[%s291 + $0x40] sm:$0xff]
            %310 = vst [vmem:[%s292 + $0x40] sm:$0xff] %v309
            %v311 = vld [vmem:[%s291 + $0x48] sm:$0xff]
            %312 = vst [vmem:[%s292 + $0x48] sm:$0xff] %v311
            %v313 = vld [vmem:[%s291 + $0x50] sm:$0xff]
            %314 = vst [vmem:[%s292 + $0x50] sm:$0xff] %v313
            %v315 = vld [vmem:[%s291 + $0x58] sm:$0xff]
            %316 = vst [vmem:[%s292 + $0x58] sm:$0xff] %v315
            %v317 = vld [vmem:[%s291 + $0x60] sm:$0xff]
            %318 = vst [vmem:[%s292 + $0x60] sm:$0xff] %v317
            %v319 = vld [vmem:[%s291 + $0x68] sm:$0xff]
            %320 = vst [vmem:[%s292 + $0x68] sm:$0xff] %v319
            %v321 = vld [vmem:[%s291 + $0x70] sm:$0xff]
            %322 = vst [vmem:[%s292 + $0x70] sm:$0xff] %v321
            %v323 = vld [vmem:[%s291 + $0x78] sm:$0xff]
            %324 = vst [vmem:[%s292 + $0x78] sm:$0xff] %v323
            %v325 = vld [vmem:[%s291 + $0x80] sm:$0xff]
            %326 = vst [vmem:[%s292 + $0x80] sm:$0xff] %v325
            %v327 = vld [vmem:[%s291 + $0x88] sm:$0xff]
            %328 = vst [vmem:[%s292 + $0x88] sm:$0xff] %v327
            %v329 = vld [vmem:[%s291 + $0x90] sm:$0xff]
            %330 = vst [vmem:[%s292 + $0x90] sm:$0xff] %v329
            %v331 = vld [vmem:[%s291 + $0x98] sm:$0xff]
            %332 = vst [vmem:[%s292 + $0x98] sm:$0xff] %v331
            %v333 = vld [vmem:[%s291 + $0xa0] sm:$0xff]
            %334 = vst [vmem:[%s292 + $0xa0] sm:$0xff] %v333
            %v335 = vld [vmem:[%s291 + $0xa8] sm:$0xff]
            %336 = vst [vmem:[%s292 + $0xa8] sm:$0xff] %v335
            %v337 = vld [vmem:[%s291 + $0xb0] sm:$0xff]
            %338 = vst [vmem:[%s292 + $0xb0] sm:$0xff] %v337
            %v339 = vld [vmem:[%s291 + $0xb8] sm:$0xff]
            %340 = vst [vmem:[%s292 + $0xb8] sm:$0xff] %v339
            %v341 = vld [vmem:[%s291 + $0xc0] sm:$0xff]
            %342 = vst [vmem:[%s292 + $0xc0] sm:$0xff] %v341
            %v343 = vld [vmem:[%s291 + $0xc8] sm:$0xff]
            %344 = vst [vmem:[%s292 + $0xc8] sm:$0xff] %v343
            %v345 = vld [vmem:[%s291 + $0xd0] sm:$0xff]
            %346 = vst [vmem:[%s292 + $0xd0] sm:$0xff] %v345
          $region68: #{bottleneck_forward.1} parent=62 // loop_footer
            %s290 = sadd.s32 1, %s286
          $region69: #{bottleneck_forward.1} parent=62 // loop_footer_branch
            %285 = sbr.rel target = $region65
          $region70: #{bottleneck_forward.1} parent=62 // loop_exit
            _
        $region63: #{bottleneck_forward.1} parent=47 // pred_fallthru
          _
        %p347 = pneg %p281
        // Predicated region
        $region71: #{bottleneck_forward.1} parent=47 // pred_check
          _
        $region72: #{bottleneck_forward.1} parent=47 // pred_check_branch
          %349 = sbr.rel (%p281) target = $region74
        $region73: #{bottleneck_forward.1} parent=47 // pred_region
          %s350 = sand.u32 216, 7
        $region74: #{bottleneck_forward.1} parent=47 // pred_fallthru
          _
      $region48: #{bottleneck_forward.1} parent=43 // pred_fallthru
        _
      // Predicated region
      $region49: #{bottleneck_forward.1} parent=43 // pred_check
        %p265 = pneg %p261
      $region50: #{bottleneck_forward.1} parent=43 // pred_check_branch
        %267 = sbr.rel (%p265) target = $region52
      $region51: #{bottleneck_forward.1} parent=43 // pred_region
        %s268 = sshll.u32 1, 216
        %s269 = ssub.s32 %s268, 1
        loop: start=0, step=1, limit=1
        $region53: #{bottleneck_forward.1} parent=51 // loop_pre_header
          _
        $region54: #{bottleneck_forward.1} parent=51 // loop_header
          %s271 = sphi 0, %s275
          %p272 = scmp.ge.s32.totalorder %s271, 1
          %s276 = sphi %s259, %s259
          %s277 = sphi [#allocation2], [#allocation2]
        $region55: #{bottleneck_forward.1} parent=51 // loop_header_branch
          %274 = sbr.rel (%p272) target = $region59
        $region56: #{bottleneck_forward.1} parent=51 // loop_body
          %v278 = vld [vmem:[%s276] sm:%s269]
          %279 = vst [vmem:[%s277] sm:%s269] %v278
        $region57: #{bottleneck_forward.1} parent=51 // loop_footer
          %s275 = sadd.s32 1, %s271
        $region58: #{bottleneck_forward.1} parent=51 // loop_footer_branch
          %270 = sbr.rel target = $region54
        $region59: #{bottleneck_forward.1} parent=51 // loop_exit
          _
      $region52: #{bottleneck_forward.1} parent=43 // pred_fallthru
        _
      // Predicated region
      $region75: #{bottleneck_forward.1} parent=43 // pred_check
        _
      $region76: #{bottleneck_forward.1} parent=43 // pred_check_branch
        %353 = sbr.rel (0) target = $region78
      $region77: #{bottleneck_forward.1} parent=43 // pred_region
        %354 = vsyncadd [#allocation4], 3456
      $region78: #{bottleneck_forward.1} parent=43 // pred_fallthru
        _
      %s355 = smul.u32 216, 1
      %s356 = sshll.u32 %s355, 4
      %357 = dma.done [#allocation4], %s356
      %358 = vst [vmem:[#allocation2 + $0xd8] sm:$0xff] 0.0
      %v359 = vld [vmem:[#allocation2] sm:$0xff]
      %v360 = vld [vmem:[#allocation2 + $0x8] sm:$0xff]
      %v361 = vld [vmem:[#allocation2 + $0x10] sm:$0xff]
      %v362 = vld [vmem:[#allocation2 + $0x18] sm:$0xff]
      %v363 = vld [vmem:[#allocation2 + $0x20] sm:$0xff]
      %v364 = vld [vmem:[#allocation2 + $0x28] sm:$0xff]
      %v365 = vld [vmem:[#allocation2 + $0x30] sm:$0xff]
      %v366 = vld [vmem:[#allocation2 + $0x38] sm:$0xff]
      %v367 = vld [vmem:[#allocation2 + $0x40] sm:$0xff]
      %v368 = vld [vmem:[#allocation2 + $0x48] sm:$0xff]
      %v369 = vld [vmem:[#allocation2 + $0x50] sm:$0xff]
      %v370 = vld [vmem:[#allocation2 + $0x58] sm:$0xff]
      %v371 = vld [vmem:[#allocation2 + $0x60] sm:$0xff]
      %v372 = vld [vmem:[#allocation2 + $0x68] sm:$0xff]
      %v373 = vld [vmem:[#allocation2 + $0x70] sm:$0xff]
      %v374 = vld [vmem:[#allocation2 + $0x78] sm:$0xff]
      %v375 = vld [vmem:[#allocation2 + $0x80] sm:$0xff]
      %v376 = vld [vmem:[#allocation2 + $0x88] sm:$0xff]
      %v377 = vld [vmem:[#allocation2 + $0x90] sm:$0xff]
      %v378 = vld [vmem:[#allocation2 + $0x98] sm:$0xff]
      %v379 = vld [vmem:[#allocation2 + $0xa0] sm:$0xff]
      %v380 = vld [vmem:[#allocation2 + $0xa8] sm:$0xff]
      %v381 = vld [vmem:[#allocation2 + $0xb0] sm:$0xf]
      %v382 = vld [vmem:[%s1] sm:$0xff]
      %v383 = vld [vmem:[%s1 + $0x8] sm:$0xff]
      %v384 = vld [vmem:[%s1 + $0x10] sm:$0xff]
      %v385 = vld [vmem:[%s1 + $0x18] sm:$0xff]
      %v386 = vld [vmem:[%s1 + $0x20] sm:$0xff]
      %v387 = vld [vmem:[%s1 + $0x28] sm:$0xff]
      %v388 = vld [vmem:[%s1 + $0x30] sm:$0xff]
      %v389 = vld [vmem:[%s1 + $0x38] sm:$0xff]
      %v390 = vld [vmem:[%s1 + $0x40] sm:$0xff]
      %v391 = vld [vmem:[%s1 + $0x48] sm:$0xff]
      %v392 = vld [vmem:[%s1 + $0x50] sm:$0xff]
      %v393 = vld [vmem:[%s1 + $0x58] sm:$0xff]
      %v394 = vld [vmem:[%s1 + $0x60] sm:$0xff]
      %v395 = vld [vmem:[%s1 + $0x68] sm:$0xff]
      %v396 = vld [vmem:[%s1 + $0x70] sm:$0xff]
      %v397 = vld [vmem:[%s1 + $0x78] sm:$0xff]
      %v398 = vld [vmem:[#allocation2 + $0x1] sm:$0xff]
      %v399 = vld [vmem:[#allocation2 + $0x9] sm:$0xff]
      %v400 = vld [vmem:[#allocation2 + $0x11] sm:$0xff]
      %v401 = vld [vmem:[#allocation2 + $0x19] sm:$0xff]
      %v402 = vld [vmem:[#allocation2 + $0x21] sm:$0xff]
      %v403 = vld [vmem:[#allocation2 + $0x29] sm:$0xff]
      %v404 = vld [vmem:[#allocation2 + $0x31] sm:$0xff]
      %v405 = vld [vmem:[#allocation2 + $0x39] sm:$0xff]
      %v406 = vld [vmem:[#allocation2 + $0x41] sm:$0xff]
      %v407 = vld [vmem:[#allocation2 + $0x49] sm:$0xff]
      %v408 = vld [vmem:[#allocation2 + $0x51] sm:$0xff]
      %v409 = vld [vmem:[#allocation2 + $0x59] sm:$0xff]
      %v410 = vld [vmem:[#allocation2 + $0x61] sm:$0xff]
      %v411 = vld [vmem:[#allocation2 + $0x69] sm:$0xff]
      %v412 = vld [vmem:[#allocation2 + $0x71] sm:$0xff]
      %v413 = vld [vmem:[#allocation2 + $0x79] sm:$0xff]
      %v414 = vld [vmem:[#allocation2 + $0x81] sm:$0xff]
      %v415 = vld [vmem:[#allocation2 + $0x89] sm:$0xff]
      %v416 = vld [vmem:[#allocation2 + $0x91] sm:$0xff]
      %v417 = vld [vmem:[#allocation2 + $0x99] sm:$0xff]
      %v418 = vld [vmem:[#allocation2 + $0xa1] sm:$0xff]
      %v419 = vld [vmem:[#allocation2 + $0xa9] sm:$0xff]
      %v420 = vld [vmem:[#allocation2 + $0xb1] sm:$0xf]
      %s421 = scalar_lea.vmem %s1, 128
      %v422 = vld [vmem:[%s421] sm:$0xff]
      %v423 = vld [vmem:[%s421 + $0x8] sm:$0xff]
      %v424 = vld [vmem:[%s421 + $0x10] sm:$0xff]
      %v425 = vld [vmem:[%s421 + $0x18] sm:$0xff]
      %v426 = vld [vmem:[%s421 + $0x20] sm:$0xff]
      %v427 = vld [vmem:[%s421 + $0x28] sm:$0xff]
      %v428 = vld [vmem:[%s421 + $0x30] sm:$0xff]
      %v429 = vld [vmem:[%s421 + $0x38] sm:$0xff]
      %v430 = vld [vmem:[%s421 + $0x40] sm:$0xff]
      %v431 = vld [vmem:[%s421 + $0x48] sm:$0xff]
      %v432 = vld [vmem:[%s421 + $0x50] sm:$0xff]
      %v433 = vld [vmem:[%s421 + $0x58] sm:$0xff]
      %v434 = vld [vmem:[%s421 + $0x60] sm:$0xff]
      %v435 = vld [vmem:[%s421 + $0x68] sm:$0xff]
      %v436 = vld [vmem:[%s421 + $0x70] sm:$0xff]
      %v437 = vld [vmem:[%s421 + $0x78] sm:$0xff]
      %438 = vmatprep.subr.mxu0 0.0
      %439 = vmatpush1.msra.mxu0 %v437
      %440 = vmatprep.subr.mxu0 0.0
      %441 = vmatpush1.msra.mxu0 %v436
      %442 = vmatprep.subr.mxu0 0.0
      %443 = vmatpush1.msra.mxu0 %v435
      %444 = vmatprep.subr.mxu0 0.0
      %445 = vmatpush1.msra.mxu0 %v434
      %446 = vmatprep.subr.mxu0 0.0
      %447 = vmatpush1.msra.mxu0 %v433
      %448 = vmatprep.subr.mxu0 0.0
      %449 = vmatpush1.msra.mxu0 %v432
      %450 = vmatprep.subr.mxu0 0.0
      %451 = vmatpush1.msra.mxu0 %v431
      %452 = vmatprep.subr.mxu0 0.0
      %453 = vmatpush1.msra.mxu0 %v430
      %454 = vmatprep.subr.mxu0 0.0
      %455 = vmatpush1.msra.mxu0 %v429
      %456 = vmatprep.subr.mxu0 0.0
      %457 = vmatpush1.msra.mxu0 %v428
      %458 = vmatprep.subr.mxu0 0.0
      %459 = vmatpush1.msra.mxu0 %v427
      %460 = vmatprep.subr.mxu0 0.0
      %461 = vmatpush1.msra.mxu0 %v426
      %462 = vmatprep.subr.mxu0 0.0
      %463 = vmatpush1.msra.mxu0 %v425
      %464 = vmatprep.subr.mxu0 0.0
      %465 = vmatpush1.msra.mxu0 %v424
      %466 = vmatprep.subr.mxu0 0.0
      %467 = vmatpush1.msra.mxu0 %v423
      %468 = vmatprep.subr.mxu0 0.0
      %469 = vmatpush1.msra.mxu0 %v422
      %470 = vmatprep.subr.mxu0 0.0
      %471 = vmatpush2.msra.mxu0 0.0
      %472 = vmatprep.subr.mxu0 0.0
      %473 = vmatpush2.msra.mxu0 0.0
      %474 = vmatprep.subr.mxu0 0.0
      %475 = vmatpush2.msra.mxu0 0.0
      %476 = vmatprep.subr.mxu0 0.0
      %477 = vmatpush2.msra.mxu0 0.0
      %478 = vmatprep.subr.mxu0 0.0
      %479 = vmatpush2.msra.mxu0 0.0
      %480 = vmatprep.subr.mxu0 0.0
      %481 = vmatpush2.msra.mxu0 0.0
      %482 = vmatprep.subr.mxu0 0.0
      %483 = vmatpush2.msra.mxu0 0.0
      %484 = vmatprep.subr.mxu0 0.0
      %485 = vmatpush2.msra.mxu0 0.0
      %486 = vmatprep.subr.mxu0 0.0
      %487 = vmatpush2.msra.mxu0 0.0
      %488 = vmatprep.subr.mxu0 0.0
      %489 = vmatpush2.msra.mxu0 0.0
      %490 = vmatprep.subr.mxu0 0.0
      %491 = vmatpush2.msra.mxu0 0.0
      %492 = vmatprep.subr.mxu0 0.0
      %493 = vmatpush2.msra.mxu0 0.0
      %494 = vmatprep.subr.mxu0 0.0
      %495 = vmatpush2.msra.mxu0 0.0
      %496 = vmatprep.subr.mxu0 0.0
      %497 = vmatpush2.msra.mxu0 0.0
      %498 = vmatprep.subr.mxu0 0.0
      %499 = vmatpush2.msra.mxu0 0.0
      %500 = vmatprep.subr.mxu0 0.0
      %501 = vmatpush2.msra.mxu0 0.0
      %502 = vmatprep.mubr.f32.mxu0 0.0
      %503 = vmatmul.mubr.f32.gmra.mxu0 %v398
      %v504 = vpop.f32.mrf.mxu0
      %v505 = vadd.f32 0.0, %v504
      %v506 = vpop.f32.mrf.mxu0
      %507 = vmatprep.mubr.f32.mxu0 0.0
      %508 = vmatmul.mubr.f32.gmra.mxu0 %v399
      %v509 = vpop.f32.mrf.mxu0
      %v510 = vadd.f32 0.0, %v509
      %v511 = vpop.f32.mrf.mxu0
      %512 = vmatprep.mubr.f32.mxu0 0.0
      %513 = vmatmul.mubr.f32.gmra.mxu0 %v400
      %v514 = vpop.f32.mrf.mxu0
      %v515 = vadd.f32 0.0, %v514
      %v516 = vpop.f32.mrf.mxu0
      %517 = vmatprep.mubr.f32.mxu0 0.0
      %518 = vmatmul.mubr.f32.gmra.mxu0 %v401
      %v519 = vpop.f32.mrf.mxu0
      %v520 = vadd.f32 0.0, %v519
      %v521 = vpop.f32.mrf.mxu0
      %522 = vmatprep.mubr.f32.mxu0 0.0
      %523 = vmatmul.mubr.f32.gmra.mxu0 %v402
      %v524 = vpop.f32.mrf.mxu0
      %v525 = vadd.f32 0.0, %v524
      %v526 = vpop.f32.mrf.mxu0
      %527 = vmatprep.mubr.f32.mxu0 0.0
      %528 = vmatmul.mubr.f32.gmra.mxu0 %v403
      %v529 = vpop.f32.mrf.mxu0
      %v530 = vadd.f32 0.0, %v529
      %v531 = vpop.f32.mrf.mxu0
      %532 = vmatprep.mubr.f32.mxu0 0.0
      %533 = vmatmul.mubr.f32.gmra.mxu0 %v404
      %v534 = vpop.f32.mrf.mxu0
      %v535 = vadd.f32 0.0, %v534
      %v536 = vpop.f32.mrf.mxu0
      %537 = vmatprep.mubr.f32.mxu0 0.0
      %538 = vmatmul.mubr.f32.gmra.mxu0 %v405
      %v539 = vpop.f32.mrf.mxu0
      %v540 = vadd.f32 0.0, %v539
      %v541 = vpop.f32.mrf.mxu0
      %542 = vmatprep.mubr.f32.mxu0 0.0
      %543 = vmatmul.mubr.f32.gmra.mxu0 %v406
      %v544 = vpop.f32.mrf.mxu0
      %v545 = vadd.f32 0.0, %v544
      %v546 = vpop.f32.mrf.mxu0
      %547 = vmatprep.mubr.f32.mxu0 0.0
      %548 = vmatmul.mubr.f32.gmra.mxu0 %v407
      %v549 = vpop.f32.mrf.mxu0
      %v550 = vadd.f32 0.0, %v549
      %v551 = vpop.f32.mrf.mxu0
      %552 = vmatprep.mubr.f32.mxu0 0.0
      %553 = vmatmul.mubr.f32.gmra.mxu0 %v408
      %v554 = vpop.f32.mrf.mxu0
      %v555 = vadd.f32 0.0, %v554
      %v556 = vpop.f32.mrf.mxu0
      %557 = vmatprep.mubr.f32.mxu0 0.0
      %558 = vmatmul.mubr.f32.gmra.mxu0 %v409
      %v559 = vpop.f32.mrf.mxu0
      %v560 = vadd.f32 0.0, %v559
      %v561 = vpop.f32.mrf.mxu0
      %562 = vmatprep.mubr.f32.mxu0 0.0
      %563 = vmatmul.mubr.f32.gmra.mxu0 %v410
      %v564 = vpop.f32.mrf.mxu0
      %v565 = vadd.f32 0.0, %v564
      %v566 = vpop.f32.mrf.mxu0
      %567 = vmatprep.mubr.f32.mxu0 0.0
      %568 = vmatmul.mubr.f32.gmra.mxu0 %v411
      %v569 = vpop.f32.mrf.mxu0
      %v570 = vadd.f32 0.0, %v569
      %v571 = vpop.f32.mrf.mxu0
      %572 = vmatprep.mubr.f32.mxu0 0.0
      %573 = vmatmul.mubr.f32.gmra.mxu0 %v412
      %v574 = vpop.f32.mrf.mxu0
      %v575 = vadd.f32 0.0, %v574
      %v576 = vpop.f32.mrf.mxu0
      %577 = vmatprep.mubr.f32.mxu0 0.0
      %578 = vmatmul.mubr.f32.gmra.mxu0 %v413
      %v579 = vpop.f32.mrf.mxu0
      %v580 = vadd.f32 0.0, %v579
      %v581 = vpop.f32.mrf.mxu0
      %582 = vmatprep.mubr.f32.mxu0 0.0
      %583 = vmatmul.mubr.f32.gmra.mxu0 %v414
      %v584 = vpop.f32.mrf.mxu0
      %v585 = vadd.f32 0.0, %v584
      %v586 = vpop.f32.mrf.mxu0
      %587 = vmatprep.mubr.f32.mxu0 0.0
      %588 = vmatmul.mubr.f32.gmra.mxu0 %v415
      %v589 = vpop.f32.mrf.mxu0
      %v590 = vadd.f32 0.0, %v589
      %v591 = vpop.f32.mrf.mxu0
      %592 = vmatprep.mubr.f32.mxu0 0.0
      %593 = vmatmul.mubr.f32.gmra.mxu0 %v416
      %v594 = vpop.f32.mrf.mxu0
      %v595 = vadd.f32 0.0, %v594
      %v596 = vpop.f32.mrf.mxu0
      %597 = vmatprep.mubr.f32.mxu0 0.0
      %598 = vmatmul.mubr.f32.gmra.mxu0 %v417
      %v599 = vpop.f32.mrf.mxu0
      %v600 = vadd.f32 0.0, %v599
      %v601 = vpop.f32.mrf.mxu0
      %602 = vmatprep.mubr.f32.mxu0 0.0
      %603 = vmatmul.mubr.f32.gmra.mxu0 %v418
      %v604 = vpop.f32.mrf.mxu0
      %v605 = vadd.f32 0.0, %v604
      %v606 = vpop.f32.mrf.mxu0
      %607 = vmatprep.mubr.f32.mxu0 0.0
      %608 = vmatmul.mubr.f32.gmra.mxu0 %v419
      %v609 = vpop.f32.mrf.mxu0
      %v610 = vadd.f32 0.0, %v609
      %v611 = vpop.f32.mrf.mxu0
      %612 = vmatprep.mubr.f32.mxu0 0.0
      %613 = vmatmul.mubr.f32.gmra.mxu0 %v420
      %v614 = vpop.f32.mrf.mxu0
      %v615 = vadd.f32 0.0, %v614
      %v616 = vpop.f32.mrf.mxu0
      %617 = vdwg.mxu0
      %618 = vmatprep.subr.mxu0 0.0
      %619 = vmatpush1.msra.mxu0 %v397
      %620 = vmatprep.subr.mxu0 0.0
      %621 = vmatpush1.msra.mxu0 %v396
      %622 = vmatprep.subr.mxu0 0.0
      %623 = vmatpush1.msra.mxu0 %v395
      %624 = vmatprep.subr.mxu0 0.0
      %625 = vmatpush1.msra.mxu0 %v394
      %626 = vmatprep.subr.mxu0 0.0
      %627 = vmatpush1.msra.mxu0 %v393
      %628 = vmatprep.subr.mxu0 0.0
      %629 = vmatpush1.msra.mxu0 %v392
      %630 = vmatprep.subr.mxu0 0.0
      %631 = vmatpush1.msra.mxu0 %v391
      %632 = vmatprep.subr.mxu0 0.0
      %633 = vmatpush1.msra.mxu0 %v390
      %634 = vmatprep.subr.mxu0 0.0
      %635 = vmatpush1.msra.mxu0 %v389
      %636 = vmatprep.subr.mxu0 0.0
      %637 = vmatpush1.msra.mxu0 %v388
      %638 = vmatprep.subr.mxu0 0.0
      %639 = vmatpush1.msra.mxu0 %v387
      %640 = vmatprep.subr.mxu0 0.0
      %641 = vmatpush1.msra.mxu0 %v386
      %642 = vmatprep.subr.mxu0 0.0
      %643 = vmatpush1.msra.mxu0 %v385
      %644 = vmatprep.subr.mxu0 0.0
      %645 = vmatpush1.msra.mxu0 %v384
      %646 = vmatprep.subr.mxu0 0.0
      %647 = vmatpush1.msra.mxu0 %v383
      %648 = vmatprep.subr.mxu0 0.0
      %649 = vmatpush1.msra.mxu0 %v382
      %650 = vmatprep.subr.mxu0 0.0
      %651 = vmatpush2.msra.mxu0 0.0
      %652 = vmatprep.subr.mxu0 0.0
      %653 = vmatpush2.msra.mxu0 0.0
      %654 = vmatprep.subr.mxu0 0.0
      %655 = vmatpush2.msra.mxu0 0.0
      %656 = vmatprep.subr.mxu0 0.0
      %657 = vmatpush2.msra.mxu0 0.0
      %658 = vmatprep.subr.mxu0 0.0
      %659 = vmatpush2.msra.mxu0 0.0
      %660 = vmatprep.subr.mxu0 0.0
      %661 = vmatpush2.msra.mxu0 0.0
      %662 = vmatprep.subr.mxu0 0.0
      %663 = vmatpush2.msra.mxu0 0.0
      %664 = vmatprep.subr.mxu0 0.0
      %665 = vmatpush2.msra.mxu0 0.0
      %666 = vmatprep.subr.mxu0 0.0
      %667 = vmatpush2.msra.mxu0 0.0
      %668 = vmatprep.subr.mxu0 0.0
      %669 = vmatpush2.msra.mxu0 0.0
      %670 = vmatprep.subr.mxu0 0.0
      %671 = vmatpush2.msra.mxu0 0.0
      %672 = vmatprep.subr.mxu0 0.0
      %673 = vmatpush2.msra.mxu0 0.0
      %674 = vmatprep.subr.mxu0 0.0
      %675 = vmatpush2.msra.mxu0 0.0
      %676 = vmatprep.subr.mxu0 0.0
      %677 = vmatpush2.msra.mxu0 0.0
      %678 = vmatprep.subr.mxu0 0.0
      %679 = vmatpush2.msra.mxu0 0.0
      %680 = vmatprep.subr.mxu0 0.0
      %681 = vmatpush2.msra.mxu0 0.0
      %682 = vmatprep.mubr.f32.mxu0 0.0
      %683 = vmatmul.mubr.f32.gmra.mxu0 %v359
      %v684 = vpop.f32.mrf.mxu0
      %v685 = vadd.f32 %v505, %v684
      %v686 = vpop.f32.mrf.mxu0
      %687 = vmatprep.mubr.f32.mxu0 0.0
      %688 = vmatmul.mubr.f32.gmra.mxu0 %v360
      %v689 = vpop.f32.mrf.mxu0
      %v690 = vadd.f32 %v510, %v689
      %v691 = vpop.f32.mrf.mxu0
      %692 = vmatprep.mubr.f32.mxu0 0.0
      %693 = vmatmul.mubr.f32.gmra.mxu0 %v361
      %v694 = vpop.f32.mrf.mxu0
      %v695 = vadd.f32 %v515, %v694
      %v696 = vpop.f32.mrf.mxu0
      %697 = vmatprep.mubr.f32.mxu0 0.0
      %698 = vmatmul.mubr.f32.gmra.mxu0 %v362
      %v699 = vpop.f32.mrf.mxu0
      %v700 = vadd.f32 %v520, %v699
      %v701 = vpop.f32.mrf.mxu0
      %702 = vmatprep.mubr.f32.mxu0 0.0
      %703 = vmatmul.mubr.f32.gmra.mxu0 %v363
      %v704 = vpop.f32.mrf.mxu0
      %v705 = vadd.f32 %v525, %v704
      %v706 = vpop.f32.mrf.mxu0
      %707 = vmatprep.mubr.f32.mxu0 0.0
      %708 = vmatmul.mubr.f32.gmra.mxu0 %v364
      %v709 = vpop.f32.mrf.mxu0
      %v710 = vadd.f32 %v530, %v709
      %v711 = vpop.f32.mrf.mxu0
      %712 = vmatprep.mubr.f32.mxu0 0.0
      %713 = vmatmul.mubr.f32.gmra.mxu0 %v365
      %v714 = vpop.f32.mrf.mxu0
      %v715 = vadd.f32 %v535, %v714
      %v716 = vpop.f32.mrf.mxu0
      %717 = vmatprep.mubr.f32.mxu0 0.0
      %718 = vmatmul.mubr.f32.gmra.mxu0 %v366
      %v719 = vpop.f32.mrf.mxu0
      %v720 = vadd.f32 %v540, %v719
      %v721 = vpop.f32.mrf.mxu0
      %722 = vmatprep.mubr.f32.mxu0 0.0
      %723 = vmatmul.mubr.f32.gmra.mxu0 %v367
      %v724 = vpop.f32.mrf.mxu0
      %v725 = vadd.f32 %v545, %v724
      %v726 = vpop.f32.mrf.mxu0
      %727 = vmatprep.mubr.f32.mxu0 0.0
      %728 = vmatmul.mubr.f32.gmra.mxu0 %v368
      %v729 = vpop.f32.mrf.mxu0
      %v730 = vadd.f32 %v550, %v729
      %v731 = vpop.f32.mrf.mxu0
      %732 = vmatprep.mubr.f32.mxu0 0.0
      %733 = vmatmul.mubr.f32.gmra.mxu0 %v369
      %v734 = vpop.f32.mrf.mxu0
      %v735 = vadd.f32 %v555, %v734
      %v736 = vpop.f32.mrf.mxu0
      %737 = vmatprep.mubr.f32.mxu0 0.0
      %738 = vmatmul.mubr.f32.gmra.mxu0 %v370
      %v739 = vpop.f32.mrf.mxu0
      %v740 = vadd.f32 %v560, %v739
      %v741 = vpop.f32.mrf.mxu0
      %742 = vmatprep.mubr.f32.mxu0 0.0
      %743 = vmatmul.mubr.f32.gmra.mxu0 %v371
      %v744 = vpop.f32.mrf.mxu0
      %v745 = vadd.f32 %v565, %v744
      %v746 = vpop.f32.mrf.mxu0
      %747 = vmatprep.mubr.f32.mxu0 0.0
      %748 = vmatmul.mubr.f32.gmra.mxu0 %v372
      %v749 = vpop.f32.mrf.mxu0
      %v750 = vadd.f32 %v570, %v749
      %v751 = vpop.f32.mrf.mxu0
      %752 = vmatprep.mubr.f32.mxu0 0.0
      %753 = vmatmul.mubr.f32.gmra.mxu0 %v373
      %v754 = vpop.f32.mrf.mxu0
      %v755 = vadd.f32 %v575, %v754
      %v756 = vpop.f32.mrf.mxu0
      %757 = vmatprep.mubr.f32.mxu0 0.0
      %758 = vmatmul.mubr.f32.gmra.mxu0 %v374
      %v759 = vpop.f32.mrf.mxu0
      %v760 = vadd.f32 %v580, %v759
      %v761 = vpop.f32.mrf.mxu0
      %762 = vmatprep.mubr.f32.mxu0 0.0
      %763 = vmatmul.mubr.f32.gmra.mxu0 %v375
      %v764 = vpop.f32.mrf.mxu0
      %v765 = vadd.f32 %v585, %v764
      %v766 = vpop.f32.mrf.mxu0
      %767 = vmatprep.mubr.f32.mxu0 0.0
      %768 = vmatmul.mubr.f32.gmra.mxu0 %v376
      %v769 = vpop.f32.mrf.mxu0
      %v770 = vadd.f32 %v590, %v769
      %v771 = vpop.f32.mrf.mxu0
      %772 = vmatprep.mubr.f32.mxu0 0.0
      %773 = vmatmul.mubr.f32.gmra.mxu0 %v377
      %v774 = vpop.f32.mrf.mxu0
      %v775 = vadd.f32 %v595, %v774
      %v776 = vpop.f32.mrf.mxu0
      %777 = vmatprep.mubr.f32.mxu0 0.0
      %778 = vmatmul.mubr.f32.gmra.mxu0 %v378
      %v779 = vpop.f32.mrf.mxu0
      %v780 = vadd.f32 %v600, %v779
      %v781 = vpop.f32.mrf.mxu0
      %782 = vmatprep.mubr.f32.mxu0 0.0
      %783 = vmatmul.mubr.f32.gmra.mxu0 %v379
      %v784 = vpop.f32.mrf.mxu0
      %v785 = vadd.f32 %v605, %v784
      %v786 = vpop.f32.mrf.mxu0
      %787 = vmatprep.mubr.f32.mxu0 0.0
      %788 = vmatmul.mubr.f32.gmra.mxu0 %v380
      %v789 = vpop.f32.mrf.mxu0
      %v790 = vadd.f32 %v610, %v789
      %v791 = vpop.f32.mrf.mxu0
      %792 = vmatprep.mubr.f32.mxu0 0.0
      %793 = vmatmul.mubr.f32.gmra.mxu0 %v381
      %v794 = vpop.f32.mrf.mxu0
      %v795 = vadd.f32 %v615, %v794
      %v796 = vpop.f32.mrf.mxu0
      %797 = vdwg.mxu0
      %v798 = vld [vmem:[#allocation2 + $0x2] sm:$0xff]
      %v799 = vld [vmem:[#allocation2 + $0xa] sm:$0xff]
      %v800 = vld [vmem:[#allocation2 + $0x12] sm:$0xff]
      %v801 = vld [vmem:[#allocation2 + $0x1a] sm:$0xff]
      %v802 = vld [vmem:[#allocation2 + $0x22] sm:$0xff]
      %v803 = vld [vmem:[#allocation2 + $0x2a] sm:$0xff]
      %v804 = vld [vmem:[#allocation2 + $0x32] sm:$0xff]
      %v805 = vld [vmem:[#allocation2 + $0x3a] sm:$0xff]
      %v806 = vld [vmem:[#allocation2 + $0x42] sm:$0xff]
      %v807 = vld [vmem:[#allocation2 + $0x4a] sm:$0xff]
      %v808 = vld [vmem:[#allocation2 + $0x52] sm:$0xff]
      %v809 = vld [vmem:[#allocation2 + $0x5a] sm:$0xff]
      %v810 = vld [vmem:[#allocation2 + $0x62] sm:$0xff]
      %v811 = vld [vmem:[#allocation2 + $0x6a] sm:$0xff]
      %v812 = vld [vmem:[#allocation2 + $0x72] sm:$0xff]
      %v813 = vld [vmem:[#allocation2 + $0x7a] sm:$0xff]
      %v814 = vld [vmem:[#allocation2 + $0x82] sm:$0xff]
      %v815 = vld [vmem:[#allocation2 + $0x8a] sm:$0xff]
      %v816 = vld [vmem:[#allocation2 + $0x92] sm:$0xff]
      %v817 = vld [vmem:[#allocation2 + $0x9a] sm:$0xff]
      %v818 = vld [vmem:[#allocation2 + $0xa2] sm:$0xff]
      %v819 = vld [vmem:[#allocation2 + $0xaa] sm:$0xff]
      %v820 = vld [vmem:[#allocation2 + $0xb2] sm:$0xf]
      %s821 = scalar_lea.vmem %s1, 256
      %v822 = vld [vmem:[%s821] sm:$0xff]
      %v823 = vld [vmem:[%s821 + $0x8] sm:$0xff]
      %v824 = vld [vmem:[%s821 + $0x10] sm:$0xff]
      %v825 = vld [vmem:[%s821 + $0x18] sm:$0xff]
      %v826 = vld [vmem:[%s821 + $0x20] sm:$0xff]
      %v827 = vld [vmem:[%s821 + $0x28] sm:$0xff]
      %v828 = vld [vmem:[%s821 + $0x30] sm:$0xff]
      %v829 = vld [vmem:[%s821 + $0x38] sm:$0xff]
      %v830 = vld [vmem:[%s821 + $0x40] sm:$0xff]
      %v831 = vld [vmem:[%s821 + $0x48] sm:$0xff]
      %v832 = vld [vmem:[%s821 + $0x50] sm:$0xff]
      %v833 = vld [vmem:[%s821 + $0x58] sm:$0xff]
      %v834 = vld [vmem:[%s821 + $0x60] sm:$0xff]
      %v835 = vld [vmem:[%s821 + $0x68] sm:$0xff]
      %v836 = vld [vmem:[%s821 + $0x70] sm:$0xff]
      %v837 = vld [vmem:[%s821 + $0x78] sm:$0xff]
      %838 = vmatprep.subr.mxu0 0.0
      %839 = vmatpush1.msra.mxu0 %v837
      %840 = vmatprep.subr.mxu0 0.0
      %841 = vmatpush1.msra.mxu0 %v836
      %842 = vmatprep.subr.mxu0 0.0
      %843 = vmatpush1.msra.mxu0 %v835
      %844 = vmatprep.subr.mxu0 0.0
      %845 = vmatpush1.msra.mxu0 %v834
      %846 = vmatprep.subr.mxu0 0.0
      %847 = vmatpush1.msra.mxu0 %v833
      %848 = vmatprep.subr.mxu0 0.0
      %849 = vmatpush1.msra.mxu0 %v832
      %850 = vmatprep.subr.mxu0 0.0
      %851 = vmatpush1.msra.mxu0 %v831
      %852 = vmatprep.subr.mxu0 0.0
      %853 = vmatpush1.msra.mxu0 %v830
      %854 = vmatprep.subr.mxu0 0.0
      %855 = vmatpush1.msra.mxu0 %v829
      %856 = vmatprep.subr.mxu0 0.0
      %857 = vmatpush1.msra.mxu0 %v828
      %858 = vmatprep.subr.mxu0 0.0
      %859 = vmatpush1.msra.mxu0 %v827
      %860 = vmatprep.subr.mxu0 0.0
      %861 = vmatpush1.msra.mxu0 %v826
      %862 = vmatprep.subr.mxu0 0.0
      %863 = vmatpush1.msra.mxu0 %v825
      %864 = vmatprep.subr.mxu0 0.0
      %865 = vmatpush1.msra.mxu0 %v824
      %866 = vmatprep.subr.mxu0 0.0
      %867 = vmatpush1.msra.mxu0 %v823
      %868 = vmatprep.subr.mxu0 0.0
      %869 = vmatpush1.msra.mxu0 %v822
      %870 = vmatprep.subr.mxu0 0.0
      %871 = vmatpush2.msra.mxu0 0.0
      %872 = vmatprep.subr.mxu0 0.0
      %873 = vmatpush2.msra.mxu0 0.0
      %874 = vmatprep.subr.mxu0 0.0
      %875 = vmatpush2.msra.mxu0 0.0
      %876 = vmatprep.subr.mxu0 0.0
      %877 = vmatpush2.msra.mxu0 0.0
      %878 = vmatprep.subr.mxu0 0.0
      %879 = vmatpush2.msra.mxu0 0.0
      %880 = vmatprep.subr.mxu0 0.0
      %881 = vmatpush2.msra.mxu0 0.0
      %882 = vmatprep.subr.mxu0 0.0
      %883 = vmatpush2.msra.mxu0 0.0
      %884 = vmatprep.subr.mxu0 0.0
      %885 = vmatpush2.msra.mxu0 0.0
      %886 = vmatprep.subr.mxu0 0.0
      %887 = vmatpush2.msra.mxu0 0.0
      %888 = vmatprep.subr.mxu0 0.0
      %889 = vmatpush2.msra.mxu0 0.0
      %890 = vmatprep.subr.mxu0 0.0
      %891 = vmatpush2.msra.mxu0 0.0
      %892 = vmatprep.subr.mxu0 0.0
      %893 = vmatpush2.msra.mxu0 0.0
      %894 = vmatprep.subr.mxu0 0.0
      %895 = vmatpush2.msra.mxu0 0.0
      %896 = vmatprep.subr.mxu0 0.0
      %897 = vmatpush2.msra.mxu0 0.0
      %898 = vmatprep.subr.mxu0 0.0
      %899 = vmatpush2.msra.mxu0 0.0
      %900 = vmatprep.subr.mxu0 0.0
      %901 = vmatpush2.msra.mxu0 0.0
      %902 = vmatprep.mubr.f32.mxu0 0.0
      %903 = vmatmul.mubr.f32.gmra.mxu0 %v798
      %v904 = vpop.f32.mrf.mxu0
      %v905 = vadd.f32 0.0, %v904
      %v906 = vpop.f32.mrf.mxu0
      %907 = vmatprep.mubr.f32.mxu0 0.0
      %908 = vmatmul.mubr.f32.gmra.mxu0 %v799
      %v909 = vpop.f32.mrf.mxu0
      %v910 = vadd.f32 0.0, %v909
      %v911 = vpop.f32.mrf.mxu0
      %912 = vmatprep.mubr.f32.mxu0 0.0
      %913 = vmatmul.mubr.f32.gmra.mxu0 %v800
      %v914 = vpop.f32.mrf.mxu0
      %v915 = vadd.f32 0.0, %v914
      %v916 = vpop.f32.mrf.mxu0
      %917 = vmatprep.mubr.f32.mxu0 0.0
      %918 = vmatmul.mubr.f32.gmra.mxu0 %v801
      %v919 = vpop.f32.mrf.mxu0
      %v920 = vadd.f32 0.0, %v919
      %v921 = vpop.f32.mrf.mxu0
      %922 = vmatprep.mubr.f32.mxu0 0.0
      %923 = vmatmul.mubr.f32.gmra.mxu0 %v802
      %v924 = vpop.f32.mrf.mxu0
      %v925 = vadd.f32 0.0, %v924
      %v926 = vpop.f32.mrf.mxu0
      %927 = vmatprep.mubr.f32.mxu0 0.0
      %928 = vmatmul.mubr.f32.gmra.mxu0 %v803
      %v929 = vpop.f32.mrf.mxu0
      %v930 = vadd.f32 0.0, %v929
      %v931 = vpop.f32.mrf.mxu0
      %932 = vmatprep.mubr.f32.mxu0 0.0
      %933 = vmatmul.mubr.f32.gmra.mxu0 %v804
      %v934 = vpop.f32.mrf.mxu0
      %v935 = vadd.f32 0.0, %v934
      %v936 = vpop.f32.mrf.mxu0
      %937 = vmatprep.mubr.f32.mxu0 0.0
      %938 = vmatmul.mubr.f32.gmra.mxu0 %v805
      %v939 = vpop.f32.mrf.mxu0
      %v940 = vadd.f32 0.0, %v939
      %v941 = vpop.f32.mrf.mxu0
      %942 = vmatprep.mubr.f32.mxu0 0.0
      %943 = vmatmul.mubr.f32.gmra.mxu0 %v806
      %v944 = vpop.f32.mrf.mxu0
      %v945 = vadd.f32 0.0, %v944
      %v946 = vpop.f32.mrf.mxu0
      %947 = vmatprep.mubr.f32.mxu0 0.0
      %948 = vmatmul.mubr.f32.gmra.mxu0 %v807
      %v949 = vpop.f32.mrf.mxu0
      %v950 = vadd.f32 0.0, %v949
      %v951 = vpop.f32.mrf.mxu0
      %952 = vmatprep.mubr.f32.mxu0 0.0
      %953 = vmatmul.mubr.f32.gmra.mxu0 %v808
      %v954 = vpop.f32.mrf.mxu0
      %v955 = vadd.f32 0.0, %v954
      %v956 = vpop.f32.mrf.mxu0
      %957 = vmatprep.mubr.f32.mxu0 0.0
      %958 = vmatmul.mubr.f32.gmra.mxu0 %v809
      %v959 = vpop.f32.mrf.mxu0
      %v960 = vadd.f32 0.0, %v959
      %v961 = vpop.f32.mrf.mxu0
      %962 = vmatprep.mubr.f32.mxu0 0.0
      %963 = vmatmul.mubr.f32.gmra.mxu0 %v810
      %v964 = vpop.f32.mrf.mxu0
      %v965 = vadd.f32 0.0, %v964
      %v966 = vpop.f32.mrf.mxu0
      %967 = vmatprep.mubr.f32.mxu0 0.0
      %968 = vmatmul.mubr.f32.gmra.mxu0 %v811
      %v969 = vpop.f32.mrf.mxu0
      %v970 = vadd.f32 0.0, %v969
      %v971 = vpop.f32.mrf.mxu0
      %972 = vmatprep.mubr.f32.mxu0 0.0
      %973 = vmatmul.mubr.f32.gmra.mxu0 %v812
      %v974 = vpop.f32.mrf.mxu0
      %v975 = vadd.f32 0.0, %v974
      %v976 = vpop.f32.mrf.mxu0
      %977 = vmatprep.mubr.f32.mxu0 0.0
      %978 = vmatmul.mubr.f32.gmra.mxu0 %v813
      %v979 = vpop.f32.mrf.mxu0
      %v980 = vadd.f32 0.0, %v979
      %v981 = vpop.f32.mrf.mxu0
      %982 = vmatprep.mubr.f32.mxu0 0.0
      %983 = vmatmul.mubr.f32.gmra.mxu0 %v814
      %v984 = vpop.f32.mrf.mxu0
      %v985 = vadd.f32 0.0, %v984
      %v986 = vpop.f32.mrf.mxu0
      %987 = vmatprep.mubr.f32.mxu0 0.0
      %988 = vmatmul.mubr.f32.gmra.mxu0 %v815
      %v989 = vpop.f32.mrf.mxu0
      %v990 = vadd.f32 0.0, %v989
      %v991 = vpop.f32.mrf.mxu0
      %992 = vmatprep.mubr.f32.mxu0 0.0
      %993 = vmatmul.mubr.f32.gmra.mxu0 %v816
      %v994 = vpop.f32.mrf.mxu0
      %v995 = vadd.f32 0.0, %v994
      %v996 = vpop.f32.mrf.mxu0
      %997 = vmatprep.mubr.f32.mxu0 0.0
      %998 = vmatmul.mubr.f32.gmra.mxu0 %v817
      %v999 = vpop.f32.mrf.mxu0
      %v1000 = vadd.f32 0.0, %v999
      %v1001 = vpop.f32.mrf.mxu0
      %1002 = vmatprep.mubr.f32.mxu0 0.0
      %1003 = vmatmul.mubr.f32.gmra.mxu0 %v818
      %v1004 = vpop.f32.mrf.mxu0
      %v1005 = vadd.f32 0.0, %v1004
      %v1006 = vpop.f32.mrf.mxu0
      %1007 = vmatprep.mubr.f32.mxu0 0.0
      %1008 = vmatmul.mubr.f32.gmra.mxu0 %v819
      %v1009 = vpop.f32.mrf.mxu0
      %v1010 = vadd.f32 0.0, %v1009
      %v1011 = vpop.f32.mrf.mxu0
      %1012 = vmatprep.mubr.f32.mxu0 0.0
      %1013 = vmatmul.mubr.f32.gmra.mxu0 %v820
      %v1014 = vpop.f32.mrf.mxu0
      %v1015 = vadd.f32 0.0, %v1014
      %v1016 = vpop.f32.mrf.mxu0
      %1017 = vdwg.mxu0
      %v1018 = vadd.f32 %v685, %v905
      %v1019 = vadd.f32 %v690, %v910
      %v1020 = vadd.f32 %v695, %v915
      %v1021 = vadd.f32 %v700, %v920
      %v1022 = vadd.f32 %v705, %v925
      %v1023 = vadd.f32 %v710, %v930
      %v1024 = vadd.f32 %v715, %v935
      %v1025 = vadd.f32 %v720, %v940
      %v1026 = vadd.f32 %v725, %v945
      %v1027 = vadd.f32 %v730, %v950
      %v1028 = vadd.f32 %v735, %v955
      %v1029 = vadd.f32 %v740, %v960
      %v1030 = vadd.f32 %v745, %v965
      %v1031 = vadd.f32 %v750, %v970
      %v1032 = vadd.f32 %v755, %v975
      %v1033 = vadd.f32 %v760, %v980
      %v1034 = vadd.f32 %v765, %v985
      %v1035 = vadd.f32 %v770, %v990
      %v1036 = vadd.f32 %v775, %v995
      %v1037 = vadd.f32 %v780, %v1000
      %v1038 = vadd.f32 %v785, %v1005
      %v1039 = vadd.f32 %v790, %v1010
      %v1040 = vadd.f32 %v795, %v1015
      %v1041 = vld [vmem:[#allocation2 + $0x12] sm:$0xff]
      %v1042 = vld [vmem:[#allocation2 + $0x1a] sm:$0xff]
      %v1043 = vld [vmem:[#allocation2 + $0x22] sm:$0xff]
      %v1044 = vld [vmem:[#allocation2 + $0x2a] sm:$0xff]
      %v1045 = vld [vmem:[#allocation2 + $0x32] sm:$0xff]
      %v1046 = vld [vmem:[#allocation2 + $0x3a] sm:$0xff]
      %v1047 = vld [vmem:[#allocation2 + $0x42] sm:$0xff]
      %v1048 = vld [vmem:[#allocation2 + $0x4a] sm:$0xff]
      %v1049 = vld [vmem:[#allocation2 + $0x52] sm:$0xff]
      %v1050 = vld [vmem:[#allocation2 + $0x5a] sm:$0xff]
      %v1051 = vld [vmem:[#allocation2 + $0x62] sm:$0xff]
      %v1052 = vld [vmem:[#allocation2 + $0x6a] sm:$0xff]
      %v1053 = vld [vmem:[#allocation2 + $0x72] sm:$0xff]
      %v1054 = vld [vmem:[#allocation2 + $0x7a] sm:$0xff]
      %v1055 = vld [vmem:[#allocation2 + $0x82] sm:$0xff]
      %v1056 = vld [vmem:[#allocation2 + $0x8a] sm:$0xff]
      %v1057 = vld [vmem:[#allocation2 + $0x92] sm:$0xff]
      %v1058 = vld [vmem:[#allocation2 + $0x9a] sm:$0xff]
      %v1059 = vld [vmem:[#allocation2 + $0xa2] sm:$0xff]
      %v1060 = vld [vmem:[#allocation2 + $0xaa] sm:$0xff]
      %v1061 = vld [vmem:[#allocation2 + $0xb2] sm:$0xff]
      %v1062 = vld [vmem:[#allocation2 + $0xba] sm:$0xff]
      %v1063 = vld [vmem:[#allocation2 + $0xc2] sm:$0xf]
      %s1064 = scalar_lea.vmem %s1, 384
      %v1065 = vld [vmem:[%s1064] sm:$0xff]
      %v1066 = vld [vmem:[%s1064 + $0x8] sm:$0xff]
      %v1067 = vld [vmem:[%s1064 + $0x10] sm:$0xff]
      %v1068 = vld [vmem:[%s1064 + $0x18] sm:$0xff]
      %v1069 = vld [vmem:[%s1064 + $0x20] sm:$0xff]
      %v1070 = vld [vmem:[%s1064 + $0x28] sm:$0xff]
      %v1071 = vld [vmem:[%s1064 + $0x30] sm:$0xff]
      %v1072 = vld [vmem:[%s1064 + $0x38] sm:$0xff]
      %v1073 = vld [vmem:[%s1064 + $0x40] sm:$0xff]
      %v1074 = vld [vmem:[%s1064 + $0x48] sm:$0xff]
      %v1075 = vld [vmem:[%s1064 + $0x50] sm:$0xff]
      %v1076 = vld [vmem:[%s1064 + $0x58] sm:$0xff]
      %v1077 = vld [vmem:[%s1064 + $0x60] sm:$0xff]
      %v1078 = vld [vmem:[%s1064 + $0x68] sm:$0xff]
      %v1079 = vld [vmem:[%s1064 + $0x70] sm:$0xff]
      %v1080 = vld [vmem:[%s1064 + $0x78] sm:$0xff]
      %1081 = vmatprep.subr.mxu0 0.0
      %1082 = vmatpush1.msra.mxu0 %v1080
      %1083 = vmatprep.subr.mxu0 0.0
      %1084 = vmatpush1.msra.mxu0 %v1079
      %1085 = vmatprep.subr.mxu0 0.0
      %1086 = vmatpush1.msra.mxu0 %v1078
      %1087 = vmatprep.subr.mxu0 0.0
      %1088 = vmatpush1.msra.mxu0 %v1077
      %1089 = vmatprep.subr.mxu0 0.0
      %1090 = vmatpush1.msra.mxu0 %v1076
      %1091 = vmatprep.subr.mxu0 0.0
      %1092 = vmatpush1.msra.mxu0 %v1075
      %1093 = vmatprep.subr.mxu0 0.0
      %1094 = vmatpush1.msra.mxu0 %v1074
      %1095 = vmatprep.subr.mxu0 0.0
      %1096 = vmatpush1.msra.mxu0 %v1073
      %1097 = vmatprep.subr.mxu0 0.0
      %1098 = vmatpush1.msra.mxu0 %v1072
      %1099 = vmatprep.subr.mxu0 0.0
      %1100 = vmatpush1.msra.mxu0 %v1071
      %1101 = vmatprep.subr.mxu0 0.0
      %1102 = vmatpush1.msra.mxu0 %v1070
      %1103 = vmatprep.subr.mxu0 0.0
      %1104 = vmatpush1.msra.mxu0 %v1069
      %1105 = vmatprep.subr.mxu0 0.0
      %1106 = vmatpush1.msra.mxu0 %v1068
      %1107 = vmatprep.subr.mxu0 0.0
      %1108 = vmatpush1.msra.mxu0 %v1067
      %1109 = vmatprep.subr.mxu0 0.0
      %1110 = vmatpush1.msra.mxu0 %v1066
      %1111 = vmatprep.subr.mxu0 0.0
      %1112 = vmatpush1.msra.mxu0 %v1065
      %1113 = vmatprep.subr.mxu0 0.0
      %1114 = vmatpush2.msra.mxu0 0.0
      %1115 = vmatprep.subr.mxu0 0.0
      %1116 = vmatpush2.msra.mxu0 0.0
      %1117 = vmatprep.subr.mxu0 0.0
      %1118 = vmatpush2.msra.mxu0 0.0
      %1119 = vmatprep.subr.mxu0 0.0
      %1120 = vmatpush2.msra.mxu0 0.0
      %1121 = vmatprep.subr.mxu0 0.0
      %1122 = vmatpush2.msra.mxu0 0.0
      %1123 = vmatprep.subr.mxu0 0.0
      %1124 = vmatpush2.msra.mxu0 0.0
      %1125 = vmatprep.subr.mxu0 0.0
      %1126 = vmatpush2.msra.mxu0 0.0
      %1127 = vmatprep.subr.mxu0 0.0
      %1128 = vmatpush2.msra.mxu0 0.0
      %1129 = vmatprep.subr.mxu0 0.0
      %1130 = vmatpush2.msra.mxu0 0.0
      %1131 = vmatprep.subr.mxu0 0.0
      %1132 = vmatpush2.msra.mxu0 0.0
      %1133 = vmatprep.subr.mxu0 0.0
      %1134 = vmatpush2.msra.mxu0 0.0
      %1135 = vmatprep.subr.mxu0 0.0
      %1136 = vmatpush2.msra.mxu0 0.0
      %1137 = vmatprep.subr.mxu0 0.0
      %1138 = vmatpush2.msra.mxu0 0.0
      %1139 = vmatprep.subr.mxu0 0.0
      %1140 = vmatpush2.msra.mxu0 0.0
      %1141 = vmatprep.subr.mxu0 0.0
      %1142 = vmatpush2.msra.mxu0 0.0
      %1143 = vmatprep.subr.mxu0 0.0
      %1144 = vmatpush2.msra.mxu0 0.0
      %1145 = vmatprep.mubr.f32.mxu0 0.0
      %1146 = vmatmul.mubr.f32.gmra.mxu0 %v1041
      %v1147 = vpop.f32.mrf.mxu0
      %v1148 = vadd.f32 0.0, %v1147
      %v1149 = vpop.f32.mrf.mxu0
      %1150 = vmatprep.mubr.f32.mxu0 0.0
      %1151 = vmatmul.mubr.f32.gmra.mxu0 %v1042
      %v1152 = vpop.f32.mrf.mxu0
      %v1153 = vadd.f32 0.0, %v1152
      %v1154 = vpop.f32.mrf.mxu0
      %1155 = vmatprep.mubr.f32.mxu0 0.0
      %1156 = vmatmul.mubr.f32.gmra.mxu0 %v1043
      %v1157 = vpop.f32.mrf.mxu0
      %v1158 = vadd.f32 0.0, %v1157
      %v1159 = vpop.f32.mrf.mxu0
      %1160 = vmatprep.mubr.f32.mxu0 0.0
      %1161 = vmatmul.mubr.f32.gmra.mxu0 %v1044
      %v1162 = vpop.f32.mrf.mxu0
      %v1163 = vadd.f32 0.0, %v1162
      %v1164 = vpop.f32.mrf.mxu0
      %1165 = vmatprep.mubr.f32.mxu0 0.0
      %1166 = vmatmul.mubr.f32.gmra.mxu0 %v1045
      %v1167 = vpop.f32.mrf.mxu0
      %v1168 = vadd.f32 0.0, %v1167
      %v1169 = vpop.f32.mrf.mxu0
      %1170 = vmatprep.mubr.f32.mxu0 0.0
      %1171 = vmatmul.mubr.f32.gmra.mxu0 %v1046
      %v1172 = vpop.f32.mrf.mxu0
      %v1173 = vadd.f32 0.0, %v1172
      %v1174 = vpop.f32.mrf.mxu0
      %1175 = vmatprep.mubr.f32.mxu0 0.0
      %1176 = vmatmul.mubr.f32.gmra.mxu0 %v1047
      %v1177 = vpop.f32.mrf.mxu0
      %v1178 = vadd.f32 0.0, %v1177
      %v1179 = vpop.f32.mrf.mxu0
      %1180 = vmatprep.mubr.f32.mxu0 0.0
      %1181 = vmatmul.mubr.f32.gmra.mxu0 %v1048
      %v1182 = vpop.f32.mrf.mxu0
      %v1183 = vadd.f32 0.0, %v1182
      %v1184 = vpop.f32.mrf.mxu0
      %1185 = vmatprep.mubr.f32.mxu0 0.0
      %1186 = vmatmul.mubr.f32.gmra.mxu0 %v1049
      %v1187 = vpop.f32.mrf.mxu0
      %v1188 = vadd.f32 0.0, %v1187
      %v1189 = vpop.f32.mrf.mxu0
      %1190 = vmatprep.mubr.f32.mxu0 0.0
      %1191 = vmatmul.mubr.f32.gmra.mxu0 %v1050
      %v1192 = vpop.f32.mrf.mxu0
      %v1193 = vadd.f32 0.0, %v1192
      %v1194 = vpop.f32.mrf.mxu0
      %1195 = vmatprep.mubr.f32.mxu0 0.0
      %1196 = vmatmul.mubr.f32.gmra.mxu0 %v1051
      %v1197 = vpop.f32.mrf.mxu0
      %v1198 = vadd.f32 0.0, %v1197
      %v1199 = vpop.f32.mrf.mxu0
      %1200 = vmatprep.mubr.f32.mxu0 0.0
      %1201 = vmatmul.mubr.f32.gmra.mxu0 %v1052
      %v1202 = vpop.f32.mrf.mxu0
      %v1203 = vadd.f32 0.0, %v1202
      %v1204 = vpop.f32.mrf.mxu0
      %1205 = vmatprep.mubr.f32.mxu0 0.0
      %1206 = vmatmul.mubr.f32.gmra.mxu0 %v1053
      %v1207 = vpop.f32.mrf.mxu0
      %v1208 = vadd.f32 0.0, %v1207
      %v1209 = vpop.f32.mrf.mxu0
      %1210 = vmatprep.mubr.f32.mxu0 0.0
      %1211 = vmatmul.mubr.f32.gmra.mxu0 %v1054
      %v1212 = vpop.f32.mrf.mxu0
      %v1213 = vadd.f32 0.0, %v1212
      %v1214 = vpop.f32.mrf.mxu0
      %1215 = vmatprep.mubr.f32.mxu0 0.0
      %1216 = vmatmul.mubr.f32.gmra.mxu0 %v1055
      %v1217 = vpop.f32.mrf.mxu0
      %v1218 = vadd.f32 0.0, %v1217
      %v1219 = vpop.f32.mrf.mxu0
      %1220 = vmatprep.mubr.f32.mxu0 0.0
      %1221 = vmatmul.mubr.f32.gmra.mxu0 %v1056
      %v1222 = vpop.f32.mrf.mxu0
      %v1223 = vadd.f32 0.0, %v1222
      %v1224 = vpop.f32.mrf.mxu0
      %1225 = vmatprep.mubr.f32.mxu0 0.0
      %1226 = vmatmul.mubr.f32.gmra.mxu0 %v1057
      %v1227 = vpop.f32.mrf.mxu0
      %v1228 = vadd.f32 0.0, %v1227
      %v1229 = vpop.f32.mrf.mxu0
      %1230 = vmatprep.mubr.f32.mxu0 0.0
      %1231 = vmatmul.mubr.f32.gmra.mxu0 %v1058
      %v1232 = vpop.f32.mrf.mxu0
      %v1233 = vadd.f32 0.0, %v1232
      %v1234 = vpop.f32.mrf.mxu0
      %1235 = vmatprep.mubr.f32.mxu0 0.0
      %1236 = vmatmul.mubr.f32.gmra.mxu0 %v1059
      %v1237 = vpop.f32.mrf.mxu0
      %v1238 = vadd.f32 0.0, %v1237
      %v1239 = vpop.f32.mrf.mxu0
      %1240 = vmatprep.mubr.f32.mxu0 0.0
      %1241 = vmatmul.mubr.f32.gmra.mxu0 %v1060
      %v1242 = vpop.f32.mrf.mxu0
      %v1243 = vadd.f32 0.0, %v1242
      %v1244 = vpop.f32.mrf.mxu0
      %1245 = vmatprep.mubr.f32.mxu0 0.0
      %1246 = vmatmul.mubr.f32.gmra.mxu0 %v1061
      %v1247 = vpop.f32.mrf.mxu0
      %v1248 = vadd.f32 0.0, %v1247
      %v1249 = vpop.f32.mrf.mxu0
      %1250 = vmatprep.mubr.f32.mxu0 0.0
      %1251 = vmatmul.mubr.f32.gmra.mxu0 %v1062
      %v1252 = vpop.f32.mrf.mxu0
      %v1253 = vadd.f32 0.0, %v1252
      %v1254 = vpop.f32.mrf.mxu0
      %1255 = vmatprep.mubr.f32.mxu0 0.0
      %1256 = vmatmul.mubr.f32.gmra.mxu0 %v1063
      %v1257 = vpop.f32.mrf.mxu0
      %v1258 = vadd.f32 0.0, %v1257
      %v1259 = vpop.f32.mrf.mxu0
      %1260 = vdwg.mxu0
      %v1261 = vadd.f32 %v1018, %v1148
      %v1262 = vadd.f32 %v1019, %v1153
      %v1263 = vadd.f32 %v1020, %v1158
      %v1264 = vadd.f32 %v1021, %v1163
      %v1265 = vadd.f32 %v1022, %v1168
      %v1266 = vadd.f32 %v1023, %v1173
      %v1267 = vadd.f32 %v1024, %v1178
      %v1268 = vadd.f32 %v1025, %v1183
      %v1269 = vadd.f32 %v1026, %v1188
      %v1270 = vadd.f32 %v1027, %v1193
      %v1271 = vadd.f32 %v1028, %v1198
      %v1272 = vadd.f32 %v1029, %v1203
      %v1273 = vadd.f32 %v1030, %v1208
      %v1274 = vadd.f32 %v1031, %v1213
      %v1275 = vadd.f32 %v1032, %v1218
      %v1276 = vadd.f32 %v1033, %v1223
      %v1277 = vadd.f32 %v1034, %v1228
      %v1278 = vadd.f32 %v1035, %v1233
      %v1279 = vadd.f32 %v1036, %v1238
      %v1280 = vadd.f32 %v1037, %v1243
      %v1281 = vadd.f32 %v1038, %v1248
      %v1282 = vadd.f32 %v1039, %v1253
      %v1283 = vadd.f32 %v1040, %v1258
      %v1284 = vld [vmem:[#allocation2 + $0x13] sm:$0xff]
      %v1285 = vld [vmem:[#allocation2 + $0x1b] sm:$0xff]
      %v1286 = vld [vmem:[#allocation2 + $0x23] sm:$0xff]
      %v1287 = vld [vmem:[#allocation2 + $0x2b] sm:$0xff]
      %v1288 = vld [vmem:[#allocation2 + $0x33] sm:$0xff]
      %v1289 = vld [vmem:[#allocation2 + $0x3b] sm:$0xff]
      %v1290 = vld [vmem:[#allocation2 + $0x43] sm:$0xff]
      %v1291 = vld [vmem:[#allocation2 + $0x4b] sm:$0xff]
      %v1292 = vld [vmem:[#allocation2 + $0x53] sm:$0xff]
      %v1293 = vld [vmem:[#allocation2 + $0x5b] sm:$0xff]
      %v1294 = vld [vmem:[#allocation2 + $0x63] sm:$0xff]
      %v1295 = vld [vmem:[#allocation2 + $0x6b] sm:$0xff]
      %v1296 = vld [vmem:[#allocation2 + $0x73] sm:$0xff]
      %v1297 = vld [vmem:[#allocation2 + $0x7b] sm:$0xff]
      %v1298 = vld [vmem:[#allocation2 + $0x83] sm:$0xff]
      %v1299 = vld [vmem:[#allocation2 + $0x8b] sm:$0xff]
      %v1300 = vld [vmem:[#allocation2 + $0x93] sm:$0xff]
      %v1301 = vld [vmem:[#allocation2 + $0x9b] sm:$0xff]
      %v1302 = vld [vmem:[#allocation2 + $0xa3] sm:$0xff]
      %v1303 = vld [vmem:[#allocation2 + $0xab] sm:$0xff]
      %v1304 = vld [vmem:[#allocation2 + $0xb3] sm:$0xff]
      %v1305 = vld [vmem:[#allocation2 + $0xbb] sm:$0xff]
      %v1306 = vld [vmem:[#allocation2 + $0xc3] sm:$0xf]
      %s1307 = scalar_lea.vmem %s1, 512
      %v1308 = vld [vmem:[%s1307] sm:$0xff]
      %v1309 = vld [vmem:[%s1307 + $0x8] sm:$0xff]
      %v1310 = vld [vmem:[%s1307 + $0x10] sm:$0xff]
      %v1311 = vld [vmem:[%s1307 + $0x18] sm:$0xff]
      %v1312 = vld [vmem:[%s1307 + $0x20] sm:$0xff]
      %v1313 = vld [vmem:[%s1307 + $0x28] sm:$0xff]
      %v1314 = vld [vmem:[%s1307 + $0x30] sm:$0xff]
      %v1315 = vld [vmem:[%s1307 + $0x38] sm:$0xff]
      %v1316 = vld [vmem:[%s1307 + $0x40] sm:$0xff]
      %v1317 = vld [vmem:[%s1307 + $0x48] sm:$0xff]
      %v1318 = vld [vmem:[%s1307 + $0x50] sm:$0xff]
      %v1319 = vld [vmem:[%s1307 + $0x58] sm:$0xff]
      %v1320 = vld [vmem:[%s1307 + $0x60] sm:$0xff]
      %v1321 = vld [vmem:[%s1307 + $0x68] sm:$0xff]
      %v1322 = vld [vmem:[%s1307 + $0x70] sm:$0xff]
      %v1323 = vld [vmem:[%s1307 + $0x78] sm:$0xff]
      %1324 = vmatprep.subr.mxu0 0.0
      %1325 = vmatpush1.msra.mxu0 %v1323
      %1326 = vmatprep.subr.mxu0 0.0
      %1327 = vmatpush1.msra.mxu0 %v1322
      %1328 = vmatprep.subr.mxu0 0.0
      %1329 = vmatpush1.msra.mxu0 %v1321
      %1330 = vmatprep.subr.mxu0 0.0
      %1331 = vmatpush1.msra.mxu0 %v1320
      %1332 = vmatprep.subr.mxu0 0.0
      %1333 = vmatpush1.msra.mxu0 %v1319
      %1334 = vmatprep.subr.mxu0 0.0
      %1335 = vmatpush1.msra.mxu0 %v1318
      %1336 = vmatprep.subr.mxu0 0.0
      %1337 = vmatpush1.msra.mxu0 %v1317
      %1338 = vmatprep.subr.mxu0 0.0
      %1339 = vmatpush1.msra.mxu0 %v1316
      %1340 = vmatprep.subr.mxu0 0.0
      %1341 = vmatpush1.msra.mxu0 %v1315
      %1342 = vmatprep.subr.mxu0 0.0
      %1343 = vmatpush1.msra.mxu0 %v1314
      %1344 = vmatprep.subr.mxu0 0.0
      %1345 = vmatpush1.msra.mxu0 %v1313
      %1346 = vmatprep.subr.mxu0 0.0
      %1347 = vmatpush1.msra.mxu0 %v1312
      %1348 = vmatprep.subr.mxu0 0.0
      %1349 = vmatpush1.msra.mxu0 %v1311
      %1350 = vmatprep.subr.mxu0 0.0
      %1351 = vmatpush1.msra.mxu0 %v1310
      %1352 = vmatprep.subr.mxu0 0.0
      %1353 = vmatpush1.msra.mxu0 %v1309
      %1354 = vmatprep.subr.mxu0 0.0
      %1355 = vmatpush1.msra.mxu0 %v1308
      %1356 = vmatprep.subr.mxu0 0.0
      %1357 = vmatpush2.msra.mxu0 0.0
      %1358 = vmatprep.subr.mxu0 0.0
      %1359 = vmatpush2.msra.mxu0 0.0
      %1360 = vmatprep.subr.mxu0 0.0
      %1361 = vmatpush2.msra.mxu0 0.0
      %1362 = vmatprep.subr.mxu0 0.0
      %1363 = vmatpush2.msra.mxu0 0.0
      %1364 = vmatprep.subr.mxu0 0.0
      %1365 = vmatpush2.msra.mxu0 0.0
      %1366 = vmatprep.subr.mxu0 0.0
      %1367 = vmatpush2.msra.mxu0 0.0
      %1368 = vmatprep.subr.mxu0 0.0
      %1369 = vmatpush2.msra.mxu0 0.0
      %1370 = vmatprep.subr.mxu0 0.0
      %1371 = vmatpush2.msra.mxu0 0.0
      %1372 = vmatprep.subr.mxu0 0.0
      %1373 = vmatpush2.msra.mxu0 0.0
      %1374 = vmatprep.subr.mxu0 0.0
      %1375 = vmatpush2.msra.mxu0 0.0
      %1376 = vmatprep.subr.mxu0 0.0
      %1377 = vmatpush2.msra.mxu0 0.0
      %1378 = vmatprep.subr.mxu0 0.0
      %1379 = vmatpush2.msra.mxu0 0.0
      %1380 = vmatprep.subr.mxu0 0.0
      %1381 = vmatpush2.msra.mxu0 0.0
      %1382 = vmatprep.subr.mxu0 0.0
      %1383 = vmatpush2.msra.mxu0 0.0
      %1384 = vmatprep.subr.mxu0 0.0
      %1385 = vmatpush2.msra.mxu0 0.0
      %1386 = vmatprep.subr.mxu0 0.0
      %1387 = vmatpush2.msra.mxu0 0.0
      %1388 = vmatprep.mubr.f32.mxu0 0.0
      %1389 = vmatmul.mubr.f32.gmra.mxu0 %v1284
      %v1390 = vpop.f32.mrf.mxu0
      %v1391 = vadd.f32 0.0, %v1390
      %v1392 = vpop.f32.mrf.mxu0
      %1393 = vmatprep.mubr.f32.mxu0 0.0
      %1394 = vmatmul.mubr.f32.gmra.mxu0 %v1285
      %v1395 = vpop.f32.mrf.mxu0
      %v1396 = vadd.f32 0.0, %v1395
      %v1397 = vpop.f32.mrf.mxu0
      %1398 = vmatprep.mubr.f32.mxu0 0.0
      %1399 = vmatmul.mubr.f32.gmra.mxu0 %v1286
      %v1400 = vpop.f32.mrf.mxu0
      %v1401 = vadd.f32 0.0, %v1400
      %v1402 = vpop.f32.mrf.mxu0
      %1403 = vmatprep.mubr.f32.mxu0 0.0
      %1404 = vmatmul.mubr.f32.gmra.mxu0 %v1287
      %v1405 = vpop.f32.mrf.mxu0
      %v1406 = vadd.f32 0.0, %v1405
      %v1407 = vpop.f32.mrf.mxu0
      %1408 = vmatprep.mubr.f32.mxu0 0.0
      %1409 = vmatmul.mubr.f32.gmra.mxu0 %v1288
      %v1410 = vpop.f32.mrf.mxu0
      %v1411 = vadd.f32 0.0, %v1410
      %v1412 = vpop.f32.mrf.mxu0
      %1413 = vmatprep.mubr.f32.mxu0 0.0
      %1414 = vmatmul.mubr.f32.gmra.mxu0 %v1289
      %v1415 = vpop.f32.mrf.mxu0
      %v1416 = vadd.f32 0.0, %v1415
      %v1417 = vpop.f32.mrf.mxu0
      %1418 = vmatprep.mubr.f32.mxu0 0.0
      %1419 = vmatmul.mubr.f32.gmra.mxu0 %v1290
      %v1420 = vpop.f32.mrf.mxu0
      %v1421 = vadd.f32 0.0, %v1420
      %v1422 = vpop.f32.mrf.mxu0
      %1423 = vmatprep.mubr.f32.mxu0 0.0
      %1424 = vmatmul.mubr.f32.gmra.mxu0 %v1291
      %v1425 = vpop.f32.mrf.mxu0
      %v1426 = vadd.f32 0.0, %v1425
      %v1427 = vpop.f32.mrf.mxu0
      %1428 = vmatprep.mubr.f32.mxu0 0.0
      %1429 = vmatmul.mubr.f32.gmra.mxu0 %v1292
      %v1430 = vpop.f32.mrf.mxu0
      %v1431 = vadd.f32 0.0, %v1430
      %v1432 = vpop.f32.mrf.mxu0
      %1433 = vmatprep.mubr.f32.mxu0 0.0
      %1434 = vmatmul.mubr.f32.gmra.mxu0 %v1293
      %v1435 = vpop.f32.mrf.mxu0
      %v1436 = vadd.f32 0.0, %v1435
      %v1437 = vpop.f32.mrf.mxu0
      %1438 = vmatprep.mubr.f32.mxu0 0.0
      %1439 = vmatmul.mubr.f32.gmra.mxu0 %v1294
      %v1440 = vpop.f32.mrf.mxu0
      %v1441 = vadd.f32 0.0, %v1440
      %v1442 = vpop.f32.mrf.mxu0
      %1443 = vmatprep.mubr.f32.mxu0 0.0
      %1444 = vmatmul.mubr.f32.gmra.mxu0 %v1295
      %v1445 = vpop.f32.mrf.mxu0
      %v1446 = vadd.f32 0.0, %v1445
      %v1447 = vpop.f32.mrf.mxu0
      %1448 = vmatprep.mubr.f32.mxu0 0.0
      %1449 = vmatmul.mubr.f32.gmra.mxu0 %v1296
      %v1450 = vpop.f32.mrf.mxu0
      %v1451 = vadd.f32 0.0, %v1450
      %v1452 = vpop.f32.mrf.mxu0
      %1453 = vmatprep.mubr.f32.mxu0 0.0
      %1454 = vmatmul.mubr.f32.gmra.mxu0 %v1297
      %v1455 = vpop.f32.mrf.mxu0
      %v1456 = vadd.f32 0.0, %v1455
      %v1457 = vpop.f32.mrf.mxu0
      %1458 = vmatprep.mubr.f32.mxu0 0.0
      %1459 = vmatmul.mubr.f32.gmra.mxu0 %v1298
      %v1460 = vpop.f32.mrf.mxu0
      %v1461 = vadd.f32 0.0, %v1460
      %v1462 = vpop.f32.mrf.mxu0
      %1463 = vmatprep.mubr.f32.mxu0 0.0
      %1464 = vmatmul.mubr.f32.gmra.mxu0 %v1299
      %v1465 = vpop.f32.mrf.mxu0
      %v1466 = vadd.f32 0.0, %v1465
      %v1467 = vpop.f32.mrf.mxu0
      %1468 = vmatprep.mubr.f32.mxu0 0.0
      %1469 = vmatmul.mubr.f32.gmra.mxu0 %v1300
      %v1470 = vpop.f32.mrf.mxu0
      %v1471 = vadd.f32 0.0, %v1470
      %v1472 = vpop.f32.mrf.mxu0
      %1473 = vmatprep.mubr.f32.mxu0 0.0
      %1474 = vmatmul.mubr.f32.gmra.mxu0 %v1301
      %v1475 = vpop.f32.mrf.mxu0
      %v1476 = vadd.f32 0.0, %v1475
      %v1477 = vpop.f32.mrf.mxu0
      %1478 = vmatprep.mubr.f32.mxu0 0.0
      %1479 = vmatmul.mubr.f32.gmra.mxu0 %v1302
      %v1480 = vpop.f32.mrf.mxu0
      %v1481 = vadd.f32 0.0, %v1480
      %v1482 = vpop.f32.mrf.mxu0
      %1483 = vmatprep.mubr.f32.mxu0 0.0
      %1484 = vmatmul.mubr.f32.gmra.mxu0 %v1303
      %v1485 = vpop.f32.mrf.mxu0
      %v1486 = vadd.f32 0.0, %v1485
      %v1487 = vpop.f32.mrf.mxu0
      %1488 = vmatprep.mubr.f32.mxu0 0.0
      %1489 = vmatmul.mubr.f32.gmra.mxu0 %v1304
      %v1490 = vpop.f32.mrf.mxu0
      %v1491 = vadd.f32 0.0, %v1490
      %v1492 = vpop.f32.mrf.mxu0
      %1493 = vmatprep.mubr.f32.mxu0 0.0
      %1494 = vmatmul.mubr.f32.gmra.mxu0 %v1305
      %v1495 = vpop.f32.mrf.mxu0
      %v1496 = vadd.f32 0.0, %v1495
      %v1497 = vpop.f32.mrf.mxu0
      %1498 = vmatprep.mubr.f32.mxu0 0.0
      %1499 = vmatmul.mubr.f32.gmra.mxu0 %v1306
      %v1500 = vpop.f32.mrf.mxu0
      %v1501 = vadd.f32 0.0, %v1500
      %v1502 = vpop.f32.mrf.mxu0
      %1503 = vdwg.mxu0
      %v1504 = vadd.f32 %v1261, %v1391
      %v1505 = vadd.f32 %v1262, %v1396
      %v1506 = vadd.f32 %v1263, %v1401
      %v1507 = vadd.f32 %v1264, %v1406
      %v1508 = vadd.f32 %v1265, %v1411
      %v1509 = vadd.f32 %v1266, %v1416
      %v1510 = vadd.f32 %v1267, %v1421
      %v1511 = vadd.f32 %v1268, %v1426
      %v1512 = vadd.f32 %v1269, %v1431
      %v1513 = vadd.f32 %v1270, %v1436
      %v1514 = vadd.f32 %v1271, %v1441
      %v1515 = vadd.f32 %v1272, %v1446
      %v1516 = vadd.f32 %v1273, %v1451
      %v1517 = vadd.f32 %v1274, %v1456
      %v1518 = vadd.f32 %v1275, %v1461
      %v1519 = vadd.f32 %v1276, %v1466
      %v1520 = vadd.f32 %v1277, %v1471
      %v1521 = vadd.f32 %v1278, %v1476
      %v1522 = vadd.f32 %v1279, %v1481
      %v1523 = vadd.f32 %v1280, %v1486
      %v1524 = vadd.f32 %v1281, %v1491
      %v1525 = vadd.f32 %v1282, %v1496
      %v1526 = vadd.f32 %v1283, %v1501
      %v1527 = vld [vmem:[#allocation2 + $0x14] sm:$0xff]
      %v1528 = vld [vmem:[#allocation2 + $0x1c] sm:$0xff]
      %v1529 = vld [vmem:[#allocation2 + $0x24] sm:$0xff]
      %v1530 = vld [vmem:[#allocation2 + $0x2c] sm:$0xff]
      %v1531 = vld [vmem:[#allocation2 + $0x34] sm:$0xff]
      %v1532 = vld [vmem:[#allocation2 + $0x3c] sm:$0xff]
      %v1533 = vld [vmem:[#allocation2 + $0x44] sm:$0xff]
      %v1534 = vld [vmem:[#allocation2 + $0x4c] sm:$0xff]
      %v1535 = vld [vmem:[#allocation2 + $0x54] sm:$0xff]
      %v1536 = vld [vmem:[#allocation2 + $0x5c] sm:$0xff]
      %v1537 = vld [vmem:[#allocation2 + $0x64] sm:$0xff]
      %v1538 = vld [vmem:[#allocation2 + $0x6c] sm:$0xff]
      %v1539 = vld [vmem:[#allocation2 + $0x74] sm:$0xff]
      %v1540 = vld [vmem:[#allocation2 + $0x7c] sm:$0xff]
      %v1541 = vld [vmem:[#allocation2 + $0x84] sm:$0xff]
      %v1542 = vld [vmem:[#allocation2 + $0x8c] sm:$0xff]
      %v1543 = vld [vmem:[#allocation2 + $0x94] sm:$0xff]
      %v1544 = vld [vmem:[#allocation2 + $0x9c] sm:$0xff]
      %v1545 = vld [vmem:[#allocation2 + $0xa4] sm:$0xff]
      %v1546 = vld [vmem:[#allocation2 + $0xac] sm:$0xff]
      %v1547 = vld [vmem:[#allocation2 + $0xb4] sm:$0xff]
      %v1548 = vld [vmem:[#allocation2 + $0xbc] sm:$0xff]
      %v1549 = vld [vmem:[#allocation2 + $0xc4] sm:$0xf]
      %s1550 = scalar_lea.vmem %s1, 640
      %v1551 = vld [vmem:[%s1550] sm:$0xff]
      %v1552 = vld [vmem:[%s1550 + $0x8] sm:$0xff]
      %v1553 = vld [vmem:[%s1550 + $0x10] sm:$0xff]
      %v1554 = vld [vmem:[%s1550 + $0x18] sm:$0xff]
      %v1555 = vld [vmem:[%s1550 + $0x20] sm:$0xff]
      %v1556 = vld [vmem:[%s1550 + $0x28] sm:$0xff]
      %v1557 = vld [vmem:[%s1550 + $0x30] sm:$0xff]
      %v1558 = vld [vmem:[%s1550 + $0x38] sm:$0xff]
      %v1559 = vld [vmem:[%s1550 + $0x40] sm:$0xff]
      %v1560 = vld [vmem:[%s1550 + $0x48] sm:$0xff]
      %v1561 = vld [vmem:[%s1550 + $0x50] sm:$0xff]
      %v1562 = vld [vmem:[%s1550 + $0x58] sm:$0xff]
      %v1563 = vld [vmem:[%s1550 + $0x60] sm:$0xff]
      %v1564 = vld [vmem:[%s1550 + $0x68] sm:$0xff]
      %v1565 = vld [vmem:[%s1550 + $0x70] sm:$0xff]
      %v1566 = vld [vmem:[%s1550 + $0x78] sm:$0xff]
      %1567 = vmatprep.subr.mxu0 0.0
      %1568 = vmatpush1.msra.mxu0 %v1566
      %1569 = vmatprep.subr.mxu0 0.0
      %1570 = vmatpush1.msra.mxu0 %v1565
      %1571 = vmatprep.subr.mxu0 0.0
      %1572 = vmatpush1.msra.mxu0 %v1564
      %1573 = vmatprep.subr.mxu0 0.0
      %1574 = vmatpush1.msra.mxu0 %v1563
      %1575 = vmatprep.subr.mxu0 0.0
      %1576 = vmatpush1.msra.mxu0 %v1562
      %1577 = vmatprep.subr.mxu0 0.0
      %1578 = vmatpush1.msra.mxu0 %v1561
      %1579 = vmatprep.subr.mxu0 0.0
      %1580 = vmatpush1.msra.mxu0 %v1560
      %1581 = vmatprep.subr.mxu0 0.0
      %1582 = vmatpush1.msra.mxu0 %v1559
      %1583 = vmatprep.subr.mxu0 0.0
      %1584 = vmatpush1.msra.mxu0 %v1558
      %1585 = vmatprep.subr.mxu0 0.0
      %1586 = vmatpush1.msra.mxu0 %v1557
      %1587 = vmatprep.subr.mxu0 0.0
      %1588 = vmatpush1.msra.mxu0 %v1556
      %1589 = vmatprep.subr.mxu0 0.0
      %1590 = vmatpush1.msra.mxu0 %v1555
      %1591 = vmatprep.subr.mxu0 0.0
      %1592 = vmatpush1.msra.mxu0 %v1554
      %1593 = vmatprep.subr.mxu0 0.0
      %1594 = vmatpush1.msra.mxu0 %v1553
      %1595 = vmatprep.subr.mxu0 0.0
      %1596 = vmatpush1.msra.mxu0 %v1552
      %1597 = vmatprep.subr.mxu0 0.0
      %1598 = vmatpush1.msra.mxu0 %v1551
      %1599 = vmatprep.subr.mxu0 0.0
      %1600 = vmatpush2.msra.mxu0 0.0
      %1601 = vmatprep.subr.mxu0 0.0
      %1602 = vmatpush2.msra.mxu0 0.0
      %1603 = vmatprep.subr.mxu0 0.0
      %1604 = vmatpush2.msra.mxu0 0.0
      %1605 = vmatprep.subr.mxu0 0.0
      %1606 = vmatpush2.msra.mxu0 0.0
      %1607 = vmatprep.subr.mxu0 0.0
      %1608 = vmatpush2.msra.mxu0 0.0
      %1609 = vmatprep.subr.mxu0 0.0
      %1610 = vmatpush2.msra.mxu0 0.0
      %1611 = vmatprep.subr.mxu0 0.0
      %1612 = vmatpush2.msra.mxu0 0.0
      %1613 = vmatprep.subr.mxu0 0.0
      %1614 = vmatpush2.msra.mxu0 0.0
      %1615 = vmatprep.subr.mxu0 0.0
      %1616 = vmatpush2.msra.mxu0 0.0
      %1617 = vmatprep.subr.mxu0 0.0
      %1618 = vmatpush2.msra.mxu0 0.0
      %1619 = vmatprep.subr.mxu0 0.0
      %1620 = vmatpush2.msra.mxu0 0.0
      %1621 = vmatprep.subr.mxu0 0.0
      %1622 = vmatpush2.msra.mxu0 0.0
      %1623 = vmatprep.subr.mxu0 0.0
      %1624 = vmatpush2.msra.mxu0 0.0
      %1625 = vmatprep.subr.mxu0 0.0
      %1626 = vmatpush2.msra.mxu0 0.0
      %1627 = vmatprep.subr.mxu0 0.0
      %1628 = vmatpush2.msra.mxu0 0.0
      %1629 = vmatprep.subr.mxu0 0.0
      %1630 = vmatpush2.msra.mxu0 0.0
      %1631 = vmatprep.mubr.f32.mxu0 0.0
      %1632 = vmatmul.mubr.f32.gmra.mxu0 %v1527
      %v1633 = vpop.f32.mrf.mxu0
      %v1634 = vadd.f32 0.0, %v1633
      %v1635 = vpop.f32.mrf.mxu0
      %1636 = vmatprep.mubr.f32.mxu0 0.0
      %1637 = vmatmul.mubr.f32.gmra.mxu0 %v1528
      %v1638 = vpop.f32.mrf.mxu0
      %v1639 = vadd.f32 0.0, %v1638
      %v1640 = vpop.f32.mrf.mxu0
      %1641 = vmatprep.mubr.f32.mxu0 0.0
      %1642 = vmatmul.mubr.f32.gmra.mxu0 %v1529
      %v1643 = vpop.f32.mrf.mxu0
      %v1644 = vadd.f32 0.0, %v1643
      %v1645 = vpop.f32.mrf.mxu0
      %1646 = vmatprep.mubr.f32.mxu0 0.0
      %1647 = vmatmul.mubr.f32.gmra.mxu0 %v1530
      %v1648 = vpop.f32.mrf.mxu0
      %v1649 = vadd.f32 0.0, %v1648
      %v1650 = vpop.f32.mrf.mxu0
      %1651 = vmatprep.mubr.f32.mxu0 0.0
      %1652 = vmatmul.mubr.f32.gmra.mxu0 %v1531
      %v1653 = vpop.f32.mrf.mxu0
      %v1654 = vadd.f32 0.0, %v1653
      %v1655 = vpop.f32.mrf.mxu0
      %1656 = vmatprep.mubr.f32.mxu0 0.0
      %1657 = vmatmul.mubr.f32.gmra.mxu0 %v1532
      %v1658 = vpop.f32.mrf.mxu0
      %v1659 = vadd.f32 0.0, %v1658
      %v1660 = vpop.f32.mrf.mxu0
      %1661 = vmatprep.mubr.f32.mxu0 0.0
      %1662 = vmatmul.mubr.f32.gmra.mxu0 %v1533
      %v1663 = vpop.f32.mrf.mxu0
      %v1664 = vadd.f32 0.0, %v1663
      %v1665 = vpop.f32.mrf.mxu0
      %1666 = vmatprep.mubr.f32.mxu0 0.0
      %1667 = vmatmul.mubr.f32.gmra.mxu0 %v1534
      %v1668 = vpop.f32.mrf.mxu0
      %v1669 = vadd.f32 0.0, %v1668
      %v1670 = vpop.f32.mrf.mxu0
      %1671 = vmatprep.mubr.f32.mxu0 0.0
      %1672 = vmatmul.mubr.f32.gmra.mxu0 %v1535
      %v1673 = vpop.f32.mrf.mxu0
      %v1674 = vadd.f32 0.0, %v1673
      %v1675 = vpop.f32.mrf.mxu0
      %1676 = vmatprep.mubr.f32.mxu0 0.0
      %1677 = vmatmul.mubr.f32.gmra.mxu0 %v1536
      %v1678 = vpop.f32.mrf.mxu0
      %v1679 = vadd.f32 0.0, %v1678
      %v1680 = vpop.f32.mrf.mxu0
      %1681 = vmatprep.mubr.f32.mxu0 0.0
      %1682 = vmatmul.mubr.f32.gmra.mxu0 %v1537
      %v1683 = vpop.f32.mrf.mxu0
      %v1684 = vadd.f32 0.0, %v1683
      %v1685 = vpop.f32.mrf.mxu0
      %1686 = vmatprep.mubr.f32.mxu0 0.0
      %1687 = vmatmul.mubr.f32.gmra.mxu0 %v1538
      %v1688 = vpop.f32.mrf.mxu0
      %v1689 = vadd.f32 0.0, %v1688
      %v1690 = vpop.f32.mrf.mxu0
      %1691 = vmatprep.mubr.f32.mxu0 0.0
      %1692 = vmatmul.mubr.f32.gmra.mxu0 %v1539
      %v1693 = vpop.f32.mrf.mxu0
      %v1694 = vadd.f32 0.0, %v1693
      %v1695 = vpop.f32.mrf.mxu0
      %1696 = vmatprep.mubr.f32.mxu0 0.0
      %1697 = vmatmul.mubr.f32.gmra.mxu0 %v1540
      %v1698 = vpop.f32.mrf.mxu0
      %v1699 = vadd.f32 0.0, %v1698
      %v1700 = vpop.f32.mrf.mxu0
      %1701 = vmatprep.mubr.f32.mxu0 0.0
      %1702 = vmatmul.mubr.f32.gmra.mxu0 %v1541
      %v1703 = vpop.f32.mrf.mxu0
      %v1704 = vadd.f32 0.0, %v1703
      %v1705 = vpop.f32.mrf.mxu0
      %1706 = vmatprep.mubr.f32.mxu0 0.0
      %1707 = vmatmul.mubr.f32.gmra.mxu0 %v1542
      %v1708 = vpop.f32.mrf.mxu0
      %v1709 = vadd.f32 0.0, %v1708
      %v1710 = vpop.f32.mrf.mxu0
      %1711 = vmatprep.mubr.f32.mxu0 0.0
      %1712 = vmatmul.mubr.f32.gmra.mxu0 %v1543
      %v1713 = vpop.f32.mrf.mxu0
      %v1714 = vadd.f32 0.0, %v1713
      %v1715 = vpop.f32.mrf.mxu0
      %1716 = vmatprep.mubr.f32.mxu0 0.0
      %1717 = vmatmul.mubr.f32.gmra.mxu0 %v1544
      %v1718 = vpop.f32.mrf.mxu0
      %v1719 = vadd.f32 0.0, %v1718
      %v1720 = vpop.f32.mrf.mxu0
      %1721 = vmatprep.mubr.f32.mxu0 0.0
      %1722 = vmatmul.mubr.f32.gmra.mxu0 %v1545
      %v1723 = vpop.f32.mrf.mxu0
      %v1724 = vadd.f32 0.0, %v1723
      %v1725 = vpop.f32.mrf.mxu0
      %1726 = vmatprep.mubr.f32.mxu0 0.0
      %1727 = vmatmul.mubr.f32.gmra.mxu0 %v1546
      %v1728 = vpop.f32.mrf.mxu0
      %v1729 = vadd.f32 0.0, %v1728
      %v1730 = vpop.f32.mrf.mxu0
      %1731 = vmatprep.mubr.f32.mxu0 0.0
      %1732 = vmatmul.mubr.f32.gmra.mxu0 %v1547
      %v1733 = vpop.f32.mrf.mxu0
      %v1734 = vadd.f32 0.0, %v1733
      %v1735 = vpop.f32.mrf.mxu0
      %1736 = vmatprep.mubr.f32.mxu0 0.0
      %1737 = vmatmul.mubr.f32.gmra.mxu0 %v1548
      %v1738 = vpop.f32.mrf.mxu0
      %v1739 = vadd.f32 0.0, %v1738
      %v1740 = vpop.f32.mrf.mxu0
      %1741 = vmatprep.mubr.f32.mxu0 0.0
      %1742 = vmatmul.mubr.f32.gmra.mxu0 %v1549
      %v1743 = vpop.f32.mrf.mxu0
      %v1744 = vadd.f32 0.0, %v1743
      %v1745 = vpop.f32.mrf.mxu0
      %1746 = vdwg.mxu0
      %v1747 = vadd.f32 %v1504, %v1634
      %v1748 = vadd.f32 %v1505, %v1639
      %v1749 = vadd.f32 %v1506, %v1644
      %v1750 = vadd.f32 %v1507, %v1649
      %v1751 = vadd.f32 %v1508, %v1654
      %v1752 = vadd.f32 %v1509, %v1659
      %v1753 = vadd.f32 %v1510, %v1664
      %v1754 = vadd.f32 %v1511, %v1669
      %v1755 = vadd.f32 %v1512, %v1674
      %v1756 = vadd.f32 %v1513, %v1679
      %v1757 = vadd.f32 %v1514, %v1684
      %v1758 = vadd.f32 %v1515, %v1689
      %v1759 = vadd.f32 %v1516, %v1694
      %v1760 = vadd.f32 %v1517, %v1699
      %v1761 = vadd.f32 %v1518, %v1704
      %v1762 = vadd.f32 %v1519, %v1709
      %v1763 = vadd.f32 %v1520, %v1714
      %v1764 = vadd.f32 %v1521, %v1719
      %v1765 = vadd.f32 %v1522, %v1724
      %v1766 = vadd.f32 %v1523, %v1729
      %v1767 = vadd.f32 %v1524, %v1734
      %v1768 = vadd.f32 %v1525, %v1739
      %v1769 = vadd.f32 %v1526, %v1744
      %v1770 = vld [vmem:[#allocation2 + $0x24] sm:$0xff]
      %v1771 = vld [vmem:[#allocation2 + $0x2c] sm:$0xff]
      %v1772 = vld [vmem:[#allocation2 + $0x34] sm:$0xff]
      %v1773 = vld [vmem:[#allocation2 + $0x3c] sm:$0xff]
      %v1774 = vld [vmem:[#allocation2 + $0x44] sm:$0xff]
      %v1775 = vld [vmem:[#allocation2 + $0x4c] sm:$0xff]
      %v1776 = vld [vmem:[#allocation2 + $0x54] sm:$0xff]
      %v1777 = vld [vmem:[#allocation2 + $0x5c] sm:$0xff]
      %v1778 = vld [vmem:[#allocation2 + $0x64] sm:$0xff]
      %v1779 = vld [vmem:[#allocation2 + $0x6c] sm:$0xff]
      %v1780 = vld [vmem:[#allocation2 + $0x74] sm:$0xff]
      %v1781 = vld [vmem:[#allocation2 + $0x7c] sm:$0xff]
      %v1782 = vld [vmem:[#allocation2 + $0x84] sm:$0xff]
      %v1783 = vld [vmem:[#allocation2 + $0x8c] sm:$0xff]
      %v1784 = vld [vmem:[#allocation2 + $0x94] sm:$0xff]
      %v1785 = vld [vmem:[#allocation2 + $0x9c] sm:$0xff]
      %v1786 = vld [vmem:[#allocation2 + $0xa4] sm:$0xff]
      %v1787 = vld [vmem:[#allocation2 + $0xac] sm:$0xff]
      %v1788 = vld [vmem:[#allocation2 + $0xb4] sm:$0xff]
      %v1789 = vld [vmem:[#allocation2 + $0xbc] sm:$0xff]
      %v1790 = vld [vmem:[#allocation2 + $0xc4] sm:$0xff]
      %v1791 = vld [vmem:[#allocation2 + $0xcc] sm:$0xff]
      %v1792 = vld [vmem:[#allocation2 + $0xd4] sm:$0xf]
      %s1793 = scalar_lea.vmem %s1, 768
      %v1794 = vld [vmem:[%s1793] sm:$0xff]
      %v1795 = vld [vmem:[%s1793 + $0x8] sm:$0xff]
      %v1796 = vld [vmem:[%s1793 + $0x10] sm:$0xff]
      %v1797 = vld [vmem:[%s1793 + $0x18] sm:$0xff]
      %v1798 = vld [vmem:[%s1793 + $0x20] sm:$0xff]
      %v1799 = vld [vmem:[%s1793 + $0x28] sm:$0xff]
      %v1800 = vld [vmem:[%s1793 + $0x30] sm:$0xff]
      %v1801 = vld [vmem:[%s1793 + $0x38] sm:$0xff]
      %v1802 = vld [vmem:[%s1793 + $0x40] sm:$0xff]
      %v1803 = vld [vmem:[%s1793 + $0x48] sm:$0xff]
      %v1804 = vld [vmem:[%s1793 + $0x50] sm:$0xff]
      %v1805 = vld [vmem:[%s1793 + $0x58] sm:$0xff]
      %v1806 = vld [vmem:[%s1793 + $0x60] sm:$0xff]
      %v1807 = vld [vmem:[%s1793 + $0x68] sm:$0xff]
      %v1808 = vld [vmem:[%s1793 + $0x70] sm:$0xff]
      %v1809 = vld [vmem:[%s1793 + $0x78] sm:$0xff]
      %1810 = vmatprep.subr.mxu0 0.0
      %1811 = vmatpush1.msra.mxu0 %v1809
      %1812 = vmatprep.subr.mxu0 0.0
      %1813 = vmatpush1.msra.mxu0 %v1808
      %1814 = vmatprep.subr.mxu0 0.0
      %1815 = vmatpush1.msra.mxu0 %v1807
      %1816 = vmatprep.subr.mxu0 0.0
      %1817 = vmatpush1.msra.mxu0 %v1806
      %1818 = vmatprep.subr.mxu0 0.0
      %1819 = vmatpush1.msra.mxu0 %v1805
      %1820 = vmatprep.subr.mxu0 0.0
      %1821 = vmatpush1.msra.mxu0 %v1804
      %1822 = vmatprep.subr.mxu0 0.0
      %1823 = vmatpush1.msra.mxu0 %v1803
      %1824 = vmatprep.subr.mxu0 0.0
      %1825 = vmatpush1.msra.mxu0 %v1802
      %1826 = vmatprep.subr.mxu0 0.0
      %1827 = vmatpush1.msra.mxu0 %v1801
      %1828 = vmatprep.subr.mxu0 0.0
      %1829 = vmatpush1.msra.mxu0 %v1800
      %1830 = vmatprep.subr.mxu0 0.0
      %1831 = vmatpush1.msra.mxu0 %v1799
      %1832 = vmatprep.subr.mxu0 0.0
      %1833 = vmatpush1.msra.mxu0 %v1798
      %1834 = vmatprep.subr.mxu0 0.0
      %1835 = vmatpush1.msra.mxu0 %v1797
      %1836 = vmatprep.subr.mxu0 0.0
      %1837 = vmatpush1.msra.mxu0 %v1796
      %1838 = vmatprep.subr.mxu0 0.0
      %1839 = vmatpush1.msra.mxu0 %v1795
      %1840 = vmatprep.subr.mxu0 0.0
      %1841 = vmatpush1.msra.mxu0 %v1794
      %1842 = vmatprep.subr.mxu0 0.0
      %1843 = vmatpush2.msra.mxu0 0.0
      %1844 = vmatprep.subr.mxu0 0.0
      %1845 = vmatpush2.msra.mxu0 0.0
      %1846 = vmatprep.subr.mxu0 0.0
      %1847 = vmatpush2.msra.mxu0 0.0
      %1848 = vmatprep.subr.mxu0 0.0
      %1849 = vmatpush2.msra.mxu0 0.0
      %1850 = vmatprep.subr.mxu0 0.0
      %1851 = vmatpush2.msra.mxu0 0.0
      %1852 = vmatprep.subr.mxu0 0.0
      %1853 = vmatpush2.msra.mxu0 0.0
      %1854 = vmatprep.subr.mxu0 0.0
      %1855 = vmatpush2.msra.mxu0 0.0
      %1856 = vmatprep.subr.mxu0 0.0
      %1857 = vmatpush2.msra.mxu0 0.0
      %1858 = vmatprep.subr.mxu0 0.0
      %1859 = vmatpush2.msra.mxu0 0.0
      %1860 = vmatprep.subr.mxu0 0.0
      %1861 = vmatpush2.msra.mxu0 0.0
      %1862 = vmatprep.subr.mxu0 0.0
      %1863 = vmatpush2.msra.mxu0 0.0
      %1864 = vmatprep.subr.mxu0 0.0
      %1865 = vmatpush2.msra.mxu0 0.0
      %1866 = vmatprep.subr.mxu0 0.0
      %1867 = vmatpush2.msra.mxu0 0.0
      %1868 = vmatprep.subr.mxu0 0.0
      %1869 = vmatpush2.msra.mxu0 0.0
      %1870 = vmatprep.subr.mxu0 0.0
      %1871 = vmatpush2.msra.mxu0 0.0
      %1872 = vmatprep.subr.mxu0 0.0
      %1873 = vmatpush2.msra.mxu0 0.0
      %1874 = vmatprep.mubr.f32.mxu0 0.0
      %1875 = vmatmul.mubr.f32.gmra.mxu0 %v1770
      %v1876 = vpop.f32.mrf.mxu0
      %v1877 = vadd.f32 0.0, %v1876
      %v1878 = vpop.f32.mrf.mxu0
      %1879 = vmatprep.mubr.f32.mxu0 0.0
      %1880 = vmatmul.mubr.f32.gmra.mxu0 %v1771
      %v1881 = vpop.f32.mrf.mxu0
      %v1882 = vadd.f32 0.0, %v1881
      %v1883 = vpop.f32.mrf.mxu0
      %1884 = vmatprep.mubr.f32.mxu0 0.0
      %1885 = vmatmul.mubr.f32.gmra.mxu0 %v1772
      %v1886 = vpop.f32.mrf.mxu0
      %v1887 = vadd.f32 0.0, %v1886
      %v1888 = vpop.f32.mrf.mxu0
      %1889 = vmatprep.mubr.f32.mxu0 0.0
      %1890 = vmatmul.mubr.f32.gmra.mxu0 %v1773
      %v1891 = vpop.f32.mrf.mxu0
      %v1892 = vadd.f32 0.0, %v1891
      %v1893 = vpop.f32.mrf.mxu0
      %1894 = vmatprep.mubr.f32.mxu0 0.0
      %1895 = vmatmul.mubr.f32.gmra.mxu0 %v1774
      %v1896 = vpop.f32.mrf.mxu0
      %v1897 = vadd.f32 0.0, %v1896
      %v1898 = vpop.f32.mrf.mxu0
      %1899 = vmatprep.mubr.f32.mxu0 0.0
      %1900 = vmatmul.mubr.f32.gmra.mxu0 %v1775
      %v1901 = vpop.f32.mrf.mxu0
      %v1902 = vadd.f32 0.0, %v1901
      %v1903 = vpop.f32.mrf.mxu0
      %1904 = vmatprep.mubr.f32.mxu0 0.0
      %1905 = vmatmul.mubr.f32.gmra.mxu0 %v1776
      %v1906 = vpop.f32.mrf.mxu0
      %v1907 = vadd.f32 0.0, %v1906
      %v1908 = vpop.f32.mrf.mxu0
      %1909 = vmatprep.mubr.f32.mxu0 0.0
      %1910 = vmatmul.mubr.f32.gmra.mxu0 %v1777
      %v1911 = vpop.f32.mrf.mxu0
      %v1912 = vadd.f32 0.0, %v1911
      %v1913 = vpop.f32.mrf.mxu0
      %1914 = vmatprep.mubr.f32.mxu0 0.0
      %1915 = vmatmul.mubr.f32.gmra.mxu0 %v1778
      %v1916 = vpop.f32.mrf.mxu0
      %v1917 = vadd.f32 0.0, %v1916
      %v1918 = vpop.f32.mrf.mxu0
      %1919 = vmatprep.mubr.f32.mxu0 0.0
      %1920 = vmatmul.mubr.f32.gmra.mxu0 %v1779
      %v1921 = vpop.f32.mrf.mxu0
      %v1922 = vadd.f32 0.0, %v1921
      %v1923 = vpop.f32.mrf.mxu0
      %1924 = vmatprep.mubr.f32.mxu0 0.0
      %1925 = vmatmul.mubr.f32.gmra.mxu0 %v1780
      %v1926 = vpop.f32.mrf.mxu0
      %v1927 = vadd.f32 0.0, %v1926
      %v1928 = vpop.f32.mrf.mxu0
      %1929 = vmatprep.mubr.f32.mxu0 0.0
      %1930 = vmatmul.mubr.f32.gmra.mxu0 %v1781
      %v1931 = vpop.f32.mrf.mxu0
      %v1932 = vadd.f32 0.0, %v1931
      %v1933 = vpop.f32.mrf.mxu0
      %1934 = vmatprep.mubr.f32.mxu0 0.0
      %1935 = vmatmul.mubr.f32.gmra.mxu0 %v1782
      %v1936 = vpop.f32.mrf.mxu0
      %v1937 = vadd.f32 0.0, %v1936
      %v1938 = vpop.f32.mrf.mxu0
      %1939 = vmatprep.mubr.f32.mxu0 0.0
      %1940 = vmatmul.mubr.f32.gmra.mxu0 %v1783
      %v1941 = vpop.f32.mrf.mxu0
      %v1942 = vadd.f32 0.0, %v1941
      %v1943 = vpop.f32.mrf.mxu0
      %1944 = vmatprep.mubr.f32.mxu0 0.0
      %1945 = vmatmul.mubr.f32.gmra.mxu0 %v1784
      %v1946 = vpop.f32.mrf.mxu0
      %v1947 = vadd.f32 0.0, %v1946
      %v1948 = vpop.f32.mrf.mxu0
      %1949 = vmatprep.mubr.f32.mxu0 0.0
      %1950 = vmatmul.mubr.f32.gmra.mxu0 %v1785
      %v1951 = vpop.f32.mrf.mxu0
      %v1952 = vadd.f32 0.0, %v1951
      %v1953 = vpop.f32.mrf.mxu0
      %1954 = vmatprep.mubr.f32.mxu0 0.0
      %1955 = vmatmul.mubr.f32.gmra.mxu0 %v1786
      %v1956 = vpop.f32.mrf.mxu0
      %v1957 = vadd.f32 0.0, %v1956
      %v1958 = vpop.f32.mrf.mxu0
      %1959 = vmatprep.mubr.f32.mxu0 0.0
      %1960 = vmatmul.mubr.f32.gmra.mxu0 %v1787
      %v1961 = vpop.f32.mrf.mxu0
      %v1962 = vadd.f32 0.0, %v1961
      %v1963 = vpop.f32.mrf.mxu0
      %1964 = vmatprep.mubr.f32.mxu0 0.0
      %1965 = vmatmul.mubr.f32.gmra.mxu0 %v1788
      %v1966 = vpop.f32.mrf.mxu0
      %v1967 = vadd.f32 0.0, %v1966
      %v1968 = vpop.f32.mrf.mxu0
      %1969 = vmatprep.mubr.f32.mxu0 0.0
      %1970 = vmatmul.mubr.f32.gmra.mxu0 %v1789
      %v1971 = vpop.f32.mrf.mxu0
      %v1972 = vadd.f32 0.0, %v1971
      %v1973 = vpop.f32.mrf.mxu0
      %1974 = vmatprep.mubr.f32.mxu0 0.0
      %1975 = vmatmul.mubr.f32.gmra.mxu0 %v1790
      %v1976 = vpop.f32.mrf.mxu0
      %v1977 = vadd.f32 0.0, %v1976
      %v1978 = vpop.f32.mrf.mxu0
      %1979 = vmatprep.mubr.f32.mxu0 0.0
      %1980 = vmatmul.mubr.f32.gmra.mxu0 %v1791
      %v1981 = vpop.f32.mrf.mxu0
      %v1982 = vadd.f32 0.0, %v1981
      %v1983 = vpop.f32.mrf.mxu0
      %1984 = vmatprep.mubr.f32.mxu0 0.0
      %1985 = vmatmul.mubr.f32.gmra.mxu0 %v1792
      %v1986 = vpop.f32.mrf.mxu0
      %v1987 = vadd.f32 0.0, %v1986
      %v1988 = vpop.f32.mrf.mxu0
      %1989 = vdwg.mxu0
      %v1990 = vadd.f32 %v1747, %v1877
      %v1991 = vadd.f32 %v1748, %v1882
      %v1992 = vadd.f32 %v1749, %v1887
      %v1993 = vadd.f32 %v1750, %v1892
      %v1994 = vadd.f32 %v1751, %v1897
      %v1995 = vadd.f32 %v1752, %v1902
      %v1996 = vadd.f32 %v1753, %v1907
      %v1997 = vadd.f32 %v1754, %v1912
      %v1998 = vadd.f32 %v1755, %v1917
      %v1999 = vadd.f32 %v1756, %v1922
      %v2000 = vadd.f32 %v1757, %v1927
      %v2001 = vadd.f32 %v1758, %v1932
      %v2002 = vadd.f32 %v1759, %v1937
      %v2003 = vadd.f32 %v1760, %v1942
      %v2004 = vadd.f32 %v1761, %v1947
      %v2005 = vadd.f32 %v1762, %v1952
      %v2006 = vadd.f32 %v1763, %v1957
      %v2007 = vadd.f32 %v1764, %v1962
      %v2008 = vadd.f32 %v1765, %v1967
      %v2009 = vadd.f32 %v1766, %v1972
      %v2010 = vadd.f32 %v1767, %v1977
      %v2011 = vadd.f32 %v1768, %v1982
      %v2012 = vadd.f32 %v1769, %v1987
      %v2013 = vld [vmem:[#allocation2 + $0x25] sm:$0xff]
      %v2014 = vld [vmem:[#allocation2 + $0x2d] sm:$0xff]
      %v2015 = vld [vmem:[#allocation2 + $0x35] sm:$0xff]
      %v2016 = vld [vmem:[#allocation2 + $0x3d] sm:$0xff]
      %v2017 = vld [vmem:[#allocation2 + $0x45] sm:$0xff]
      %v2018 = vld [vmem:[#allocation2 + $0x4d] sm:$0xff]
      %v2019 = vld [vmem:[#allocation2 + $0x55] sm:$0xff]
      %v2020 = vld [vmem:[#allocation2 + $0x5d] sm:$0xff]
      %v2021 = vld [vmem:[#allocation2 + $0x65] sm:$0xff]
      %v2022 = vld [vmem:[#allocation2 + $0x6d] sm:$0xff]
      %v2023 = vld [vmem:[#allocation2 + $0x75] sm:$0xff]
      %v2024 = vld [vmem:[#allocation2 + $0x7d] sm:$0xff]
      %v2025 = vld [vmem:[#allocation2 + $0x85] sm:$0xff]
      %v2026 = vld [vmem:[#allocation2 + $0x8d] sm:$0xff]
      %v2027 = vld [vmem:[#allocation2 + $0x95] sm:$0xff]
      %v2028 = vld [vmem:[#allocation2 + $0x9d] sm:$0xff]
      %v2029 = vld [vmem:[#allocation2 + $0xa5] sm:$0xff]
      %v2030 = vld [vmem:[#allocation2 + $0xad] sm:$0xff]
      %v2031 = vld [vmem:[#allocation2 + $0xb5] sm:$0xff]
      %v2032 = vld [vmem:[#allocation2 + $0xbd] sm:$0xff]
      %v2033 = vld [vmem:[#allocation2 + $0xc5] sm:$0xff]
      %v2034 = vld [vmem:[#allocation2 + $0xcd] sm:$0xff]
      %v2035 = vld [vmem:[#allocation2 + $0xd5] sm:$0xf]
      %s2036 = scalar_lea.vmem %s1, 896
      %v2037 = vld [vmem:[%s2036] sm:$0xff]
      %v2038 = vld [vmem:[%s2036 + $0x8] sm:$0xff]
      %v2039 = vld [vmem:[%s2036 + $0x10] sm:$0xff]
      %v2040 = vld [vmem:[%s2036 + $0x18] sm:$0xff]
      %v2041 = vld [vmem:[%s2036 + $0x20] sm:$0xff]
      %v2042 = vld [vmem:[%s2036 + $0x28] sm:$0xff]
      %v2043 = vld [vmem:[%s2036 + $0x30] sm:$0xff]
      %v2044 = vld [vmem:[%s2036 + $0x38] sm:$0xff]
      %v2045 = vld [vmem:[%s2036 + $0x40] sm:$0xff]
      %v2046 = vld [vmem:[%s2036 + $0x48] sm:$0xff]
      %v2047 = vld [vmem:[%s2036 + $0x50] sm:$0xff]
      %v2048 = vld [vmem:[%s2036 + $0x58] sm:$0xff]
      %v2049 = vld [vmem:[%s2036 + $0x60] sm:$0xff]
      %v2050 = vld [vmem:[%s2036 + $0x68] sm:$0xff]
      %v2051 = vld [vmem:[%s2036 + $0x70] sm:$0xff]
      %v2052 = vld [vmem:[%s2036 + $0x78] sm:$0xff]
      %2053 = vmatprep.subr.mxu0 0.0
      %2054 = vmatpush1.msra.mxu0 %v2052
      %2055 = vmatprep.subr.mxu0 0.0
      %2056 = vmatpush1.msra.mxu0 %v2051
      %2057 = vmatprep.subr.mxu0 0.0
      %2058 = vmatpush1.msra.mxu0 %v2050
      %2059 = vmatprep.subr.mxu0 0.0
      %2060 = vmatpush1.msra.mxu0 %v2049
      %2061 = vmatprep.subr.mxu0 0.0
      %2062 = vmatpush1.msra.mxu0 %v2048
      %2063 = vmatprep.subr.mxu0 0.0
      %2064 = vmatpush1.msra.mxu0 %v2047
      %2065 = vmatprep.subr.mxu0 0.0
      %2066 = vmatpush1.msra.mxu0 %v2046
      %2067 = vmatprep.subr.mxu0 0.0
      %2068 = vmatpush1.msra.mxu0 %v2045
      %2069 = vmatprep.subr.mxu0 0.0
      %2070 = vmatpush1.msra.mxu0 %v2044
      %2071 = vmatprep.subr.mxu0 0.0
      %2072 = vmatpush1.msra.mxu0 %v2043
      %2073 = vmatprep.subr.mxu0 0.0
      %2074 = vmatpush1.msra.mxu0 %v2042
      %2075 = vmatprep.subr.mxu0 0.0
      %2076 = vmatpush1.msra.mxu0 %v2041
      %2077 = vmatprep.subr.mxu0 0.0
      %2078 = vmatpush1.msra.mxu0 %v2040
      %2079 = vmatprep.subr.mxu0 0.0
      %2080 = vmatpush1.msra.mxu0 %v2039
      %2081 = vmatprep.subr.mxu0 0.0
      %2082 = vmatpush1.msra.mxu0 %v2038
      %2083 = vmatprep.subr.mxu0 0.0
      %2084 = vmatpush1.msra.mxu0 %v2037
      %2085 = vmatprep.subr.mxu0 0.0
      %2086 = vmatpush2.msra.mxu0 0.0
      %2087 = vmatprep.subr.mxu0 0.0
      %2088 = vmatpush2.msra.mxu0 0.0
      %2089 = vmatprep.subr.mxu0 0.0
      %2090 = vmatpush2.msra.mxu0 0.0
      %2091 = vmatprep.subr.mxu0 0.0
      %2092 = vmatpush2.msra.mxu0 0.0
      %2093 = vmatprep.subr.mxu0 0.0
      %2094 = vmatpush2.msra.mxu0 0.0
      %2095 = vmatprep.subr.mxu0 0.0
      %2096 = vmatpush2.msra.mxu0 0.0
      %2097 = vmatprep.subr.mxu0 0.0
      %2098 = vmatpush2.msra.mxu0 0.0
      %2099 = vmatprep.subr.mxu0 0.0
      %2100 = vmatpush2.msra.mxu0 0.0
      %2101 = vmatprep.subr.mxu0 0.0
      %2102 = vmatpush2.msra.mxu0 0.0
      %2103 = vmatprep.subr.mxu0 0.0
      %2104 = vmatpush2.msra.mxu0 0.0
      %2105 = vmatprep.subr.mxu0 0.0
      %2106 = vmatpush2.msra.mxu0 0.0
      %2107 = vmatprep.subr.mxu0 0.0
      %2108 = vmatpush2.msra.mxu0 0.0
      %2109 = vmatprep.subr.mxu0 0.0
      %2110 = vmatpush2.msra.mxu0 0.0
      %2111 = vmatprep.subr.mxu0 0.0
      %2112 = vmatpush2.msra.mxu0 0.0
      %2113 = vmatprep.subr.mxu0 0.0
      %2114 = vmatpush2.msra.mxu0 0.0
      %2115 = vmatprep.subr.mxu0 0.0
      %2116 = vmatpush2.msra.mxu0 0.0
      %2117 = vmatprep.mubr.f32.mxu0 0.0
      %2118 = vmatmul.mubr.f32.gmra.mxu0 %v2013
      %v2119 = vpop.f32.mrf.mxu0
      %v2120 = vadd.f32 0.0, %v2119
      %v2121 = vpop.f32.mrf.mxu0
      %2122 = vmatprep.mubr.f32.mxu0 0.0
      %2123 = vmatmul.mubr.f32.gmra.mxu0 %v2014
      %v2124 = vpop.f32.mrf.mxu0
      %v2125 = vadd.f32 0.0, %v2124
      %v2126 = vpop.f32.mrf.mxu0
      %2127 = vmatprep.mubr.f32.mxu0 0.0
      %2128 = vmatmul.mubr.f32.gmra.mxu0 %v2015
      %v2129 = vpop.f32.mrf.mxu0
      %v2130 = vadd.f32 0.0, %v2129
      %v2131 = vpop.f32.mrf.mxu0
      %2132 = vmatprep.mubr.f32.mxu0 0.0
      %2133 = vmatmul.mubr.f32.gmra.mxu0 %v2016
      %v2134 = vpop.f32.mrf.mxu0
      %v2135 = vadd.f32 0.0, %v2134
      %v2136 = vpop.f32.mrf.mxu0
      %2137 = vmatprep.mubr.f32.mxu0 0.0
      %2138 = vmatmul.mubr.f32.gmra.mxu0 %v2017
      %v2139 = vpop.f32.mrf.mxu0
      %v2140 = vadd.f32 0.0, %v2139
      %v2141 = vpop.f32.mrf.mxu0
      %2142 = vmatprep.mubr.f32.mxu0 0.0
      %2143 = vmatmul.mubr.f32.gmra.mxu0 %v2018
      %v2144 = vpop.f32.mrf.mxu0
      %v2145 = vadd.f32 0.0, %v2144
      %v2146 = vpop.f32.mrf.mxu0
      %2147 = vmatprep.mubr.f32.mxu0 0.0
      %2148 = vmatmul.mubr.f32.gmra.mxu0 %v2019
      %v2149 = vpop.f32.mrf.mxu0
      %v2150 = vadd.f32 0.0, %v2149
      %v2151 = vpop.f32.mrf.mxu0
      %2152 = vmatprep.mubr.f32.mxu0 0.0
      %2153 = vmatmul.mubr.f32.gmra.mxu0 %v2020
      %v2154 = vpop.f32.mrf.mxu0
      %v2155 = vadd.f32 0.0, %v2154
      %v2156 = vpop.f32.mrf.mxu0
      %2157 = vmatprep.mubr.f32.mxu0 0.0
      %2158 = vmatmul.mubr.f32.gmra.mxu0 %v2021
      %v2159 = vpop.f32.mrf.mxu0
      %v2160 = vadd.f32 0.0, %v2159
      %v2161 = vpop.f32.mrf.mxu0
      %2162 = vmatprep.mubr.f32.mxu0 0.0
      %2163 = vmatmul.mubr.f32.gmra.mxu0 %v2022
      %v2164 = vpop.f32.mrf.mxu0
      %v2165 = vadd.f32 0.0, %v2164
      %v2166 = vpop.f32.mrf.mxu0
      %2167 = vmatprep.mubr.f32.mxu0 0.0
      %2168 = vmatmul.mubr.f32.gmra.mxu0 %v2023
      %v2169 = vpop.f32.mrf.mxu0
      %v2170 = vadd.f32 0.0, %v2169
      %v2171 = vpop.f32.mrf.mxu0
      %2172 = vmatprep.mubr.f32.mxu0 0.0
      %2173 = vmatmul.mubr.f32.gmra.mxu0 %v2024
      %v2174 = vpop.f32.mrf.mxu0
      %v2175 = vadd.f32 0.0, %v2174
      %v2176 = vpop.f32.mrf.mxu0
      %2177 = vmatprep.mubr.f32.mxu0 0.0
      %2178 = vmatmul.mubr.f32.gmra.mxu0 %v2025
      %v2179 = vpop.f32.mrf.mxu0
      %v2180 = vadd.f32 0.0, %v2179
      %v2181 = vpop.f32.mrf.mxu0
      %2182 = vmatprep.mubr.f32.mxu0 0.0
      %2183 = vmatmul.mubr.f32.gmra.mxu0 %v2026
      %v2184 = vpop.f32.mrf.mxu0
      %v2185 = vadd.f32 0.0, %v2184
      %v2186 = vpop.f32.mrf.mxu0
      %2187 = vmatprep.mubr.f32.mxu0 0.0
      %2188 = vmatmul.mubr.f32.gmra.mxu0 %v2027
      %v2189 = vpop.f32.mrf.mxu0
      %v2190 = vadd.f32 0.0, %v2189
      %v2191 = vpop.f32.mrf.mxu0
      %2192 = vmatprep.mubr.f32.mxu0 0.0
      %2193 = vmatmul.mubr.f32.gmra.mxu0 %v2028
      %v2194 = vpop.f32.mrf.mxu0
      %v2195 = vadd.f32 0.0, %v2194
      %v2196 = vpop.f32.mrf.mxu0
      %2197 = vmatprep.mubr.f32.mxu0 0.0
      %2198 = vmatmul.mubr.f32.gmra.mxu0 %v2029
      %v2199 = vpop.f32.mrf.mxu0
      %v2200 = vadd.f32 0.0, %v2199
      %v2201 = vpop.f32.mrf.mxu0
      %2202 = vmatprep.mubr.f32.mxu0 0.0
      %2203 = vmatmul.mubr.f32.gmra.mxu0 %v2030
      %v2204 = vpop.f32.mrf.mxu0
      %v2205 = vadd.f32 0.0, %v2204
      %v2206 = vpop.f32.mrf.mxu0
      %2207 = vmatprep.mubr.f32.mxu0 0.0
      %2208 = vmatmul.mubr.f32.gmra.mxu0 %v2031
      %v2209 = vpop.f32.mrf.mxu0
      %v2210 = vadd.f32 0.0, %v2209
      %v2211 = vpop.f32.mrf.mxu0
      %2212 = vmatprep.mubr.f32.mxu0 0.0
      %2213 = vmatmul.mubr.f32.gmra.mxu0 %v2032
      %v2214 = vpop.f32.mrf.mxu0
      %v2215 = vadd.f32 0.0, %v2214
      %v2216 = vpop.f32.mrf.mxu0
      %2217 = vmatprep.mubr.f32.mxu0 0.0
      %2218 = vmatmul.mubr.f32.gmra.mxu0 %v2033
      %v2219 = vpop.f32.mrf.mxu0
      %v2220 = vadd.f32 0.0, %v2219
      %v2221 = vpop.f32.mrf.mxu0
      %2222 = vmatprep.mubr.f32.mxu0 0.0
      %2223 = vmatmul.mubr.f32.gmra.mxu0 %v2034
      %v2224 = vpop.f32.mrf.mxu0
      %v2225 = vadd.f32 0.0, %v2224
      %v2226 = vpop.f32.mrf.mxu0
      %2227 = vmatprep.mubr.f32.mxu0 0.0
      %2228 = vmatmul.mubr.f32.gmra.mxu0 %v2035
      %v2229 = vpop.f32.mrf.mxu0
      %v2230 = vadd.f32 0.0, %v2229
      %v2231 = vpop.f32.mrf.mxu0
      %2232 = vdwg.mxu0
      %v2233 = vadd.f32 %v1990, %v2120
      %v2234 = vadd.f32 %v1991, %v2125
      %v2235 = vadd.f32 %v1992, %v2130
      %v2236 = vadd.f32 %v1993, %v2135
      %v2237 = vadd.f32 %v1994, %v2140
      %v2238 = vadd.f32 %v1995, %v2145
      %v2239 = vadd.f32 %v1996, %v2150
      %v2240 = vadd.f32 %v1997, %v2155
      %v2241 = vadd.f32 %v1998, %v2160
      %v2242 = vadd.f32 %v1999, %v2165
      %v2243 = vadd.f32 %v2000, %v2170
      %v2244 = vadd.f32 %v2001, %v2175
      %v2245 = vadd.f32 %v2002, %v2180
      %v2246 = vadd.f32 %v2003, %v2185
      %v2247 = vadd.f32 %v2004, %v2190
      %v2248 = vadd.f32 %v2005, %v2195
      %v2249 = vadd.f32 %v2006, %v2200
      %v2250 = vadd.f32 %v2007, %v2205
      %v2251 = vadd.f32 %v2008, %v2210
      %v2252 = vadd.f32 %v2009, %v2215
      %v2253 = vadd.f32 %v2010, %v2220
      %v2254 = vadd.f32 %v2011, %v2225
      %v2255 = vadd.f32 %v2012, %v2230
      %v2256 = vld [vmem:[#allocation2 + $0x26] sm:$0xff]
      %v2257 = vld [vmem:[#allocation2 + $0x2e] sm:$0xff]
      %v2258 = vld [vmem:[#allocation2 + $0x36] sm:$0xff]
      %v2259 = vld [vmem:[#allocation2 + $0x3e] sm:$0xff]
      %v2260 = vld [vmem:[#allocation2 + $0x46] sm:$0xff]
      %v2261 = vld [vmem:[#allocation2 + $0x4e] sm:$0xff]
      %v2262 = vld [vmem:[#allocation2 + $0x56] sm:$0xff]
      %v2263 = vld [vmem:[#allocation2 + $0x5e] sm:$0xff]
      %v2264 = vld [vmem:[#allocation2 + $0x66] sm:$0xff]
      %v2265 = vld [vmem:[#allocation2 + $0x6e] sm:$0xff]
      %v2266 = vld [vmem:[#allocation2 + $0x76] sm:$0xff]
      %v2267 = vld [vmem:[#allocation2 + $0x7e] sm:$0xff]
      %v2268 = vld [vmem:[#allocation2 + $0x86] sm:$0xff]
      %v2269 = vld [vmem:[#allocation2 + $0x8e] sm:$0xff]
      %v2270 = vld [vmem:[#allocation2 + $0x96] sm:$0xff]
      %v2271 = vld [vmem:[#allocation2 + $0x9e] sm:$0xff]
      %v2272 = vld [vmem:[#allocation2 + $0xa6] sm:$0xff]
      %v2273 = vld [vmem:[#allocation2 + $0xae] sm:$0xff]
      %v2274 = vld [vmem:[#allocation2 + $0xb6] sm:$0xff]
      %v2275 = vld [vmem:[#allocation2 + $0xbe] sm:$0xff]
      %v2276 = vld [vmem:[#allocation2 + $0xc6] sm:$0xff]
      %v2277 = vld [vmem:[#allocation2 + $0xce] sm:$0xff]
      %v2278 = vld [vmem:[#allocation2 + $0xd6] sm:$0xf]
      %s2279 = scalar_lea.vmem %s1, 1024
      %v2280 = vld [vmem:[%s2279] sm:$0xff]
      %v2281 = vld [vmem:[%s2279 + $0x8] sm:$0xff]
      %v2282 = vld [vmem:[%s2279 + $0x10] sm:$0xff]
      %v2283 = vld [vmem:[%s2279 + $0x18] sm:$0xff]
      %v2284 = vld [vmem:[%s2279 + $0x20] sm:$0xff]
      %v2285 = vld [vmem:[%s2279 + $0x28] sm:$0xff]
      %v2286 = vld [vmem:[%s2279 + $0x30] sm:$0xff]
      %v2287 = vld [vmem:[%s2279 + $0x38] sm:$0xff]
      %v2288 = vld [vmem:[%s2279 + $0x40] sm:$0xff]
      %v2289 = vld [vmem:[%s2279 + $0x48] sm:$0xff]
      %v2290 = vld [vmem:[%s2279 + $0x50] sm:$0xff]
      %v2291 = vld [vmem:[%s2279 + $0x58] sm:$0xff]
      %v2292 = vld [vmem:[%s2279 + $0x60] sm:$0xff]
      %v2293 = vld [vmem:[%s2279 + $0x68] sm:$0xff]
      %v2294 = vld [vmem:[%s2279 + $0x70] sm:$0xff]
      %v2295 = vld [vmem:[%s2279 + $0x78] sm:$0xff]
      %2296 = vmatprep.subr.mxu0 0.0
      %2297 = vmatpush1.msra.mxu0 %v2295
      %2298 = vmatprep.subr.mxu0 0.0
      %2299 = vmatpush1.msra.mxu0 %v2294
      %2300 = vmatprep.subr.mxu0 0.0
      %2301 = vmatpush1.msra.mxu0 %v2293
      %2302 = vmatprep.subr.mxu0 0.0
      %2303 = vmatpush1.msra.mxu0 %v2292
      %2304 = vmatprep.subr.mxu0 0.0
      %2305 = vmatpush1.msra.mxu0 %v2291
      %2306 = vmatprep.subr.mxu0 0.0
      %2307 = vmatpush1.msra.mxu0 %v2290
      %2308 = vmatprep.subr.mxu0 0.0
      %2309 = vmatpush1.msra.mxu0 %v2289
      %2310 = vmatprep.subr.mxu0 0.0
      %2311 = vmatpush1.msra.mxu0 %v2288
      %2312 = vmatprep.subr.mxu0 0.0
      %2313 = vmatpush1.msra.mxu0 %v2287
      %2314 = vmatprep.subr.mxu0 0.0
      %2315 = vmatpush1.msra.mxu0 %v2286
      %2316 = vmatprep.subr.mxu0 0.0
      %2317 = vmatpush1.msra.mxu0 %v2285
      %2318 = vmatprep.subr.mxu0 0.0
      %2319 = vmatpush1.msra.mxu0 %v2284
      %2320 = vmatprep.subr.mxu0 0.0
      %2321 = vmatpush1.msra.mxu0 %v2283
      %2322 = vmatprep.subr.mxu0 0.0
      %2323 = vmatpush1.msra.mxu0 %v2282
      %2324 = vmatprep.subr.mxu0 0.0
      %2325 = vmatpush1.msra.mxu0 %v2281
      %2326 = vmatprep.subr.mxu0 0.0
      %2327 = vmatpush1.msra.mxu0 %v2280
      %2328 = vmatprep.subr.mxu0 0.0
      %2329 = vmatpush2.msra.mxu0 0.0
      %2330 = vmatprep.subr.mxu0 0.0
      %2331 = vmatpush2.msra.mxu0 0.0
      %2332 = vmatprep.subr.mxu0 0.0
      %2333 = vmatpush2.msra.mxu0 0.0
      %2334 = vmatprep.subr.mxu0 0.0
      %2335 = vmatpush2.msra.mxu0 0.0
      %2336 = vmatprep.subr.mxu0 0.0
      %2337 = vmatpush2.msra.mxu0 0.0
      %2338 = vmatprep.subr.mxu0 0.0
      %2339 = vmatpush2.msra.mxu0 0.0
      %2340 = vmatprep.subr.mxu0 0.0
      %2341 = vmatpush2.msra.mxu0 0.0
      %2342 = vmatprep.subr.mxu0 0.0
      %2343 = vmatpush2.msra.mxu0 0.0
      %2344 = vmatprep.subr.mxu0 0.0
      %2345 = vmatpush2.msra.mxu0 0.0
      %2346 = vmatprep.subr.mxu0 0.0
      %2347 = vmatpush2.msra.mxu0 0.0
      %2348 = vmatprep.subr.mxu0 0.0
      %2349 = vmatpush2.msra.mxu0 0.0
      %2350 = vmatprep.subr.mxu0 0.0
      %2351 = vmatpush2.msra.mxu0 0.0
      %2352 = vmatprep.subr.mxu0 0.0
      %2353 = vmatpush2.msra.mxu0 0.0
      %2354 = vmatprep.subr.mxu0 0.0
      %2355 = vmatpush2.msra.mxu0 0.0
      %2356 = vmatprep.subr.mxu0 0.0
      %2357 = vmatpush2.msra.mxu0 0.0
      %2358 = vmatprep.subr.mxu0 0.0
      %2359 = vmatpush2.msra.mxu0 0.0
      %2360 = vmatprep.mubr.f32.mxu0 0.0
      %2361 = vmatmul.mubr.f32.gmra.mxu0 %v2256
      %v2362 = vpop.f32.mrf.mxu0
      %v2363 = vadd.f32 0.0, %v2362
      %v2364 = vpop.f32.mrf.mxu0
      %2365 = vmatprep.mubr.f32.mxu0 0.0
      %2366 = vmatmul.mubr.f32.gmra.mxu0 %v2257
      %v2367 = vpop.f32.mrf.mxu0
      %v2368 = vadd.f32 0.0, %v2367
      %v2369 = vpop.f32.mrf.mxu0
      %2370 = vmatprep.mubr.f32.mxu0 0.0
      %2371 = vmatmul.mubr.f32.gmra.mxu0 %v2258
      %v2372 = vpop.f32.mrf.mxu0
      %v2373 = vadd.f32 0.0, %v2372
      %v2374 = vpop.f32.mrf.mxu0
      %2375 = vmatprep.mubr.f32.mxu0 0.0
      %2376 = vmatmul.mubr.f32.gmra.mxu0 %v2259
      %v2377 = vpop.f32.mrf.mxu0
      %v2378 = vadd.f32 0.0, %v2377
      %v2379 = vpop.f32.mrf.mxu0
      %2380 = vmatprep.mubr.f32.mxu0 0.0
      %2381 = vmatmul.mubr.f32.gmra.mxu0 %v2260
      %v2382 = vpop.f32.mrf.mxu0
      %v2383 = vadd.f32 0.0, %v2382
      %v2384 = vpop.f32.mrf.mxu0
      %2385 = vmatprep.mubr.f32.mxu0 0.0
      %2386 = vmatmul.mubr.f32.gmra.mxu0 %v2261
      %v2387 = vpop.f32.mrf.mxu0
      %v2388 = vadd.f32 0.0, %v2387
      %v2389 = vpop.f32.mrf.mxu0
      %2390 = vmatprep.mubr.f32.mxu0 0.0
      %2391 = vmatmul.mubr.f32.gmra.mxu0 %v2262
      %v2392 = vpop.f32.mrf.mxu0
      %v2393 = vadd.f32 0.0, %v2392
      %v2394 = vpop.f32.mrf.mxu0
      %2395 = vmatprep.mubr.f32.mxu0 0.0
      %2396 = vmatmul.mubr.f32.gmra.mxu0 %v2263
      %v2397 = vpop.f32.mrf.mxu0
      %v2398 = vadd.f32 0.0, %v2397
      %v2399 = vpop.f32.mrf.mxu0
      %2400 = vmatprep.mubr.f32.mxu0 0.0
      %2401 = vmatmul.mubr.f32.gmra.mxu0 %v2264
      %v2402 = vpop.f32.mrf.mxu0
      %v2403 = vadd.f32 0.0, %v2402
      %v2404 = vpop.f32.mrf.mxu0
      %2405 = vmatprep.mubr.f32.mxu0 0.0
      %2406 = vmatmul.mubr.f32.gmra.mxu0 %v2265
      %v2407 = vpop.f32.mrf.mxu0
      %v2408 = vadd.f32 0.0, %v2407
      %v2409 = vpop.f32.mrf.mxu0
      %2410 = vmatprep.mubr.f32.mxu0 0.0
      %2411 = vmatmul.mubr.f32.gmra.mxu0 %v2266
      %v2412 = vpop.f32.mrf.mxu0
      %v2413 = vadd.f32 0.0, %v2412
      %v2414 = vpop.f32.mrf.mxu0
      %2415 = vmatprep.mubr.f32.mxu0 0.0
      %2416 = vmatmul.mubr.f32.gmra.mxu0 %v2267
      %v2417 = vpop.f32.mrf.mxu0
      %v2418 = vadd.f32 0.0, %v2417
      %v2419 = vpop.f32.mrf.mxu0
      %2420 = vmatprep.mubr.f32.mxu0 0.0
      %2421 = vmatmul.mubr.f32.gmra.mxu0 %v2268
      %v2422 = vpop.f32.mrf.mxu0
      %v2423 = vadd.f32 0.0, %v2422
      %v2424 = vpop.f32.mrf.mxu0
      %2425 = vmatprep.mubr.f32.mxu0 0.0
      %2426 = vmatmul.mubr.f32.gmra.mxu0 %v2269
      %v2427 = vpop.f32.mrf.mxu0
      %v2428 = vadd.f32 0.0, %v2427
      %v2429 = vpop.f32.mrf.mxu0
      %2430 = vmatprep.mubr.f32.mxu0 0.0
      %2431 = vmatmul.mubr.f32.gmra.mxu0 %v2270
      %v2432 = vpop.f32.mrf.mxu0
      %v2433 = vadd.f32 0.0, %v2432
      %v2434 = vpop.f32.mrf.mxu0
      %2435 = vmatprep.mubr.f32.mxu0 0.0
      %2436 = vmatmul.mubr.f32.gmra.mxu0 %v2271
      %v2437 = vpop.f32.mrf.mxu0
      %v2438 = vadd.f32 0.0, %v2437
      %v2439 = vpop.f32.mrf.mxu0
      %2440 = vmatprep.mubr.f32.mxu0 0.0
      %2441 = vmatmul.mubr.f32.gmra.mxu0 %v2272
      %v2442 = vpop.f32.mrf.mxu0
      %v2443 = vadd.f32 0.0, %v2442
      %v2444 = vpop.f32.mrf.mxu0
      %2445 = vmatprep.mubr.f32.mxu0 0.0
      %2446 = vmatmul.mubr.f32.gmra.mxu0 %v2273
      %v2447 = vpop.f32.mrf.mxu0
      %v2448 = vadd.f32 0.0, %v2447
      %v2449 = vpop.f32.mrf.mxu0
      %2450 = vmatprep.mubr.f32.mxu0 0.0
      %2451 = vmatmul.mubr.f32.gmra.mxu0 %v2274
      %v2452 = vpop.f32.mrf.mxu0
      %v2453 = vadd.f32 0.0, %v2452
      %v2454 = vpop.f32.mrf.mxu0
      %2455 = vmatprep.mubr.f32.mxu0 0.0
      %2456 = vmatmul.mubr.f32.gmra.mxu0 %v2275
      %v2457 = vpop.f32.mrf.mxu0
      %v2458 = vadd.f32 0.0, %v2457
      %v2459 = vpop.f32.mrf.mxu0
      %2460 = vmatprep.mubr.f32.mxu0 0.0
      %2461 = vmatmul.mubr.f32.gmra.mxu0 %v2276
      %v2462 = vpop.f32.mrf.mxu0
      %v2463 = vadd.f32 0.0, %v2462
      %v2464 = vpop.f32.mrf.mxu0
      %2465 = vmatprep.mubr.f32.mxu0 0.0
      %2466 = vmatmul.mubr.f32.gmra.mxu0 %v2277
      %v2467 = vpop.f32.mrf.mxu0
      %v2468 = vadd.f32 0.0, %v2467
      %v2469 = vpop.f32.mrf.mxu0
      %2470 = vmatprep.mubr.f32.mxu0 0.0
      %2471 = vmatmul.mubr.f32.gmra.mxu0 %v2278
      %v2472 = vpop.f32.mrf.mxu0
      %v2473 = vadd.f32 0.0, %v2472
      %v2474 = vpop.f32.mrf.mxu0
      %2475 = vdwg.mxu0
      %v2476 = vadd.f32 %v2233, %v2363
      %v2477 = vadd.f32 %v2234, %v2368
      %v2478 = vadd.f32 %v2235, %v2373
      %v2479 = vadd.f32 %v2236, %v2378
      %v2480 = vadd.f32 %v2237, %v2383
      %v2481 = vadd.f32 %v2238, %v2388
      %v2482 = vadd.f32 %v2239, %v2393
      %v2483 = vadd.f32 %v2240, %v2398
      %v2484 = vadd.f32 %v2241, %v2403
      %v2485 = vadd.f32 %v2242, %v2408
      %v2486 = vadd.f32 %v2243, %v2413
      %v2487 = vadd.f32 %v2244, %v2418
      %v2488 = vadd.f32 %v2245, %v2423
      %v2489 = vadd.f32 %v2246, %v2428
      %v2490 = vadd.f32 %v2247, %v2433
      %v2491 = vadd.f32 %v2248, %v2438
      %v2492 = vadd.f32 %v2249, %v2443
      %v2493 = vadd.f32 %v2250, %v2448
      %v2494 = vadd.f32 %v2251, %v2453
      %v2495 = vadd.f32 %v2252, %v2458
      %v2496 = vadd.f32 %v2253, %v2463
      %v2497 = vadd.f32 %v2254, %v2468
      %v2498 = vadd.f32 %v2255, %v2473
      %v2499 = vld [vmem:[%s2] sm:$0x1]
      %v2501 = vlaneseq
      %v2502 = vshrl.u32 %v2501, 7
      %v2503 = vsub.s32 0, %v2502
      %v2504 = vrot.slane %v2499, %v2503
      %v2506 = vmul.f32 %v2476, %v2504
      %v2507 = vmul.f32 %v2477, %v2504
      %v2508 = vmul.f32 %v2478, %v2504
      %v2509 = vmul.f32 %v2479, %v2504
      %v2510 = vmul.f32 %v2480, %v2504
      %v2511 = vmul.f32 %v2481, %v2504
      %v2512 = vmul.f32 %v2482, %v2504
      %v2513 = vmul.f32 %v2483, %v2504
      %v2514 = vmul.f32 %v2484, %v2504
      %v2515 = vmul.f32 %v2485, %v2504
      %v2516 = vmul.f32 %v2486, %v2504
      %v2517 = vmul.f32 %v2487, %v2504
      %v2518 = vmul.f32 %v2488, %v2504
      %v2519 = vmul.f32 %v2489, %v2504
      %v2520 = vmul.f32 %v2490, %v2504
      %v2521 = vmul.f32 %v2491, %v2504
      %v2522 = vmul.f32 %v2492, %v2504
      %v2523 = vmul.f32 %v2493, %v2504
      %v2524 = vmul.f32 %v2494, %v2504
      %v2525 = vmul.f32 %v2495, %v2504
      %v2526 = vmul.f32 %v2496, %v2504
      %v2527 = vmul.f32 %v2497, %v2504
      %v2528 = vmul.f32 %v2498, %v2504
      %v2529 = vld [vmem:[%s3] sm:$0x1]
      %v2531 = vlaneseq
      %v2532 = vshrl.u32 %v2531, 7
      %v2533 = vsub.s32 0, %v2532
      %v2534 = vrot.slane %v2529, %v2533
      %v2536 = vadd.f32 %v2506, %v2534
      %v2537 = vadd.f32 %v2507, %v2534
      %v2538 = vadd.f32 %v2508, %v2534
      %v2539 = vadd.f32 %v2509, %v2534
      %v2540 = vadd.f32 %v2510, %v2534
      %v2541 = vadd.f32 %v2511, %v2534
      %v2542 = vadd.f32 %v2512, %v2534
      %v2543 = vadd.f32 %v2513, %v2534
      %v2544 = vadd.f32 %v2514, %v2534
      %v2545 = vadd.f32 %v2515, %v2534
      %v2546 = vadd.f32 %v2516, %v2534
      %v2547 = vadd.f32 %v2517, %v2534
      %v2548 = vadd.f32 %v2518, %v2534
      %v2549 = vadd.f32 %v2519, %v2534
      %v2550 = vadd.f32 %v2520, %v2534
      %v2551 = vadd.f32 %v2521, %v2534
      %v2552 = vadd.f32 %v2522, %v2534
      %v2553 = vadd.f32 %v2523, %v2534
      %v2554 = vadd.f32 %v2524, %v2534
      %v2555 = vadd.f32 %v2525, %v2534
      %v2556 = vadd.f32 %v2526, %v2534
      %v2557 = vadd.f32 %v2527, %v2534
      %v2558 = vadd.f32 %v2528, %v2534
      %v2559 = vxor.u32 %v2536, 2147483648
      %v2560 = vxor.u32 %v2537, 2147483648
      %v2561 = vxor.u32 %v2538, 2147483648
      %v2562 = vxor.u32 %v2539, 2147483648
      %v2563 = vxor.u32 %v2540, 2147483648
      %v2564 = vxor.u32 %v2541, 2147483648
      %v2565 = vxor.u32 %v2542, 2147483648
      %v2566 = vxor.u32 %v2543, 2147483648
      %v2567 = vxor.u32 %v2544, 2147483648
      %v2568 = vxor.u32 %v2545, 2147483648
      %v2569 = vxor.u32 %v2546, 2147483648
      %v2570 = vxor.u32 %v2547, 2147483648
      %v2571 = vxor.u32 %v2548, 2147483648
      %v2572 = vxor.u32 %v2549, 2147483648
      %v2573 = vxor.u32 %v2550, 2147483648
      %v2574 = vxor.u32 %v2551, 2147483648
      %v2575 = vxor.u32 %v2552, 2147483648
      %v2576 = vxor.u32 %v2553, 2147483648
      %v2577 = vxor.u32 %v2554, 2147483648
      %v2578 = vxor.u32 %v2555, 2147483648
      %v2579 = vxor.u32 %v2556, 2147483648
      %v2580 = vxor.u32 %v2557, 2147483648
      %v2581 = vxor.u32 %v2558, 2147483648
      %v2582 = vmul.f32 %v2559, 1.442695
      %v2583 = vpow.pop %v2582
      %v2584 = vmul.f32 %v2560, 1.442695
      %v2585 = vpow.pop %v2584
      %v2586 = vmul.f32 %v2561, 1.442695
      %v2587 = vpow.pop %v2586
      %v2588 = vmul.f32 %v2562, 1.442695
      %v2589 = vpow.pop %v2588
      %v2590 = vmul.f32 %v2563, 1.442695
      %v2591 = vpow.pop %v2590
      %v2592 = vmul.f32 %v2564, 1.442695
      %v2593 = vpow.pop %v2592
      %v2594 = vmul.f32 %v2565, 1.442695
      %v2595 = vpow.pop %v2594
      %v2596 = vmul.f32 %v2566, 1.442695
      %v2597 = vpow.pop %v2596
      %v2598 = vmul.f32 %v2567, 1.442695
      %v2599 = vpow.pop %v2598
      %v2600 = vmul.f32 %v2568, 1.442695
      %v2601 = vpow.pop %v2600
      %v2602 = vmul.f32 %v2569, 1.442695
      %v2603 = vpow.pop %v2602
      %v2604 = vmul.f32 %v2570, 1.442695
      %v2605 = vpow.pop %v2604
      %v2606 = vmul.f32 %v2571, 1.442695
      %v2607 = vpow.pop %v2606
      %v2608 = vmul.f32 %v2572, 1.442695
      %v2609 = vpow.pop %v2608
      %v2610 = vmul.f32 %v2573, 1.442695
      %v2611 = vpow.pop %v2610
      %v2612 = vmul.f32 %v2574, 1.442695
      %v2613 = vpow.pop %v2612
      %v2614 = vmul.f32 %v2575, 1.442695
      %v2615 = vpow.pop %v2614
      %v2616 = vmul.f32 %v2576, 1.442695
      %v2617 = vpow.pop %v2616
      %v2618 = vmul.f32 %v2577, 1.442695
      %v2619 = vpow.pop %v2618
      %v2620 = vmul.f32 %v2578, 1.442695
      %v2621 = vpow.pop %v2620
      %v2622 = vmul.f32 %v2579, 1.442695
      %v2623 = vpow.pop %v2622
      %v2624 = vmul.f32 %v2580, 1.442695
      %v2625 = vpow.pop %v2624
      %v2626 = vmul.f32 %v2581, 1.442695
      %v2627 = vpow.pop %v2626
      %v2628 = vadd.f32 %v2583, 1.0
      %v2629 = vadd.f32 %v2585, 1.0
      %v2630 = vadd.f32 %v2587, 1.0
      %v2631 = vadd.f32 %v2589, 1.0
      %v2632 = vadd.f32 %v2591, 1.0
      %v2633 = vadd.f32 %v2593, 1.0
      %v2634 = vadd.f32 %v2595, 1.0
      %v2635 = vadd.f32 %v2597, 1.0
      %v2636 = vadd.f32 %v2599, 1.0
      %v2637 = vadd.f32 %v2601, 1.0
      %v2638 = vadd.f32 %v2603, 1.0
      %v2639 = vadd.f32 %v2605, 1.0
      %v2640 = vadd.f32 %v2607, 1.0
      %v2641 = vadd.f32 %v2609, 1.0
      %v2642 = vadd.f32 %v2611, 1.0
      %v2643 = vadd.f32 %v2613, 1.0
      %v2644 = vadd.f32 %v2615, 1.0
      %v2645 = vadd.f32 %v2617, 1.0
      %v2646 = vadd.f32 %v2619, 1.0
      %v2647 = vadd.f32 %v2621, 1.0
      %v2648 = vadd.f32 %v2623, 1.0
      %v2649 = vadd.f32 %v2625, 1.0
      %v2650 = vadd.f32 %v2627, 1.0
      %v2651 = vrcp.pop %v2628
      %v2652 = vmul.f32 1.0, %v2651
      %v2653 = vrcp.pop %v2629
      %v2654 = vmul.f32 1.0, %v2653
      %v2655 = vrcp.pop %v2630
      %v2656 = vmul.f32 1.0, %v2655
      %v2657 = vrcp.pop %v2631
      %v2658 = vmul.f32 1.0, %v2657
      %v2659 = vrcp.pop %v2632
      %v2660 = vmul.f32 1.0, %v2659
      %v2661 = vrcp.pop %v2633
      %v2662 = vmul.f32 1.0, %v2661
      %v2663 = vrcp.pop %v2634
      %v2664 = vmul.f32 1.0, %v2663
      %v2665 = vrcp.pop %v2635
      %v2666 = vmul.f32 1.0, %v2665
      %v2667 = vrcp.pop %v2636
      %v2668 = vmul.f32 1.0, %v2667
      %v2669 = vrcp.pop %v2637
      %v2670 = vmul.f32 1.0, %v2669
      %v2671 = vrcp.pop %v2638
      %v2672 = vmul.f32 1.0, %v2671
      %v2673 = vrcp.pop %v2639
      %v2674 = vmul.f32 1.0, %v2673
      %v2675 = vrcp.pop %v2640
      %v2676 = vmul.f32 1.0, %v2675
      %v2677 = vrcp.pop %v2641
      %v2678 = vmul.f32 1.0, %v2677
      %v2679 = vrcp.pop %v2642
      %v2680 = vmul.f32 1.0, %v2679
      %v2681 = vrcp.pop %v2643
      %v2682 = vmul.f32 1.0, %v2681
      %v2683 = vrcp.pop %v2644
      %v2684 = vmul.f32 1.0, %v2683
      %v2685 = vrcp.pop %v2645
      %v2686 = vmul.f32 1.0, %v2685
      %v2687 = vrcp.pop %v2646
      %v2688 = vmul.f32 1.0, %v2687
      %v2689 = vrcp.pop %v2647
      %v2690 = vmul.f32 1.0, %v2689
      %v2691 = vrcp.pop %v2648
      %v2692 = vmul.f32 1.0, %v2691
      %v2693 = vrcp.pop %v2649
      %v2694 = vmul.f32 1.0, %v2693
      %v2695 = vrcp.pop %v2650
      %v2696 = vmul.f32 1.0, %v2695
      %v2697 = vmul.f32 %v2536, %v2652
      %v2698 = vmul.f32 %v2537, %v2654
      %v2699 = vmul.f32 %v2538, %v2656
      %v2700 = vmul.f32 %v2539, %v2658
      %v2701 = vmul.f32 %v2540, %v2660
      %v2702 = vmul.f32 %v2541, %v2662
      %v2703 = vmul.f32 %v2542, %v2664
      %v2704 = vmul.f32 %v2543, %v2666
      %v2705 = vmul.f32 %v2544, %v2668
      %v2706 = vmul.f32 %v2545, %v2670
      %v2707 = vmul.f32 %v2546, %v2672
      %v2708 = vmul.f32 %v2547, %v2674
      %v2709 = vmul.f32 %v2548, %v2676
      %v2710 = vmul.f32 %v2549, %v2678
      %v2711 = vmul.f32 %v2550, %v2680
      %v2712 = vmul.f32 %v2551, %v2682
      %v2713 = vmul.f32 %v2552, %v2684
      %v2714 = vmul.f32 %v2553, %v2686
      %v2715 = vmul.f32 %v2554, %v2688
      %v2716 = vmul.f32 %v2555, %v2690
      %v2717 = vmul.f32 %v2556, %v2692
      %v2718 = vmul.f32 %v2557, %v2694
      %v2719 = vmul.f32 %v2558, %v2696
      %v2720 = vlaneseq
      %v2721 = vshrl.u32 %v2720, 7
      %v2722 = vadd.s32 %v2721, 8
      %v2723 = vadd.s32 %v2721, 16
      %v2724 = vadd.s32 %v2721, 24
      %v2725 = vadd.s32 %v2721, 32
      %v2726 = vadd.s32 %v2721, 40
      %v2727 = vadd.s32 %v2721, 48
      %v2728 = vadd.s32 %v2721, 56
      %v2729 = vadd.s32 %v2721, 64
      %v2730 = vadd.s32 %v2721, 72
      %v2731 = vadd.s32 %v2721, 80
      %v2732 = vadd.s32 %v2721, 88
      %v2733 = vadd.s32 %v2721, 96
      %v2734 = vadd.s32 %v2721, 104
      %v2735 = vadd.s32 %v2721, 112
      %v2736 = vadd.s32 %v2721, 120
      %v2737 = vadd.s32 %v2721, 128
      %v2738 = vadd.s32 %v2721, 136
      %v2739 = vadd.s32 %v2721, 144
      %v2740 = vadd.s32 %v2721, 152
      %v2741 = vadd.s32 %v2721, 160
      %v2742 = vadd.s32 %v2721, 168
      %v2743 = vadd.s32 %v2721, 176
      %vm2744 = vcmp.lt.s32.totalorder %v2721, 0
      %v2745 = vsub.s32 0, %v2721
      %v2746 = vsel %vm2744, %v2745, %v2721
      %v2747 = vmul.u32.u64.compose %v2746, 3817748708
      %v2748 = vextract.low.u32 %v2747
      %v2749 = vextract.high.u32 %v2747
      %v2750 = vshrl.u32 %v2749, 4
      %v2751 = vmul.u32 %v2750, 18
      %v2752 = vsub.s32 %v2746, %v2751
      %v2753 = vsub.s32 0, %v2752
      %v2754 = vsel %vm2744, %v2753, %v2752
      %vm2755 = vcmp.lt.s32.totalorder %v2722, 0
      %v2756 = vsub.s32 0, %v2722
      %v2757 = vsel %vm2755, %v2756, %v2722
      %v2758 = vmul.u32.u64.compose %v2757, 3817748708
      %v2759 = vextract.low.u32 %v2758
      %v2760 = vextract.high.u32 %v2758
      %v2761 = vshrl.u32 %v2760, 4
      %v2762 = vmul.u32 %v2761, 18
      %v2763 = vsub.s32 %v2757, %v2762
      %v2764 = vsub.s32 0, %v2763
      %v2765 = vsel %vm2755, %v2764, %v2763
      %vm2766 = vcmp.lt.s32.totalorder %v2723, 0
      %v2767 = vsub.s32 0, %v2723
      %v2768 = vsel %vm2766, %v2767, %v2723
      %v2769 = vmul.u32.u64.compose %v2768, 3817748708
      %v2770 = vextract.low.u32 %v2769
      %v2771 = vextract.high.u32 %v2769
      %v2772 = vshrl.u32 %v2771, 4
      %v2773 = vmul.u32 %v2772, 18
      %v2774 = vsub.s32 %v2768, %v2773
      %v2775 = vsub.s32 0, %v2774
      %v2776 = vsel %vm2766, %v2775, %v2774
      %vm2777 = vcmp.lt.s32.totalorder %v2724, 0
      %v2778 = vsub.s32 0, %v2724
      %v2779 = vsel %vm2777, %v2778, %v2724
      %v2780 = vmul.u32.u64.compose %v2779, 3817748708
      %v2781 = vextract.low.u32 %v2780
      %v2782 = vextract.high.u32 %v2780
      %v2783 = vshrl.u32 %v2782, 4
      %v2784 = vmul.u32 %v2783, 18
      %v2785 = vsub.s32 %v2779, %v2784
      %v2786 = vsub.s32 0, %v2785
      %v2787 = vsel %vm2777, %v2786, %v2785
      %vm2788 = vcmp.lt.s32.totalorder %v2725, 0
      %v2789 = vsub.s32 0, %v2725
      %v2790 = vsel %vm2788, %v2789, %v2725
      %v2791 = vmul.u32.u64.compose %v2790, 3817748708
      %v2792 = vextract.low.u32 %v2791
      %v2793 = vextract.high.u32 %v2791
      %v2794 = vshrl.u32 %v2793, 4
      %v2795 = vmul.u32 %v2794, 18
      %v2796 = vsub.s32 %v2790, %v2795
      %v2797 = vsub.s32 0, %v2796
      %v2798 = vsel %vm2788, %v2797, %v2796
      %vm2799 = vcmp.lt.s32.totalorder %v2726, 0
      %v2800 = vsub.s32 0, %v2726
      %v2801 = vsel %vm2799, %v2800, %v2726
      %v2802 = vmul.u32.u64.compose %v2801, 3817748708
      %v2803 = vextract.low.u32 %v2802
      %v2804 = vextract.high.u32 %v2802
      %v2805 = vshrl.u32 %v2804, 4
      %v2806 = vmul.u32 %v2805, 18
      %v2807 = vsub.s32 %v2801, %v2806
      %v2808 = vsub.s32 0, %v2807
      %v2809 = vsel %vm2799, %v2808, %v2807
      %vm2810 = vcmp.lt.s32.totalorder %v2727, 0
      %v2811 = vsub.s32 0, %v2727
      %v2812 = vsel %vm2810, %v2811, %v2727
      %v2813 = vmul.u32.u64.compose %v2812, 3817748708
      %v2814 = vextract.low.u32 %v2813
      %v2815 = vextract.high.u32 %v2813
      %v2816 = vshrl.u32 %v2815, 4
      %v2817 = vmul.u32 %v2816, 18
      %v2818 = vsub.s32 %v2812, %v2817
      %v2819 = vsub.s32 0, %v2818
      %v2820 = vsel %vm2810, %v2819, %v2818
      %vm2821 = vcmp.lt.s32.totalorder %v2728, 0
      %v2822 = vsub.s32 0, %v2728
      %v2823 = vsel %vm2821, %v2822, %v2728
      %v2824 = vmul.u32.u64.compose %v2823, 3817748708
      %v2825 = vextract.low.u32 %v2824
      %v2826 = vextract.high.u32 %v2824
      %v2827 = vshrl.u32 %v2826, 4
      %v2828 = vmul.u32 %v2827, 18
      %v2829 = vsub.s32 %v2823, %v2828
      %v2830 = vsub.s32 0, %v2829
      %v2831 = vsel %vm2821, %v2830, %v2829
      %vm2832 = vcmp.lt.s32.totalorder %v2729, 0
      %v2833 = vsub.s32 0, %v2729
      %v2834 = vsel %vm2832, %v2833, %v2729
      %v2835 = vmul.u32.u64.compose %v2834, 3817748708
      %v2836 = vextract.low.u32 %v2835
      %v2837 = vextract.high.u32 %v2835
      %v2838 = vshrl.u32 %v2837, 4
      %v2839 = vmul.u32 %v2838, 18
      %v2840 = vsub.s32 %v2834, %v2839
      %v2841 = vsub.s32 0, %v2840
      %v2842 = vsel %vm2832, %v2841, %v2840
      %vm2843 = vcmp.lt.s32.totalorder %v2730, 0
      %v2844 = vsub.s32 0, %v2730
      %v2845 = vsel %vm2843, %v2844, %v2730
      %v2846 = vmul.u32.u64.compose %v2845, 3817748708
      %v2847 = vextract.low.u32 %v2846
      %v2848 = vextract.high.u32 %v2846
      %v2849 = vshrl.u32 %v2848, 4
      %v2850 = vmul.u32 %v2849, 18
      %v2851 = vsub.s32 %v2845, %v2850
      %v2852 = vsub.s32 0, %v2851
      %v2853 = vsel %vm2843, %v2852, %v2851
      %vm2854 = vcmp.lt.s32.totalorder %v2731, 0
      %v2855 = vsub.s32 0, %v2731
      %v2856 = vsel %vm2854, %v2855, %v2731
      %v2857 = vmul.u32.u64.compose %v2856, 3817748708
      %v2858 = vextract.low.u32 %v2857
      %v2859 = vextract.high.u32 %v2857
      %v2860 = vshrl.u32 %v2859, 4
      %v2861 = vmul.u32 %v2860, 18
      %v2862 = vsub.s32 %v2856, %v2861
      %v2863 = vsub.s32 0, %v2862
      %v2864 = vsel %vm2854, %v2863, %v2862
      %vm2865 = vcmp.lt.s32.totalorder %v2732, 0
      %v2866 = vsub.s32 0, %v2732
      %v2867 = vsel %vm2865, %v2866, %v2732
      %v2868 = vmul.u32.u64.compose %v2867, 3817748708
      %v2869 = vextract.low.u32 %v2868
      %v2870 = vextract.high.u32 %v2868
      %v2871 = vshrl.u32 %v2870, 4
      %v2872 = vmul.u32 %v2871, 18
      %v2873 = vsub.s32 %v2867, %v2872
      %v2874 = vsub.s32 0, %v2873
      %v2875 = vsel %vm2865, %v2874, %v2873
      %vm2876 = vcmp.lt.s32.totalorder %v2733, 0
      %v2877 = vsub.s32 0, %v2733
      %v2878 = vsel %vm2876, %v2877, %v2733
      %v2879 = vmul.u32.u64.compose %v2878, 3817748708
      %v2880 = vextract.low.u32 %v2879
      %v2881 = vextract.high.u32 %v2879
      %v2882 = vshrl.u32 %v2881, 4
      %v2883 = vmul.u32 %v2882, 18
      %v2884 = vsub.s32 %v2878, %v2883
      %v2885 = vsub.s32 0, %v2884
      %v2886 = vsel %vm2876, %v2885, %v2884
      %vm2887 = vcmp.lt.s32.totalorder %v2734, 0
      %v2888 = vsub.s32 0, %v2734
      %v2889 = vsel %vm2887, %v2888, %v2734
      %v2890 = vmul.u32.u64.compose %v2889, 3817748708
      %v2891 = vextract.low.u32 %v2890
      %v2892 = vextract.high.u32 %v2890
      %v2893 = vshrl.u32 %v2892, 4
      %v2894 = vmul.u32 %v2893, 18
      %v2895 = vsub.s32 %v2889, %v2894
      %v2896 = vsub.s32 0, %v2895
      %v2897 = vsel %vm2887, %v2896, %v2895
      %vm2898 = vcmp.lt.s32.totalorder %v2735, 0
      %v2899 = vsub.s32 0, %v2735
      %v2900 = vsel %vm2898, %v2899, %v2735
      %v2901 = vmul.u32.u64.compose %v2900, 3817748708
      %v2902 = vextract.low.u32 %v2901
      %v2903 = vextract.high.u32 %v2901
      %v2904 = vshrl.u32 %v2903, 4
      %v2905 = vmul.u32 %v2904, 18
      %v2906 = vsub.s32 %v2900, %v2905
      %v2907 = vsub.s32 0, %v2906
      %v2908 = vsel %vm2898, %v2907, %v2906
      %vm2909 = vcmp.lt.s32.totalorder %v2736, 0
      %v2910 = vsub.s32 0, %v2736
      %v2911 = vsel %vm2909, %v2910, %v2736
      %v2912 = vmul.u32.u64.compose %v2911, 3817748708
      %v2913 = vextract.low.u32 %v2912
      %v2914 = vextract.high.u32 %v2912
      %v2915 = vshrl.u32 %v2914, 4
      %v2916 = vmul.u32 %v2915, 18
      %v2917 = vsub.s32 %v2911, %v2916
      %v2918 = vsub.s32 0, %v2917
      %v2919 = vsel %vm2909, %v2918, %v2917
      %vm2920 = vcmp.lt.s32.totalorder %v2737, 0
      %v2921 = vsub.s32 0, %v2737
      %v2922 = vsel %vm2920, %v2921, %v2737
      %v2923 = vmul.u32.u64.compose %v2922, 3817748708
      %v2924 = vextract.low.u32 %v2923
      %v2925 = vextract.high.u32 %v2923
      %v2926 = vshrl.u32 %v2925, 4
      %v2927 = vmul.u32 %v2926, 18
      %v2928 = vsub.s32 %v2922, %v2927
      %v2929 = vsub.s32 0, %v2928
      %v2930 = vsel %vm2920, %v2929, %v2928
      %vm2931 = vcmp.lt.s32.totalorder %v2738, 0
      %v2932 = vsub.s32 0, %v2738
      %v2933 = vsel %vm2931, %v2932, %v2738
      %v2934 = vmul.u32.u64.compose %v2933, 3817748708
      %v2935 = vextract.low.u32 %v2934
      %v2936 = vextract.high.u32 %v2934
      %v2937 = vshrl.u32 %v2936, 4
      %v2938 = vmul.u32 %v2937, 18
      %v2939 = vsub.s32 %v2933, %v2938
      %v2940 = vsub.s32 0, %v2939
      %v2941 = vsel %vm2931, %v2940, %v2939
      %vm2942 = vcmp.lt.s32.totalorder %v2739, 0
      %v2943 = vsub.s32 0, %v2739
      %v2944 = vsel %vm2942, %v2943, %v2739
      %v2945 = vmul.u32.u64.compose %v2944, 3817748708
      %v2946 = vextract.low.u32 %v2945
      %v2947 = vextract.high.u32 %v2945
      %v2948 = vshrl.u32 %v2947, 4
      %v2949 = vmul.u32 %v2948, 18
      %v2950 = vsub.s32 %v2944, %v2949
      %v2951 = vsub.s32 0, %v2950
      %v2952 = vsel %vm2942, %v2951, %v2950
      %vm2953 = vcmp.lt.s32.totalorder %v2740, 0
      %v2954 = vsub.s32 0, %v2740
      %v2955 = vsel %vm2953, %v2954, %v2740
      %v2956 = vmul.u32.u64.compose %v2955, 3817748708
      %v2957 = vextract.low.u32 %v2956
      %v2958 = vextract.high.u32 %v2956
      %v2959 = vshrl.u32 %v2958, 4
      %v2960 = vmul.u32 %v2959, 18
      %v2961 = vsub.s32 %v2955, %v2960
      %v2962 = vsub.s32 0, %v2961
      %v2963 = vsel %vm2953, %v2962, %v2961
      %vm2964 = vcmp.lt.s32.totalorder %v2741, 0
      %v2965 = vsub.s32 0, %v2741
      %v2966 = vsel %vm2964, %v2965, %v2741
      %v2967 = vmul.u32.u64.compose %v2966, 3817748708
      %v2968 = vextract.low.u32 %v2967
      %v2969 = vextract.high.u32 %v2967
      %v2970 = vshrl.u32 %v2969, 4
      %v2971 = vmul.u32 %v2970, 18
      %v2972 = vsub.s32 %v2966, %v2971
      %v2973 = vsub.s32 0, %v2972
      %v2974 = vsel %vm2964, %v2973, %v2972
      %vm2975 = vcmp.lt.s32.totalorder %v2742, 0
      %v2976 = vsub.s32 0, %v2742
      %v2977 = vsel %vm2975, %v2976, %v2742
      %v2978 = vmul.u32.u64.compose %v2977, 3817748708
      %v2979 = vextract.low.u32 %v2978
      %v2980 = vextract.high.u32 %v2978
      %v2981 = vshrl.u32 %v2980, 4
      %v2982 = vmul.u32 %v2981, 18
      %v2983 = vsub.s32 %v2977, %v2982
      %v2984 = vsub.s32 0, %v2983
      %v2985 = vsel %vm2975, %v2984, %v2983
      %vm2986 = vcmp.lt.s32.totalorder %v2743, 0
      %v2987 = vsub.s32 0, %v2743
      %v2988 = vsel %vm2986, %v2987, %v2743
      %v2989 = vmul.u32.u64.compose %v2988, 3817748708
      %v2990 = vextract.low.u32 %v2989
      %v2991 = vextract.high.u32 %v2989
      %v2992 = vshrl.u32 %v2991, 4
      %v2993 = vmul.u32 %v2992, 18
      %v2994 = vsub.s32 %v2988, %v2993
      %v2995 = vsub.s32 0, %v2994
      %v2996 = vsel %vm2986, %v2995, %v2994
      %vm2997 = vcmp.ne.s32.totalorder %v2754, 0
      %vm2998 = vcmp.ne.s32.totalorder %v2765, 0
      %vm2999 = vcmp.ne.s32.totalorder %v2776, 0
      %vm3000 = vcmp.ne.s32.totalorder %v2787, 0
      %vm3001 = vcmp.ne.s32.totalorder %v2798, 0
      %vm3002 = vcmp.ne.s32.totalorder %v2809, 0
      %vm3003 = vcmp.ne.s32.totalorder %v2820, 0
      %vm3004 = vcmp.ne.s32.totalorder %v2831, 0
      %vm3005 = vcmp.ne.s32.totalorder %v2842, 0
      %vm3006 = vcmp.ne.s32.totalorder %v2853, 0
      %vm3007 = vcmp.ne.s32.totalorder %v2864, 0
      %vm3008 = vcmp.ne.s32.totalorder %v2875, 0
      %vm3009 = vcmp.ne.s32.totalorder %v2886, 0
      %vm3010 = vcmp.ne.s32.totalorder %v2897, 0
      %vm3011 = vcmp.ne.s32.totalorder %v2908, 0
      %vm3012 = vcmp.ne.s32.totalorder %v2919, 0
      %vm3013 = vcmp.ne.s32.totalorder %v2930, 0
      %vm3014 = vcmp.ne.s32.totalorder %v2941, 0
      %vm3015 = vcmp.ne.s32.totalorder %v2952, 0
      %vm3016 = vcmp.ne.s32.totalorder %v2963, 0
      %vm3017 = vcmp.ne.s32.totalorder %v2974, 0
      %vm3018 = vcmp.ne.s32.totalorder %v2985, 0
      %vm3019 = vcmp.ne.s32.totalorder %v2996, 0
      %vm3020 = vcmp.lt.s32.totalorder %v2754, 0
      %vm3021 = vcmp.lt.s32.totalorder %v2765, 0
      %vm3022 = vcmp.lt.s32.totalorder %v2776, 0
      %vm3023 = vcmp.lt.s32.totalorder %v2787, 0
      %vm3024 = vcmp.lt.s32.totalorder %v2798, 0
      %vm3025 = vcmp.lt.s32.totalorder %v2809, 0
      %vm3026 = vcmp.lt.s32.totalorder %v2820, 0
      %vm3027 = vcmp.lt.s32.totalorder %v2831, 0
      %vm3028 = vcmp.lt.s32.totalorder %v2842, 0
      %vm3029 = vcmp.lt.s32.totalorder %v2853, 0
      %vm3030 = vcmp.lt.s32.totalorder %v2864, 0
      %vm3031 = vcmp.lt.s32.totalorder %v2875, 0
      %vm3032 = vcmp.lt.s32.totalorder %v2886, 0
      %vm3033 = vcmp.lt.s32.totalorder %v2897, 0
      %vm3034 = vcmp.lt.s32.totalorder %v2908, 0
      %vm3035 = vcmp.lt.s32.totalorder %v2919, 0
      %vm3036 = vcmp.lt.s32.totalorder %v2930, 0
      %vm3037 = vcmp.lt.s32.totalorder %v2941, 0
      %vm3038 = vcmp.lt.s32.totalorder %v2952, 0
      %vm3039 = vcmp.lt.s32.totalorder %v2963, 0
      %vm3040 = vcmp.lt.s32.totalorder %v2974, 0
      %vm3041 = vcmp.lt.s32.totalorder %v2985, 0
      %vm3042 = vcmp.lt.s32.totalorder %v2996, 0
      %vm3043 = vmand %vm3020, %vm2997
      %vm3044 = vmand %vm3021, %vm2998
      %vm3045 = vmand %vm3022, %vm2999
      %vm3046 = vmand %vm3023, %vm3000
      %vm3047 = vmand %vm3024, %vm3001
      %vm3048 = vmand %vm3025, %vm3002
      %vm3049 = vmand %vm3026, %vm3003
      %vm3050 = vmand %vm3027, %vm3004
      %vm3051 = vmand %vm3028, %vm3005
      %vm3052 = vmand %vm3029, %vm3006
      %vm3053 = vmand %vm3030, %vm3007
      %vm3054 = vmand %vm3031, %vm3008
      %vm3055 = vmand %vm3032, %vm3009
      %vm3056 = vmand %vm3033, %vm3010
      %vm3057 = vmand %vm3034, %vm3011
      %vm3058 = vmand %vm3035, %vm3012
      %vm3059 = vmand %vm3036, %vm3013
      %vm3060 = vmand %vm3037, %vm3014
      %vm3061 = vmand %vm3038, %vm3015
      %vm3062 = vmand %vm3039, %vm3016
      %vm3063 = vmand %vm3040, %vm3017
      %vm3064 = vmand %vm3041, %vm3018
      %vm3065 = vmand %vm3042, %vm3019
      %v3066 = vadd.s32 %v2754, 18
      %v3067 = vadd.s32 %v2765, 18
      %v3068 = vadd.s32 %v2776, 18
      %v3069 = vadd.s32 %v2787, 18
      %v3070 = vadd.s32 %v2798, 18
      %v3071 = vadd.s32 %v2809, 18
      %v3072 = vadd.s32 %v2820, 18
      %v3073 = vadd.s32 %v2831, 18
      %v3074 = vadd.s32 %v2842, 18
      %v3075 = vadd.s32 %v2853, 18
      %v3076 = vadd.s32 %v2864, 18
      %v3077 = vadd.s32 %v2875, 18
      %v3078 = vadd.s32 %v2886, 18
      %v3079 = vadd.s32 %v2897, 18
      %v3080 = vadd.s32 %v2908, 18
      %v3081 = vadd.s32 %v2919, 18
      %v3082 = vadd.s32 %v2930, 18
      %v3083 = vadd.s32 %v2941, 18
      %v3084 = vadd.s32 %v2952, 18
      %v3085 = vadd.s32 %v2963, 18
      %v3086 = vadd.s32 %v2974, 18
      %v3087 = vadd.s32 %v2985, 18
      %v3088 = vadd.s32 %v2996, 18
      %v3089 = vsel %vm3043, %v3066, %v2754
      %v3090 = vsel %vm3044, %v3067, %v2765
      %v3091 = vsel %vm3045, %v3068, %v2776
      %v3092 = vsel %vm3046, %v3069, %v2787
      %v3093 = vsel %vm3047, %v3070, %v2798
      %v3094 = vsel %vm3048, %v3071, %v2809
      %v3095 = vsel %vm3049, %v3072, %v2820
      %v3096 = vsel %vm3050, %v3073, %v2831
      %v3097 = vsel %vm3051, %v3074, %v2842
      %v3098 = vsel %vm3052, %v3075, %v2853
      %v3099 = vsel %vm3053, %v3076, %v2864
      %v3100 = vsel %vm3054, %v3077, %v2875
      %v3101 = vsel %vm3055, %v3078, %v2886
      %v3102 = vsel %vm3056, %v3079, %v2897
      %v3103 = vsel %vm3057, %v3080, %v2908
      %v3104 = vsel %vm3058, %v3081, %v2919
      %v3105 = vsel %vm3059, %v3082, %v2930
      %v3106 = vsel %vm3060, %v3083, %v2941
      %v3107 = vsel %vm3061, %v3084, %v2952
      %v3108 = vsel %vm3062, %v3085, %v2963
      %v3109 = vsel %vm3063, %v3086, %v2974
      %v3110 = vsel %vm3064, %v3087, %v2985
      %v3111 = vsel %vm3065, %v3088, %v2996
      %vm3112 = vcmp.lt.s32.totalorder %v3089, 16
      %vm3113 = vcmp.lt.s32.totalorder %v3090, 16
      %vm3114 = vcmp.lt.s32.totalorder %v3091, 16
      %vm3115 = vcmp.lt.s32.totalorder %v3092, 16
      %vm3116 = vcmp.lt.s32.totalorder %v3093, 16
      %vm3117 = vcmp.lt.s32.totalorder %v3094, 16
      %vm3118 = vcmp.lt.s32.totalorder %v3095, 16
      %vm3119 = vcmp.lt.s32.totalorder %v3096, 16
      %vm3120 = vcmp.lt.s32.totalorder %v3097, 16
      %vm3121 = vcmp.lt.s32.totalorder %v3098, 16
      %vm3122 = vcmp.lt.s32.totalorder %v3099, 16
      %vm3123 = vcmp.lt.s32.totalorder %v3100, 16
      %vm3124 = vcmp.lt.s32.totalorder %v3101, 16
      %vm3125 = vcmp.lt.s32.totalorder %v3102, 16
      %vm3126 = vcmp.lt.s32.totalorder %v3103, 16
      %vm3127 = vcmp.lt.s32.totalorder %v3104, 16
      %vm3128 = vcmp.lt.s32.totalorder %v3105, 16
      %vm3129 = vcmp.lt.s32.totalorder %v3106, 16
      %vm3130 = vcmp.lt.s32.totalorder %v3107, 16
      %vm3131 = vcmp.lt.s32.totalorder %v3108, 16
      %vm3132 = vcmp.lt.s32.totalorder %v3109, 16
      %vm3133 = vcmp.lt.s32.totalorder %v3110, 16
      %vm3134 = vcmp.lt.s32.totalorder %v3111, 16
      %s3135 = smul.u32 %s23, 8
      %s3136 = ssub.s32 1, %s3135
      %p3137 = scmp.gt.s32.totalorder %s3136, 0
      %s3138 = scalar_select %p3137, %s3136, 0
      %s3139 = smul.u32 %s3138, 18
      %s3140 = ssub.s32 17, %s3135
      %p3141 = scmp.lt.s32.totalorder %s3140, 10
      %s3142 = scalar_select %p3141, %s3140, 10
      %s3143 = smul.u32 %s3142, 18
      %v3144 = vstv %s3139
      %vm3145 = vcmp.ge.s32.totalorder %v2721, %v3144
      %vm3146 = vcmp.ge.s32.totalorder %v2722, %v3144
      %vm3147 = vcmp.ge.s32.totalorder %v2723, %v3144
      %vm3148 = vcmp.ge.s32.totalorder %v2724, %v3144
      %vm3149 = vcmp.ge.s32.totalorder %v2725, %v3144
      %vm3150 = vcmp.ge.s32.totalorder %v2726, %v3144
      %vm3151 = vcmp.ge.s32.totalorder %v2727, %v3144
      %vm3152 = vcmp.ge.s32.totalorder %v2728, %v3144
      %vm3153 = vcmp.ge.s32.totalorder %v2729, %v3144
      %vm3154 = vcmp.ge.s32.totalorder %v2730, %v3144
      %vm3155 = vcmp.ge.s32.totalorder %v2731, %v3144
      %vm3156 = vcmp.ge.s32.totalorder %v2732, %v3144
      %vm3157 = vcmp.ge.s32.totalorder %v2733, %v3144
      %vm3158 = vcmp.ge.s32.totalorder %v2734, %v3144
      %vm3159 = vcmp.ge.s32.totalorder %v2735, %v3144
      %vm3160 = vcmp.ge.s32.totalorder %v2736, %v3144
      %vm3161 = vcmp.ge.s32.totalorder %v2737, %v3144
      %vm3162 = vcmp.ge.s32.totalorder %v2738, %v3144
      %vm3163 = vcmp.ge.s32.totalorder %v2739, %v3144
      %vm3164 = vcmp.ge.s32.totalorder %v2740, %v3144
      %vm3165 = vcmp.ge.s32.totalorder %v2741, %v3144
      %vm3166 = vcmp.ge.s32.totalorder %v2742, %v3144
      %vm3167 = vcmp.ge.s32.totalorder %v2743, %v3144
      %vm3168 = vmand %vm3112, %vm3145
      %vm3169 = vmand %vm3113, %vm3146
      %vm3170 = vmand %vm3114, %vm3147
      %vm3171 = vmand %vm3115, %vm3148
      %vm3172 = vmand %vm3116, %vm3149
      %vm3173 = vmand %vm3117, %vm3150
      %vm3174 = vmand %vm3118, %vm3151
      %vm3175 = vmand %vm3119, %vm3152
      %vm3176 = vmand %vm3120, %vm3153
      %vm3177 = vmand %vm3121, %vm3154
      %vm3178 = vmand %vm3122, %vm3155
      %vm3179 = vmand %vm3123, %vm3156
      %vm3180 = vmand %vm3124, %vm3157
      %vm3181 = vmand %vm3125, %vm3158
      %vm3182 = vmand %vm3126, %vm3159
      %vm3183 = vmand %vm3127, %vm3160
      %vm3184 = vmand %vm3128, %vm3161
      %vm3185 = vmand %vm3129, %vm3162
      %vm3186 = vmand %vm3130, %vm3163
      %vm3187 = vmand %vm3131, %vm3164
      %vm3188 = vmand %vm3132, %vm3165
      %vm3189 = vmand %vm3133, %vm3166
      %vm3190 = vmand %vm3134, %vm3167
      %v3191 = vstv %s3143
      %vm3192 = vcmp.lt.s32.totalorder %v2721, %v3191
      %vm3193 = vcmp.lt.s32.totalorder %v2722, %v3191
      %vm3194 = vcmp.lt.s32.totalorder %v2723, %v3191
      %vm3195 = vcmp.lt.s32.totalorder %v2724, %v3191
      %vm3196 = vcmp.lt.s32.totalorder %v2725, %v3191
      %vm3197 = vcmp.lt.s32.totalorder %v2726, %v3191
      %vm3198 = vcmp.lt.s32.totalorder %v2727, %v3191
      %vm3199 = vcmp.lt.s32.totalorder %v2728, %v3191
      %vm3200 = vcmp.lt.s32.totalorder %v2729, %v3191
      %vm3201 = vcmp.lt.s32.totalorder %v2730, %v3191
      %vm3202 = vcmp.lt.s32.totalorder %v2731, %v3191
      %vm3203 = vcmp.lt.s32.totalorder %v2732, %v3191
      %vm3204 = vcmp.lt.s32.totalorder %v2733, %v3191
      %vm3205 = vcmp.lt.s32.totalorder %v2734, %v3191
      %vm3206 = vcmp.lt.s32.totalorder %v2735, %v3191
      %vm3207 = vcmp.lt.s32.totalorder %v2736, %v3191
      %vm3208 = vcmp.lt.s32.totalorder %v2737, %v3191
      %vm3209 = vcmp.lt.s32.totalorder %v2738, %v3191
      %vm3210 = vcmp.lt.s32.totalorder %v2739, %v3191
      %vm3211 = vcmp.lt.s32.totalorder %v2740, %v3191
      %vm3212 = vcmp.lt.s32.totalorder %v2741, %v3191
      %vm3213 = vcmp.lt.s32.totalorder %v2742, %v3191
      %vm3214 = vcmp.lt.s32.totalorder %v2743, %v3191
      %vm3215 = vmand %vm3168, %vm3192
      %vm3216 = vmand %vm3169, %vm3193
      %vm3217 = vmand %vm3170, %vm3194
      %vm3218 = vmand %vm3171, %vm3195
      %vm3219 = vmand %vm3172, %vm3196
      %vm3220 = vmand %vm3173, %vm3197
      %vm3221 = vmand %vm3174, %vm3198
      %vm3222 = vmand %vm3175, %vm3199
      %vm3223 = vmand %vm3176, %vm3200
      %vm3224 = vmand %vm3177, %vm3201
      %vm3225 = vmand %vm3178, %vm3202
      %vm3226 = vmand %vm3179, %vm3203
      %vm3227 = vmand %vm3180, %vm3204
      %vm3228 = vmand %vm3181, %vm3205
      %vm3229 = vmand %vm3182, %vm3206
      %vm3230 = vmand %vm3183, %vm3207
      %vm3231 = vmand %vm3184, %vm3208
      %vm3232 = vmand %vm3185, %vm3209
      %vm3233 = vmand %vm3186, %vm3210
      %vm3234 = vmand %vm3187, %vm3211
      %vm3235 = vmand %vm3188, %vm3212
      %vm3236 = vmand %vm3189, %vm3213
      %vm3237 = vmand %vm3190, %vm3214
      %v3238 = vsel %vm3215, 1, 0
      %v3239 = vsel %vm3216, 1, 0
      %v3240 = vsel %vm3217, 1, 0
      %v3241 = vsel %vm3218, 1, 0
      %v3242 = vsel %vm3219, 1, 0
      %v3243 = vsel %vm3220, 1, 0
      %v3244 = vsel %vm3221, 1, 0
      %v3245 = vsel %vm3222, 1, 0
      %v3246 = vsel %vm3223, 1, 0
      %v3247 = vsel %vm3224, 1, 0
      %v3248 = vsel %vm3225, 1, 0
      %v3249 = vsel %vm3226, 1, 0
      %v3250 = vsel %vm3227, 1, 0
      %v3251 = vsel %vm3228, 1, 0
      %v3252 = vsel %vm3229, 1, 0
      %v3253 = vsel %vm3230, 1, 0
      %v3254 = vsel %vm3231, 1, 0
      %v3255 = vsel %vm3232, 1, 0
      %v3256 = vsel %vm3233, 1, 0
      %v3257 = vsel %vm3234, 1, 0
      %v3258 = vsel %vm3235, 1, 0
      %v3259 = vsel %vm3236, 1, 0
      %v3260 = vsel %vm3237, 1, 0
      %vm3261 = vcmp.eq.s32.totalorder %v3238, 1
      %vm3262 = vcmp.eq.s32.totalorder %v3239, 1
      %vm3263 = vcmp.eq.s32.totalorder %v3240, 1
      %vm3264 = vcmp.eq.s32.totalorder %v3241, 1
      %vm3265 = vcmp.eq.s32.totalorder %v3242, 1
      %vm3266 = vcmp.eq.s32.totalorder %v3243, 1
      %vm3267 = vcmp.eq.s32.totalorder %v3244, 1
      %vm3268 = vcmp.eq.s32.totalorder %v3245, 1
      %vm3269 = vcmp.eq.s32.totalorder %v3246, 1
      %vm3270 = vcmp.eq.s32.totalorder %v3247, 1
      %vm3271 = vcmp.eq.s32.totalorder %v3248, 1
      %vm3272 = vcmp.eq.s32.totalorder %v3249, 1
      %vm3273 = vcmp.eq.s32.totalorder %v3250, 1
      %vm3274 = vcmp.eq.s32.totalorder %v3251, 1
      %vm3275 = vcmp.eq.s32.totalorder %v3252, 1
      %vm3276 = vcmp.eq.s32.totalorder %v3253, 1
      %vm3277 = vcmp.eq.s32.totalorder %v3254, 1
      %vm3278 = vcmp.eq.s32.totalorder %v3255, 1
      %vm3279 = vcmp.eq.s32.totalorder %v3256, 1
      %vm3280 = vcmp.eq.s32.totalorder %v3257, 1
      %vm3281 = vcmp.eq.s32.totalorder %v3258, 1
      %vm3282 = vcmp.eq.s32.totalorder %v3259, 1
      %vm3283 = vcmp.eq.s32.totalorder %v3260, 1
      %v3284 = vsel %vm3261, %v2697, 0.0
      %v3285 = vsel %vm3262, %v2698, 0.0
      %v3286 = vsel %vm3263, %v2699, 0.0
      %v3287 = vsel %vm3264, %v2700, 0.0
      %v3288 = vsel %vm3265, %v2701, 0.0
      %v3289 = vsel %vm3266, %v2702, 0.0
      %v3290 = vsel %vm3267, %v2703, 0.0
      %v3291 = vsel %vm3268, %v2704, 0.0
      %v3292 = vsel %vm3269, %v2705, 0.0
      %v3293 = vsel %vm3270, %v2706, 0.0
      %v3294 = vsel %vm3271, %v2707, 0.0
      %v3295 = vsel %vm3272, %v2708, 0.0
      %v3296 = vsel %vm3273, %v2709, 0.0
      %v3297 = vsel %vm3274, %v2710, 0.0
      %v3298 = vsel %vm3275, %v2711, 0.0
      %v3299 = vsel %vm3276, %v2712, 0.0
      %v3300 = vsel %vm3277, %v2713, 0.0
      %v3301 = vsel %vm3278, %v2714, 0.0
      %v3302 = vsel %vm3279, %v2715, 0.0
      %v3303 = vsel %vm3280, %v2716, 0.0
      %v3304 = vsel %vm3281, %v2717, 0.0
      %v3305 = vsel %vm3282, %v2718, 0.0
      %v3306 = vsel %vm3283, %v2719, 0.0
      %3307 = vst [vmem:[#allocation3] sm:$0x1] 0.0
      %3308 = vst [vmem:[#allocation3 + $0x1] sm:$0xff] %v3284
      %3309 = vst [vmem:[#allocation3 + $0x9] sm:$0xff] %v3285
      %3310 = vst [vmem:[#allocation3 + $0x11] sm:$0xff] %v3286
      %3311 = vst [vmem:[#allocation3 + $0x19] sm:$0xff] %v3287
      %3312 = vst [vmem:[#allocation3 + $0x21] sm:$0xff] %v3288
      %3313 = vst [vmem:[#allocation3 + $0x29] sm:$0xff] %v3289
      %3314 = vst [vmem:[#allocation3 + $0x31] sm:$0xff] %v3290
      %3315 = vst [vmem:[#allocation3 + $0x39] sm:$0xff] %v3291
      %3316 = vst [vmem:[#allocation3 + $0x41] sm:$0xff] %v3292
      %3317 = vst [vmem:[#allocation3 + $0x49] sm:$0xff] %v3293
      %3318 = vst [vmem:[#allocation3 + $0x51] sm:$0xff] %v3294
      %3319 = vst [vmem:[#allocation3 + $0x59] sm:$0xff] %v3295
      %3320 = vst [vmem:[#allocation3 + $0x61] sm:$0xff] %v3296
      %3321 = vst [vmem:[#allocation3 + $0x69] sm:$0xff] %v3297
      %3322 = vst [vmem:[#allocation3 + $0x71] sm:$0xff] %v3298
      %3323 = vst [vmem:[#allocation3 + $0x79] sm:$0xff] %v3299
      %3324 = vst [vmem:[#allocation3 + $0x81] sm:$0xff] %v3300
      %3325 = vst [vmem:[#allocation3 + $0x89] sm:$0xff] %v3301
      %3326 = vst [vmem:[#allocation3 + $0x91] sm:$0xff] %v3302
      %3327 = vst [vmem:[#allocation3 + $0x99] sm:$0xff] %v3303
      %3328 = vst [vmem:[#allocation3 + $0xa1] sm:$0xff] %v3304
      %3329 = vst [vmem:[#allocation3 + $0xa9] sm:$0xff] %v3305
      %3330 = vst [vmem:[#allocation3 + $0xb1] sm:$0xf] %v3306
      %3331 = vst [vmem:[#allocation3 + $0xb5] sm:$0xff] 0.0
      %v3332 = vld [vmem:[#allocation3] sm:$0xff]
      %v3333 = vld [vmem:[#allocation3 + $0x8] sm:$0xff]
      %v3334 = vld [vmem:[#allocation3 + $0x10] sm:$0xff]
      %v3335 = vld [vmem:[#allocation3 + $0x18] sm:$0xff]
      %v3336 = vld [vmem:[#allocation3 + $0x20] sm:$0xff]
      %v3337 = vld [vmem:[#allocation3 + $0x28] sm:$0xff]
      %v3338 = vld [vmem:[#allocation3 + $0x30] sm:$0xff]
      %v3339 = vld [vmem:[#allocation3 + $0x38] sm:$0xff]
      %v3340 = vld [vmem:[#allocation3 + $0x40] sm:$0xff]
      %v3341 = vld [vmem:[#allocation3 + $0x48] sm:$0xff]
      %v3342 = vld [vmem:[#allocation3 + $0x50] sm:$0xff]
      %v3343 = vld [vmem:[#allocation3 + $0x58] sm:$0xff]
      %v3344 = vld [vmem:[#allocation3 + $0x60] sm:$0xff]
      %v3345 = vld [vmem:[#allocation3 + $0x68] sm:$0xff]
      %v3346 = vld [vmem:[#allocation3 + $0x70] sm:$0xff]
      %v3347 = vld [vmem:[#allocation3 + $0x78] sm:$0xff]
      %v3348 = vld [vmem:[#allocation3 + $0x80] sm:$0xff]
      %v3349 = vld [vmem:[#allocation3 + $0x88] sm:$0xff]
      %v3350 = vld [vmem:[%s4] sm:$0xff]
      %v3351 = vld [vmem:[%s4 + $0x8] sm:$0xff]
      %v3352 = vld [vmem:[%s4 + $0x10] sm:$0xff]
      %v3353 = vld [vmem:[%s4 + $0x18] sm:$0xff]
      %v3354 = vld [vmem:[%s4 + $0x20] sm:$0xff]
      %v3355 = vld [vmem:[%s4 + $0x28] sm:$0xff]
      %v3356 = vld [vmem:[%s4 + $0x30] sm:$0xff]
      %v3357 = vld [vmem:[%s4 + $0x38] sm:$0xff]
      %v3358 = vld [vmem:[%s4 + $0x40] sm:$0xff]
      %v3359 = vld [vmem:[%s4 + $0x48] sm:$0xff]
      %v3360 = vld [vmem:[%s4 + $0x50] sm:$0xff]
      %v3361 = vld [vmem:[%s4 + $0x58] sm:$0xff]
      %v3362 = vld [vmem:[%s4 + $0x60] sm:$0xff]
      %v3363 = vld [vmem:[%s4 + $0x68] sm:$0xff]
      %v3364 = vld [vmem:[%s4 + $0x70] sm:$0xff]
      %v3365 = vld [vmem:[%s4 + $0x78] sm:$0xff]
      %v3366 = vld [vmem:[#allocation3 + $0x1] sm:$0xff]
      %v3367 = vld [vmem:[#allocation3 + $0x9] sm:$0xff]
      %v3368 = vld [vmem:[#allocation3 + $0x11] sm:$0xff]
      %v3369 = vld [vmem:[#allocation3 + $0x19] sm:$0xff]
      %v3370 = vld [vmem:[#allocation3 + $0x21] sm:$0xff]
      %v3371 = vld [vmem:[#allocation3 + $0x29] sm:$0xff]
      %v3372 = vld [vmem:[#allocation3 + $0x31] sm:$0xff]
      %v3373 = vld [vmem:[#allocation3 + $0x39] sm:$0xff]
      %v3374 = vld [vmem:[#allocation3 + $0x41] sm:$0xff]
      %v3375 = vld [vmem:[#allocation3 + $0x49] sm:$0xff]
      %v3376 = vld [vmem:[#allocation3 + $0x51] sm:$0xff]
      %v3377 = vld [vmem:[#allocation3 + $0x59] sm:$0xff]
      %v3378 = vld [vmem:[#allocation3 + $0x61] sm:$0xff]
      %v3379 = vld [vmem:[#allocation3 + $0x69] sm:$0xff]
      %v3380 = vld [vmem:[#allocation3 + $0x71] sm:$0xff]
      %v3381 = vld [vmem:[#allocation3 + $0x79] sm:$0xff]
      %v3382 = vld [vmem:[#allocation3 + $0x81] sm:$0xff]
      %v3383 = vld [vmem:[#allocation3 + $0x89] sm:$0xff]
      %s3384 = scalar_lea.vmem %s4, 128
      %v3385 = vld [vmem:[%s3384] sm:$0xff]
      %v3386 = vld [vmem:[%s3384 + $0x8] sm:$0xff]
      %v3387 = vld [vmem:[%s3384 + $0x10] sm:$0xff]
      %v3388 = vld [vmem:[%s3384 + $0x18] sm:$0xff]
      %v3389 = vld [vmem:[%s3384 + $0x20] sm:$0xff]
      %v3390 = vld [vmem:[%s3384 + $0x28] sm:$0xff]
      %v3391 = vld [vmem:[%s3384 + $0x30] sm:$0xff]
      %v3392 = vld [vmem:[%s3384 + $0x38] sm:$0xff]
      %v3393 = vld [vmem:[%s3384 + $0x40] sm:$0xff]
      %v3394 = vld [vmem:[%s3384 + $0x48] sm:$0xff]
      %v3395 = vld [vmem:[%s3384 + $0x50] sm:$0xff]
      %v3396 = vld [vmem:[%s3384 + $0x58] sm:$0xff]
      %v3397 = vld [vmem:[%s3384 + $0x60] sm:$0xff]
      %v3398 = vld [vmem:[%s3384 + $0x68] sm:$0xff]
      %v3399 = vld [vmem:[%s3384 + $0x70] sm:$0xff]
      %v3400 = vld [vmem:[%s3384 + $0x78] sm:$0xff]
      %3401 = vmatprep.subr.mxu0 0.0
      %3402 = vmatpush1.msra.mxu0 %v3400
      %3403 = vmatprep.subr.mxu0 0.0
      %3404 = vmatpush1.msra.mxu0 %v3399
      %3405 = vmatprep.subr.mxu0 0.0
      %3406 = vmatpush1.msra.mxu0 %v3398
      %3407 = vmatprep.subr.mxu0 0.0
      %3408 = vmatpush1.msra.mxu0 %v3397
      %3409 = vmatprep.subr.mxu0 0.0
      %3410 = vmatpush1.msra.mxu0 %v3396
      %3411 = vmatprep.subr.mxu0 0.0
      %3412 = vmatpush1.msra.mxu0 %v3395
      %3413 = vmatprep.subr.mxu0 0.0
      %3414 = vmatpush1.msra.mxu0 %v3394
      %3415 = vmatprep.subr.mxu0 0.0
      %3416 = vmatpush1.msra.mxu0 %v3393
      %3417 = vmatprep.subr.mxu0 0.0
      %3418 = vmatpush1.msra.mxu0 %v3392
      %3419 = vmatprep.subr.mxu0 0.0
      %3420 = vmatpush1.msra.mxu0 %v3391
      %3421 = vmatprep.subr.mxu0 0.0
      %3422 = vmatpush1.msra.mxu0 %v3390
      %3423 = vmatprep.subr.mxu0 0.0
      %3424 = vmatpush1.msra.mxu0 %v3389
      %3425 = vmatprep.subr.mxu0 0.0
      %3426 = vmatpush1.msra.mxu0 %v3388
      %3427 = vmatprep.subr.mxu0 0.0
      %3428 = vmatpush1.msra.mxu0 %v3387
      %3429 = vmatprep.subr.mxu0 0.0
      %3430 = vmatpush1.msra.mxu0 %v3386
      %3431 = vmatprep.subr.mxu0 0.0
      %3432 = vmatpush1.msra.mxu0 %v3385
      %3433 = vmatprep.subr.mxu0 0.0
      %3434 = vmatpush2.msra.mxu0 0.0
      %3435 = vmatprep.subr.mxu0 0.0
      %3436 = vmatpush2.msra.mxu0 0.0
      %3437 = vmatprep.subr.mxu0 0.0
      %3438 = vmatpush2.msra.mxu0 0.0
      %3439 = vmatprep.subr.mxu0 0.0
      %3440 = vmatpush2.msra.mxu0 0.0
      %3441 = vmatprep.subr.mxu0 0.0
      %3442 = vmatpush2.msra.mxu0 0.0
      %3443 = vmatprep.subr.mxu0 0.0
      %3444 = vmatpush2.msra.mxu0 0.0
      %3445 = vmatprep.subr.mxu0 0.0
      %3446 = vmatpush2.msra.mxu0 0.0
      %3447 = vmatprep.subr.mxu0 0.0
      %3448 = vmatpush2.msra.mxu0 0.0
      %3449 = vmatprep.subr.mxu0 0.0
      %3450 = vmatpush2.msra.mxu0 0.0
      %3451 = vmatprep.subr.mxu0 0.0
      %3452 = vmatpush2.msra.mxu0 0.0
      %3453 = vmatprep.subr.mxu0 0.0
      %3454 = vmatpush2.msra.mxu0 0.0
      %3455 = vmatprep.subr.mxu0 0.0
      %3456 = vmatpush2.msra.mxu0 0.0
      %3457 = vmatprep.subr.mxu0 0.0
      %3458 = vmatpush2.msra.mxu0 0.0
      %3459 = vmatprep.subr.mxu0 0.0
      %3460 = vmatpush2.msra.mxu0 0.0
      %3461 = vmatprep.subr.mxu0 0.0
      %3462 = vmatpush2.msra.mxu0 0.0
      %3463 = vmatprep.subr.mxu0 0.0
      %3464 = vmatpush2.msra.mxu0 0.0
      %3465 = vmatprep.mubr.f32.mxu0 0.0
      %3466 = vmatmul.mubr.f32.gmra.mxu0 %v3366
      %v3467 = vpop.f32.mrf.mxu0
      %v3468 = vadd.f32 0.0, %v3467
      %v3469 = vpop.f32.mrf.mxu0
      %3470 = vmatprep.mubr.f32.mxu0 0.0
      %3471 = vmatmul.mubr.f32.gmra.mxu0 %v3367
      %v3472 = vpop.f32.mrf.mxu0
      %v3473 = vadd.f32 0.0, %v3472
      %v3474 = vpop.f32.mrf.mxu0
      %3475 = vmatprep.mubr.f32.mxu0 0.0
      %3476 = vmatmul.mubr.f32.gmra.mxu0 %v3368
      %v3477 = vpop.f32.mrf.mxu0
      %v3478 = vadd.f32 0.0, %v3477
      %v3479 = vpop.f32.mrf.mxu0
      %3480 = vmatprep.mubr.f32.mxu0 0.0
      %3481 = vmatmul.mubr.f32.gmra.mxu0 %v3369
      %v3482 = vpop.f32.mrf.mxu0
      %v3483 = vadd.f32 0.0, %v3482
      %v3484 = vpop.f32.mrf.mxu0
      %3485 = vmatprep.mubr.f32.mxu0 0.0
      %3486 = vmatmul.mubr.f32.gmra.mxu0 %v3370
      %v3487 = vpop.f32.mrf.mxu0
      %v3488 = vadd.f32 0.0, %v3487
      %v3489 = vpop.f32.mrf.mxu0
      %3490 = vmatprep.mubr.f32.mxu0 0.0
      %3491 = vmatmul.mubr.f32.gmra.mxu0 %v3371
      %v3492 = vpop.f32.mrf.mxu0
      %v3493 = vadd.f32 0.0, %v3492
      %v3494 = vpop.f32.mrf.mxu0
      %3495 = vmatprep.mubr.f32.mxu0 0.0
      %3496 = vmatmul.mubr.f32.gmra.mxu0 %v3372
      %v3497 = vpop.f32.mrf.mxu0
      %v3498 = vadd.f32 0.0, %v3497
      %v3499 = vpop.f32.mrf.mxu0
      %3500 = vmatprep.mubr.f32.mxu0 0.0
      %3501 = vmatmul.mubr.f32.gmra.mxu0 %v3373
      %v3502 = vpop.f32.mrf.mxu0
      %v3503 = vadd.f32 0.0, %v3502
      %v3504 = vpop.f32.mrf.mxu0
      %3505 = vmatprep.mubr.f32.mxu0 0.0
      %3506 = vmatmul.mubr.f32.gmra.mxu0 %v3374
      %v3507 = vpop.f32.mrf.mxu0
      %v3508 = vadd.f32 0.0, %v3507
      %v3509 = vpop.f32.mrf.mxu0
      %3510 = vmatprep.mubr.f32.mxu0 0.0
      %3511 = vmatmul.mubr.f32.gmra.mxu0 %v3375
      %v3512 = vpop.f32.mrf.mxu0
      %v3513 = vadd.f32 0.0, %v3512
      %v3514 = vpop.f32.mrf.mxu0
      %3515 = vmatprep.mubr.f32.mxu0 0.0
      %3516 = vmatmul.mubr.f32.gmra.mxu0 %v3376
      %v3517 = vpop.f32.mrf.mxu0
      %v3518 = vadd.f32 0.0, %v3517
      %v3519 = vpop.f32.mrf.mxu0
      %3520 = vmatprep.mubr.f32.mxu0 0.0
      %3521 = vmatmul.mubr.f32.gmra.mxu0 %v3377
      %v3522 = vpop.f32.mrf.mxu0
      %v3523 = vadd.f32 0.0, %v3522
      %v3524 = vpop.f32.mrf.mxu0
      %3525 = vmatprep.mubr.f32.mxu0 0.0
      %3526 = vmatmul.mubr.f32.gmra.mxu0 %v3378
      %v3527 = vpop.f32.mrf.mxu0
      %v3528 = vadd.f32 0.0, %v3527
      %v3529 = vpop.f32.mrf.mxu0
      %3530 = vmatprep.mubr.f32.mxu0 0.0
      %3531 = vmatmul.mubr.f32.gmra.mxu0 %v3379
      %v3532 = vpop.f32.mrf.mxu0
      %v3533 = vadd.f32 0.0, %v3532
      %v3534 = vpop.f32.mrf.mxu0
      %3535 = vmatprep.mubr.f32.mxu0 0.0
      %3536 = vmatmul.mubr.f32.gmra.mxu0 %v3380
      %v3537 = vpop.f32.mrf.mxu0
      %v3538 = vadd.f32 0.0, %v3537
      %v3539 = vpop.f32.mrf.mxu0
      %3540 = vmatprep.mubr.f32.mxu0 0.0
      %3541 = vmatmul.mubr.f32.gmra.mxu0 %v3381
      %v3542 = vpop.f32.mrf.mxu0
      %v3543 = vadd.f32 0.0, %v3542
      %v3544 = vpop.f32.mrf.mxu0
      %3545 = vmatprep.mubr.f32.mxu0 0.0
      %3546 = vmatmul.mubr.f32.gmra.mxu0 %v3382
      %v3547 = vpop.f32.mrf.mxu0
      %v3548 = vadd.f32 0.0, %v3547
      %v3549 = vpop.f32.mrf.mxu0
      %3550 = vmatprep.mubr.f32.mxu0 0.0
      %3551 = vmatmul.mubr.f32.gmra.mxu0 %v3383
      %v3552 = vpop.f32.mrf.mxu0
      %v3553 = vadd.f32 0.0, %v3552
      %v3554 = vpop.f32.mrf.mxu0
      %3555 = vdwg.mxu0
      %3556 = vmatprep.subr.mxu0 0.0
      %3557 = vmatpush1.msra.mxu0 %v3365
      %3558 = vmatprep.subr.mxu0 0.0
      %3559 = vmatpush1.msra.mxu0 %v3364
      %3560 = vmatprep.subr.mxu0 0.0
      %3561 = vmatpush1.msra.mxu0 %v3363
      %3562 = vmatprep.subr.mxu0 0.0
      %3563 = vmatpush1.msra.mxu0 %v3362
      %3564 = vmatprep.subr.mxu0 0.0
      %3565 = vmatpush1.msra.mxu0 %v3361
      %3566 = vmatprep.subr.mxu0 0.0
      %3567 = vmatpush1.msra.mxu0 %v3360
      %3568 = vmatprep.subr.mxu0 0.0
      %3569 = vmatpush1.msra.mxu0 %v3359
      %3570 = vmatprep.subr.mxu0 0.0
      %3571 = vmatpush1.msra.mxu0 %v3358
      %3572 = vmatprep.subr.mxu0 0.0
      %3573 = vmatpush1.msra.mxu0 %v3357
      %3574 = vmatprep.subr.mxu0 0.0
      %3575 = vmatpush1.msra.mxu0 %v3356
      %3576 = vmatprep.subr.mxu0 0.0
      %3577 = vmatpush1.msra.mxu0 %v3355
      %3578 = vmatprep.subr.mxu0 0.0
      %3579 = vmatpush1.msra.mxu0 %v3354
      %3580 = vmatprep.subr.mxu0 0.0
      %3581 = vmatpush1.msra.mxu0 %v3353
      %3582 = vmatprep.subr.mxu0 0.0
      %3583 = vmatpush1.msra.mxu0 %v3352
      %3584 = vmatprep.subr.mxu0 0.0
      %3585 = vmatpush1.msra.mxu0 %v3351
      %3586 = vmatprep.subr.mxu0 0.0
      %3587 = vmatpush1.msra.mxu0 %v3350
      %3588 = vmatprep.subr.mxu0 0.0
      %3589 = vmatpush2.msra.mxu0 0.0
      %3590 = vmatprep.subr.mxu0 0.0
      %3591 = vmatpush2.msra.mxu0 0.0
      %3592 = vmatprep.subr.mxu0 0.0
      %3593 = vmatpush2.msra.mxu0 0.0
      %3594 = vmatprep.subr.mxu0 0.0
      %3595 = vmatpush2.msra.mxu0 0.0
      %3596 = vmatprep.subr.mxu0 0.0
      %3597 = vmatpush2.msra.mxu0 0.0
      %3598 = vmatprep.subr.mxu0 0.0
      %3599 = vmatpush2.msra.mxu0 0.0
      %3600 = vmatprep.subr.mxu0 0.0
      %3601 = vmatpush2.msra.mxu0 0.0
      %3602 = vmatprep.subr.mxu0 0.0
      %3603 = vmatpush2.msra.mxu0 0.0
      %3604 = vmatprep.subr.mxu0 0.0
      %3605 = vmatpush2.msra.mxu0 0.0
      %3606 = vmatprep.subr.mxu0 0.0
      %3607 = vmatpush2.msra.mxu0 0.0
      %3608 = vmatprep.subr.mxu0 0.0
      %3609 = vmatpush2.msra.mxu0 0.0
      %3610 = vmatprep.subr.mxu0 0.0
      %3611 = vmatpush2.msra.mxu0 0.0
      %3612 = vmatprep.subr.mxu0 0.0
      %3613 = vmatpush2.msra.mxu0 0.0
      %3614 = vmatprep.subr.mxu0 0.0
      %3615 = vmatpush2.msra.mxu0 0.0
      %3616 = vmatprep.subr.mxu0 0.0
      %3617 = vmatpush2.msra.mxu0 0.0
      %3618 = vmatprep.subr.mxu0 0.0
      %3619 = vmatpush2.msra.mxu0 0.0
      %3620 = vmatprep.mubr.f32.mxu0 0.0
      %3621 = vmatmul.mubr.f32.gmra.mxu0 %v3332
      %v3622 = vpop.f32.mrf.mxu0
      %v3623 = vadd.f32 %v3468, %v3622
      %v3624 = vpop.f32.mrf.mxu0
      %3625 = vmatprep.mubr.f32.mxu0 0.0
      %3626 = vmatmul.mubr.f32.gmra.mxu0 %v3333
      %v3627 = vpop.f32.mrf.mxu0
      %v3628 = vadd.f32 %v3473, %v3627
      %v3629 = vpop.f32.mrf.mxu0
      %3630 = vmatprep.mubr.f32.mxu0 0.0
      %3631 = vmatmul.mubr.f32.gmra.mxu0 %v3334
      %v3632 = vpop.f32.mrf.mxu0
      %v3633 = vadd.f32 %v3478, %v3632
      %v3634 = vpop.f32.mrf.mxu0
      %3635 = vmatprep.mubr.f32.mxu0 0.0
      %3636 = vmatmul.mubr.f32.gmra.mxu0 %v3335
      %v3637 = vpop.f32.mrf.mxu0
      %v3638 = vadd.f32 %v3483, %v3637
      %v3639 = vpop.f32.mrf.mxu0
      %3640 = vmatprep.mubr.f32.mxu0 0.0
      %3641 = vmatmul.mubr.f32.gmra.mxu0 %v3336
      %v3642 = vpop.f32.mrf.mxu0
      %v3643 = vadd.f32 %v3488, %v3642
      %v3644 = vpop.f32.mrf.mxu0
      %3645 = vmatprep.mubr.f32.mxu0 0.0
      %3646 = vmatmul.mubr.f32.gmra.mxu0 %v3337
      %v3647 = vpop.f32.mrf.mxu0
      %v3648 = vadd.f32 %v3493, %v3647
      %v3649 = vpop.f32.mrf.mxu0
      %3650 = vmatprep.mubr.f32.mxu0 0.0
      %3651 = vmatmul.mubr.f32.gmra.mxu0 %v3338
      %v3652 = vpop.f32.mrf.mxu0
      %v3653 = vadd.f32 %v3498, %v3652
      %v3654 = vpop.f32.mrf.mxu0
      %3655 = vmatprep.mubr.f32.mxu0 0.0
      %3656 = vmatmul.mubr.f32.gmra.mxu0 %v3339
      %v3657 = vpop.f32.mrf.mxu0
      %v3658 = vadd.f32 %v3503, %v3657
      %v3659 = vpop.f32.mrf.mxu0
      %3660 = vmatprep.mubr.f32.mxu0 0.0
      %3661 = vmatmul.mubr.f32.gmra.mxu0 %v3340
      %v3662 = vpop.f32.mrf.mxu0
      %v3663 = vadd.f32 %v3508, %v3662
      %v3664 = vpop.f32.mrf.mxu0
      %3665 = vmatprep.mubr.f32.mxu0 0.0
      %3666 = vmatmul.mubr.f32.gmra.mxu0 %v3341
      %v3667 = vpop.f32.mrf.mxu0
      %v3668 = vadd.f32 %v3513, %v3667
      %v3669 = vpop.f32.mrf.mxu0
      %3670 = vmatprep.mubr.f32.mxu0 0.0
      %3671 = vmatmul.mubr.f32.gmra.mxu0 %v3342
      %v3672 = vpop.f32.mrf.mxu0
      %v3673 = vadd.f32 %v3518, %v3672
      %v3674 = vpop.f32.mrf.mxu0
      %3675 = vmatprep.mubr.f32.mxu0 0.0
      %3676 = vmatmul.mubr.f32.gmra.mxu0 %v3343
      %v3677 = vpop.f32.mrf.mxu0
      %v3678 = vadd.f32 %v3523, %v3677
      %v3679 = vpop.f32.mrf.mxu0
      %3680 = vmatprep.mubr.f32.mxu0 0.0
      %3681 = vmatmul.mubr.f32.gmra.mxu0 %v3344
      %v3682 = vpop.f32.mrf.mxu0
      %v3683 = vadd.f32 %v3528, %v3682
      %v3684 = vpop.f32.mrf.mxu0
      %3685 = vmatprep.mubr.f32.mxu0 0.0
      %3686 = vmatmul.mubr.f32.gmra.mxu0 %v3345
      %v3687 = vpop.f32.mrf.mxu0
      %v3688 = vadd.f32 %v3533, %v3687
      %v3689 = vpop.f32.mrf.mxu0
      %3690 = vmatprep.mubr.f32.mxu0 0.0
      %3691 = vmatmul.mubr.f32.gmra.mxu0 %v3346
      %v3692 = vpop.f32.mrf.mxu0
      %v3693 = vadd.f32 %v3538, %v3692
      %v3694 = vpop.f32.mrf.mxu0
      %3695 = vmatprep.mubr.f32.mxu0 0.0
      %3696 = vmatmul.mubr.f32.gmra.mxu0 %v3347
      %v3697 = vpop.f32.mrf.mxu0
      %v3698 = vadd.f32 %v3543, %v3697
      %v3699 = vpop.f32.mrf.mxu0
      %3700 = vmatprep.mubr.f32.mxu0 0.0
      %3701 = vmatmul.mubr.f32.gmra.mxu0 %v3348
      %v3702 = vpop.f32.mrf.mxu0
      %v3703 = vadd.f32 %v3548, %v3702
      %v3704 = vpop.f32.mrf.mxu0
      %3705 = vmatprep.mubr.f32.mxu0 0.0
      %3706 = vmatmul.mubr.f32.gmra.mxu0 %v3349
      %v3707 = vpop.f32.mrf.mxu0
      %v3708 = vadd.f32 %v3553, %v3707
      %v3709 = vpop.f32.mrf.mxu0
      %3710 = vdwg.mxu0
      %v3711 = vld [vmem:[#allocation3 + $0x2] sm:$0xff]
      %v3712 = vld [vmem:[#allocation3 + $0xa] sm:$0xff]
      %v3713 = vld [vmem:[#allocation3 + $0x12] sm:$0xff]
      %v3714 = vld [vmem:[#allocation3 + $0x1a] sm:$0xff]
      %v3715 = vld [vmem:[#allocation3 + $0x22] sm:$0xff]
      %v3716 = vld [vmem:[#allocation3 + $0x2a] sm:$0xff]
      %v3717 = vld [vmem:[#allocation3 + $0x32] sm:$0xff]
      %v3718 = vld [vmem:[#allocation3 + $0x3a] sm:$0xff]
      %v3719 = vld [vmem:[#allocation3 + $0x42] sm:$0xff]
      %v3720 = vld [vmem:[#allocation3 + $0x4a] sm:$0xff]
      %v3721 = vld [vmem:[#allocation3 + $0x52] sm:$0xff]
      %v3722 = vld [vmem:[#allocation3 + $0x5a] sm:$0xff]
      %v3723 = vld [vmem:[#allocation3 + $0x62] sm:$0xff]
      %v3724 = vld [vmem:[#allocation3 + $0x6a] sm:$0xff]
      %v3725 = vld [vmem:[#allocation3 + $0x72] sm:$0xff]
      %v3726 = vld [vmem:[#allocation3 + $0x7a] sm:$0xff]
      %v3727 = vld [vmem:[#allocation3 + $0x82] sm:$0xff]
      %v3728 = vld [vmem:[#allocation3 + $0x8a] sm:$0xff]
      %s3729 = scalar_lea.vmem %s4, 256
      %v3730 = vld [vmem:[%s3729] sm:$0xff]
      %v3731 = vld [vmem:[%s3729 + $0x8] sm:$0xff]
      %v3732 = vld [vmem:[%s3729 + $0x10] sm:$0xff]
      %v3733 = vld [vmem:[%s3729 + $0x18] sm:$0xff]
      %v3734 = vld [vmem:[%s3729 + $0x20] sm:$0xff]
      %v3735 = vld [vmem:[%s3729 + $0x28] sm:$0xff]
      %v3736 = vld [vmem:[%s3729 + $0x30] sm:$0xff]
      %v3737 = vld [vmem:[%s3729 + $0x38] sm:$0xff]
      %v3738 = vld [vmem:[%s3729 + $0x40] sm:$0xff]
      %v3739 = vld [vmem:[%s3729 + $0x48] sm:$0xff]
      %v3740 = vld [vmem:[%s3729 + $0x50] sm:$0xff]
      %v3741 = vld [vmem:[%s3729 + $0x58] sm:$0xff]
      %v3742 = vld [vmem:[%s3729 + $0x60] sm:$0xff]
      %v3743 = vld [vmem:[%s3729 + $0x68] sm:$0xff]
      %v3744 = vld [vmem:[%s3729 + $0x70] sm:$0xff]
      %v3745 = vld [vmem:[%s3729 + $0x78] sm:$0xff]
      %3746 = vmatprep.subr.mxu0 0.0
      %3747 = vmatpush1.msra.mxu0 %v3745
      %3748 = vmatprep.subr.mxu0 0.0
      %3749 = vmatpush1.msra.mxu0 %v3744
      %3750 = vmatprep.subr.mxu0 0.0
      %3751 = vmatpush1.msra.mxu0 %v3743
      %3752 = vmatprep.subr.mxu0 0.0
      %3753 = vmatpush1.msra.mxu0 %v3742
      %3754 = vmatprep.subr.mxu0 0.0
      %3755 = vmatpush1.msra.mxu0 %v3741
      %3756 = vmatprep.subr.mxu0 0.0
      %3757 = vmatpush1.msra.mxu0 %v3740
      %3758 = vmatprep.subr.mxu0 0.0
      %3759 = vmatpush1.msra.mxu0 %v3739
      %3760 = vmatprep.subr.mxu0 0.0
      %3761 = vmatpush1.msra.mxu0 %v3738
      %3762 = vmatprep.subr.mxu0 0.0
      %3763 = vmatpush1.msra.mxu0 %v3737
      %3764 = vmatprep.subr.mxu0 0.0
      %3765 = vmatpush1.msra.mxu0 %v3736
      %3766 = vmatprep.subr.mxu0 0.0
      %3767 = vmatpush1.msra.mxu0 %v3735
      %3768 = vmatprep.subr.mxu0 0.0
      %3769 = vmatpush1.msra.mxu0 %v3734
      %3770 = vmatprep.subr.mxu0 0.0
      %3771 = vmatpush1.msra.mxu0 %v3733
      %3772 = vmatprep.subr.mxu0 0.0
      %3773 = vmatpush1.msra.mxu0 %v3732
      %3774 = vmatprep.subr.mxu0 0.0
      %3775 = vmatpush1.msra.mxu0 %v3731
      %3776 = vmatprep.subr.mxu0 0.0
      %3777 = vmatpush1.msra.mxu0 %v3730
      %3778 = vmatprep.subr.mxu0 0.0
      %3779 = vmatpush2.msra.mxu0 0.0
      %3780 = vmatprep.subr.mxu0 0.0
      %3781 = vmatpush2.msra.mxu0 0.0
      %3782 = vmatprep.subr.mxu0 0.0
      %3783 = vmatpush2.msra.mxu0 0.0
      %3784 = vmatprep.subr.mxu0 0.0
      %3785 = vmatpush2.msra.mxu0 0.0
      %3786 = vmatprep.subr.mxu0 0.0
      %3787 = vmatpush2.msra.mxu0 0.0
      %3788 = vmatprep.subr.mxu0 0.0
      %3789 = vmatpush2.msra.mxu0 0.0
      %3790 = vmatprep.subr.mxu0 0.0
      %3791 = vmatpush2.msra.mxu0 0.0
      %3792 = vmatprep.subr.mxu0 0.0
      %3793 = vmatpush2.msra.mxu0 0.0
      %3794 = vmatprep.subr.mxu0 0.0
      %3795 = vmatpush2.msra.mxu0 0.0
      %3796 = vmatprep.subr.mxu0 0.0
      %3797 = vmatpush2.msra.mxu0 0.0
      %3798 = vmatprep.subr.mxu0 0.0
      %3799 = vmatpush2.msra.mxu0 0.0
      %3800 = vmatprep.subr.mxu0 0.0
      %3801 = vmatpush2.msra.mxu0 0.0
      %3802 = vmatprep.subr.mxu0 0.0
      %3803 = vmatpush2.msra.mxu0 0.0
      %3804 = vmatprep.subr.mxu0 0.0
      %3805 = vmatpush2.msra.mxu0 0.0
      %3806 = vmatprep.subr.mxu0 0.0
      %3807 = vmatpush2.msra.mxu0 0.0
      %3808 = vmatprep.subr.mxu0 0.0
      %3809 = vmatpush2.msra.mxu0 0.0
      %3810 = vmatprep.mubr.f32.mxu0 0.0
      %3811 = vmatmul.mubr.f32.gmra.mxu0 %v3711
      %v3812 = vpop.f32.mrf.mxu0
      %v3813 = vadd.f32 0.0, %v3812
      %v3814 = vpop.f32.mrf.mxu0
      %3815 = vmatprep.mubr.f32.mxu0 0.0
      %3816 = vmatmul.mubr.f32.gmra.mxu0 %v3712
      %v3817 = vpop.f32.mrf.mxu0
      %v3818 = vadd.f32 0.0, %v3817
      %v3819 = vpop.f32.mrf.mxu0
      %3820 = vmatprep.mubr.f32.mxu0 0.0
      %3821 = vmatmul.mubr.f32.gmra.mxu0 %v3713
      %v3822 = vpop.f32.mrf.mxu0
      %v3823 = vadd.f32 0.0, %v3822
      %v3824 = vpop.f32.mrf.mxu0
      %3825 = vmatprep.mubr.f32.mxu0 0.0
      %3826 = vmatmul.mubr.f32.gmra.mxu0 %v3714
      %v3827 = vpop.f32.mrf.mxu0
      %v3828 = vadd.f32 0.0, %v3827
      %v3829 = vpop.f32.mrf.mxu0
      %3830 = vmatprep.mubr.f32.mxu0 0.0
      %3831 = vmatmul.mubr.f32.gmra.mxu0 %v3715
      %v3832 = vpop.f32.mrf.mxu0
      %v3833 = vadd.f32 0.0, %v3832
      %v3834 = vpop.f32.mrf.mxu0
      %3835 = vmatprep.mubr.f32.mxu0 0.0
      %3836 = vmatmul.mubr.f32.gmra.mxu0 %v3716
      %v3837 = vpop.f32.mrf.mxu0
      %v3838 = vadd.f32 0.0, %v3837
      %v3839 = vpop.f32.mrf.mxu0
      %3840 = vmatprep.mubr.f32.mxu0 0.0
      %3841 = vmatmul.mubr.f32.gmra.mxu0 %v3717
      %v3842 = vpop.f32.mrf.mxu0
      %v3843 = vadd.f32 0.0, %v3842
      %v3844 = vpop.f32.mrf.mxu0
      %3845 = vmatprep.mubr.f32.mxu0 0.0
      %3846 = vmatmul.mubr.f32.gmra.mxu0 %v3718
      %v3847 = vpop.f32.mrf.mxu0
      %v3848 = vadd.f32 0.0, %v3847
      %v3849 = vpop.f32.mrf.mxu0
      %3850 = vmatprep.mubr.f32.mxu0 0.0
      %3851 = vmatmul.mubr.f32.gmra.mxu0 %v3719
      %v3852 = vpop.f32.mrf.mxu0
      %v3853 = vadd.f32 0.0, %v3852
      %v3854 = vpop.f32.mrf.mxu0
      %3855 = vmatprep.mubr.f32.mxu0 0.0
      %3856 = vmatmul.mubr.f32.gmra.mxu0 %v3720
      %v3857 = vpop.f32.mrf.mxu0
      %v3858 = vadd.f32 0.0, %v3857
      %v3859 = vpop.f32.mrf.mxu0
      %3860 = vmatprep.mubr.f32.mxu0 0.0
      %3861 = vmatmul.mubr.f32.gmra.mxu0 %v3721
      %v3862 = vpop.f32.mrf.mxu0
      %v3863 = vadd.f32 0.0, %v3862
      %v3864 = vpop.f32.mrf.mxu0
      %3865 = vmatprep.mubr.f32.mxu0 0.0
      %3866 = vmatmul.mubr.f32.gmra.mxu0 %v3722
      %v3867 = vpop.f32.mrf.mxu0
      %v3868 = vadd.f32 0.0, %v3867
      %v3869 = vpop.f32.mrf.mxu0
      %3870 = vmatprep.mubr.f32.mxu0 0.0
      %3871 = vmatmul.mubr.f32.gmra.mxu0 %v3723
      %v3872 = vpop.f32.mrf.mxu0
      %v3873 = vadd.f32 0.0, %v3872
      %v3874 = vpop.f32.mrf.mxu0
      %3875 = vmatprep.mubr.f32.mxu0 0.0
      %3876 = vmatmul.mubr.f32.gmra.mxu0 %v3724
      %v3877 = vpop.f32.mrf.mxu0
      %v3878 = vadd.f32 0.0, %v3877
      %v3879 = vpop.f32.mrf.mxu0
      %3880 = vmatprep.mubr.f32.mxu0 0.0
      %3881 = vmatmul.mubr.f32.gmra.mxu0 %v3725
      %v3882 = vpop.f32.mrf.mxu0
      %v3883 = vadd.f32 0.0, %v3882
      %v3884 = vpop.f32.mrf.mxu0
      %3885 = vmatprep.mubr.f32.mxu0 0.0
      %3886 = vmatmul.mubr.f32.gmra.mxu0 %v3726
      %v3887 = vpop.f32.mrf.mxu0
      %v3888 = vadd.f32 0.0, %v3887
      %v3889 = vpop.f32.mrf.mxu0
      %3890 = vmatprep.mubr.f32.mxu0 0.0
      %3891 = vmatmul.mubr.f32.gmra.mxu0 %v3727
      %v3892 = vpop.f32.mrf.mxu0
      %v3893 = vadd.f32 0.0, %v3892
      %v3894 = vpop.f32.mrf.mxu0
      %3895 = vmatprep.mubr.f32.mxu0 0.0
      %3896 = vmatmul.mubr.f32.gmra.mxu0 %v3728
      %v3897 = vpop.f32.mrf.mxu0
      %v3898 = vadd.f32 0.0, %v3897
      %v3899 = vpop.f32.mrf.mxu0
      %3900 = vdwg.mxu0
      %v3901 = vadd.f32 %v3623, %v3813
      %v3902 = vadd.f32 %v3628, %v3818
      %v3903 = vadd.f32 %v3633, %v3823
      %v3904 = vadd.f32 %v3638, %v3828
      %v3905 = vadd.f32 %v3643, %v3833
      %v3906 = vadd.f32 %v3648, %v3838
      %v3907 = vadd.f32 %v3653, %v3843
      %v3908 = vadd.f32 %v3658, %v3848
      %v3909 = vadd.f32 %v3663, %v3853
      %v3910 = vadd.f32 %v3668, %v3858
      %v3911 = vadd.f32 %v3673, %v3863
      %v3912 = vadd.f32 %v3678, %v3868
      %v3913 = vadd.f32 %v3683, %v3873
      %v3914 = vadd.f32 %v3688, %v3878
      %v3915 = vadd.f32 %v3693, %v3883
      %v3916 = vadd.f32 %v3698, %v3888
      %v3917 = vadd.f32 %v3703, %v3893
      %v3918 = vadd.f32 %v3708, %v3898
      %v3919 = vld [vmem:[#allocation3 + $0x12] sm:$0xff]
      %v3920 = vld [vmem:[#allocation3 + $0x1a] sm:$0xff]
      %v3921 = vld [vmem:[#allocation3 + $0x22] sm:$0xff]
      %v3922 = vld [vmem:[#allocation3 + $0x2a] sm:$0xff]
      %v3923 = vld [vmem:[#allocation3 + $0x32] sm:$0xff]
      %v3924 = vld [vmem:[#allocation3 + $0x3a] sm:$0xff]
      %v3925 = vld [vmem:[#allocation3 + $0x42] sm:$0xff]
      %v3926 = vld [vmem:[#allocation3 + $0x4a] sm:$0xff]
      %v3927 = vld [vmem:[#allocation3 + $0x52] sm:$0xff]
      %v3928 = vld [vmem:[#allocation3 + $0x5a] sm:$0xff]
      %v3929 = vld [vmem:[#allocation3 + $0x62] sm:$0xff]
      %v3930 = vld [vmem:[#allocation3 + $0x6a] sm:$0xff]
      %v3931 = vld [vmem:[#allocation3 + $0x72] sm:$0xff]
      %v3932 = vld [vmem:[#allocation3 + $0x7a] sm:$0xff]
      %v3933 = vld [vmem:[#allocation3 + $0x82] sm:$0xff]
      %v3934 = vld [vmem:[#allocation3 + $0x8a] sm:$0xff]
      %v3935 = vld [vmem:[#allocation3 + $0x92] sm:$0xff]
      %v3936 = vld [vmem:[#allocation3 + $0x9a] sm:$0xff]
      %s3937 = scalar_lea.vmem %s4, 384
      %v3938 = vld [vmem:[%s3937] sm:$0xff]
      %v3939 = vld [vmem:[%s3937 + $0x8] sm:$0xff]
      %v3940 = vld [vmem:[%s3937 + $0x10] sm:$0xff]
      %v3941 = vld [vmem:[%s3937 + $0x18] sm:$0xff]
      %v3942 = vld [vmem:[%s3937 + $0x20] sm:$0xff]
      %v3943 = vld [vmem:[%s3937 + $0x28] sm:$0xff]
      %v3944 = vld [vmem:[%s3937 + $0x30] sm:$0xff]
      %v3945 = vld [vmem:[%s3937 + $0x38] sm:$0xff]
      %v3946 = vld [vmem:[%s3937 + $0x40] sm:$0xff]
      %v3947 = vld [vmem:[%s3937 + $0x48] sm:$0xff]
      %v3948 = vld [vmem:[%s3937 + $0x50] sm:$0xff]
      %v3949 = vld [vmem:[%s3937 + $0x58] sm:$0xff]
      %v3950 = vld [vmem:[%s3937 + $0x60] sm:$0xff]
      %v3951 = vld [vmem:[%s3937 + $0x68] sm:$0xff]
      %v3952 = vld [vmem:[%s3937 + $0x70] sm:$0xff]
      %v3953 = vld [vmem:[%s3937 + $0x78] sm:$0xff]
      %3954 = vmatprep.subr.mxu0 0.0
      %3955 = vmatpush1.msra.mxu0 %v3953
      %3956 = vmatprep.subr.mxu0 0.0
      %3957 = vmatpush1.msra.mxu0 %v3952
      %3958 = vmatprep.subr.mxu0 0.0
      %3959 = vmatpush1.msra.mxu0 %v3951
      %3960 = vmatprep.subr.mxu0 0.0
      %3961 = vmatpush1.msra.mxu0 %v3950
      %3962 = vmatprep.subr.mxu0 0.0
      %3963 = vmatpush1.msra.mxu0 %v3949
      %3964 = vmatprep.subr.mxu0 0.0
      %3965 = vmatpush1.msra.mxu0 %v3948
      %3966 = vmatprep.subr.mxu0 0.0
      %3967 = vmatpush1.msra.mxu0 %v3947
      %3968 = vmatprep.subr.mxu0 0.0
      %3969 = vmatpush1.msra.mxu0 %v3946
      %3970 = vmatprep.subr.mxu0 0.0
      %3971 = vmatpush1.msra.mxu0 %v3945
      %3972 = vmatprep.subr.mxu0 0.0
      %3973 = vmatpush1.msra.mxu0 %v3944
      %3974 = vmatprep.subr.mxu0 0.0
      %3975 = vmatpush1.msra.mxu0 %v3943
      %3976 = vmatprep.subr.mxu0 0.0
      %3977 = vmatpush1.msra.mxu0 %v3942
      %3978 = vmatprep.subr.mxu0 0.0
      %3979 = vmatpush1.msra.mxu0 %v3941
      %3980 = vmatprep.subr.mxu0 0.0
      %3981 = vmatpush1.msra.mxu0 %v3940
      %3982 = vmatprep.subr.mxu0 0.0
      %3983 = vmatpush1.msra.mxu0 %v3939
      %3984 = vmatprep.subr.mxu0 0.0
      %3985 = vmatpush1.msra.mxu0 %v3938
      %3986 = vmatprep.subr.mxu0 0.0
      %3987 = vmatpush2.msra.mxu0 0.0
      %3988 = vmatprep.subr.mxu0 0.0
      %3989 = vmatpush2.msra.mxu0 0.0
      %3990 = vmatprep.subr.mxu0 0.0
      %3991 = vmatpush2.msra.mxu0 0.0
      %3992 = vmatprep.subr.mxu0 0.0
      %3993 = vmatpush2.msra.mxu0 0.0
      %3994 = vmatprep.subr.mxu0 0.0
      %3995 = vmatpush2.msra.mxu0 0.0
      %3996 = vmatprep.subr.mxu0 0.0
      %3997 = vmatpush2.msra.mxu0 0.0
      %3998 = vmatprep.subr.mxu0 0.0
      %3999 = vmatpush2.msra.mxu0 0.0
      %4000 = vmatprep.subr.mxu0 0.0
      %4001 = vmatpush2.msra.mxu0 0.0
      %4002 = vmatprep.subr.mxu0 0.0
      %4003 = vmatpush2.msra.mxu0 0.0
      %4004 = vmatprep.subr.mxu0 0.0
      %4005 = vmatpush2.msra.mxu0 0.0
      %4006 = vmatprep.subr.mxu0 0.0
      %4007 = vmatpush2.msra.mxu0 0.0
      %4008 = vmatprep.subr.mxu0 0.0
      %4009 = vmatpush2.msra.mxu0 0.0
      %4010 = vmatprep.subr.mxu0 0.0
      %4011 = vmatpush2.msra.mxu0 0.0
      %4012 = vmatprep.subr.mxu0 0.0
      %4013 = vmatpush2.msra.mxu0 0.0
      %4014 = vmatprep.subr.mxu0 0.0
      %4015 = vmatpush2.msra.mxu0 0.0
      %4016 = vmatprep.subr.mxu0 0.0
      %4017 = vmatpush2.msra.mxu0 0.0
      %4018 = vmatprep.mubr.f32.mxu0 0.0
      %4019 = vmatmul.mubr.f32.gmra.mxu0 %v3919
      %v4020 = vpop.f32.mrf.mxu0
      %v4021 = vadd.f32 0.0, %v4020
      %v4022 = vpop.f32.mrf.mxu0
      %4023 = vmatprep.mubr.f32.mxu0 0.0
      %4024 = vmatmul.mubr.f32.gmra.mxu0 %v3920
      %v4025 = vpop.f32.mrf.mxu0
      %v4026 = vadd.f32 0.0, %v4025
      %v4027 = vpop.f32.mrf.mxu0
      %4028 = vmatprep.mubr.f32.mxu0 0.0
      %4029 = vmatmul.mubr.f32.gmra.mxu0 %v3921
      %v4030 = vpop.f32.mrf.mxu0
      %v4031 = vadd.f32 0.0, %v4030
      %v4032 = vpop.f32.mrf.mxu0
      %4033 = vmatprep.mubr.f32.mxu0 0.0
      %4034 = vmatmul.mubr.f32.gmra.mxu0 %v3922
      %v4035 = vpop.f32.mrf.mxu0
      %v4036 = vadd.f32 0.0, %v4035
      %v4037 = vpop.f32.mrf.mxu0
      %4038 = vmatprep.mubr.f32.mxu0 0.0
      %4039 = vmatmul.mubr.f32.gmra.mxu0 %v3923
      %v4040 = vpop.f32.mrf.mxu0
      %v4041 = vadd.f32 0.0, %v4040
      %v4042 = vpop.f32.mrf.mxu0
      %4043 = vmatprep.mubr.f32.mxu0 0.0
      %4044 = vmatmul.mubr.f32.gmra.mxu0 %v3924
      %v4045 = vpop.f32.mrf.mxu0
      %v4046 = vadd.f32 0.0, %v4045
      %v4047 = vpop.f32.mrf.mxu0
      %4048 = vmatprep.mubr.f32.mxu0 0.0
      %4049 = vmatmul.mubr.f32.gmra.mxu0 %v3925
      %v4050 = vpop.f32.mrf.mxu0
      %v4051 = vadd.f32 0.0, %v4050
      %v4052 = vpop.f32.mrf.mxu0
      %4053 = vmatprep.mubr.f32.mxu0 0.0
      %4054 = vmatmul.mubr.f32.gmra.mxu0 %v3926
      %v4055 = vpop.f32.mrf.mxu0
      %v4056 = vadd.f32 0.0, %v4055
      %v4057 = vpop.f32.mrf.mxu0
      %4058 = vmatprep.mubr.f32.mxu0 0.0
      %4059 = vmatmul.mubr.f32.gmra.mxu0 %v3927
      %v4060 = vpop.f32.mrf.mxu0
      %v4061 = vadd.f32 0.0, %v4060
      %v4062 = vpop.f32.mrf.mxu0
      %4063 = vmatprep.mubr.f32.mxu0 0.0
      %4064 = vmatmul.mubr.f32.gmra.mxu0 %v3928
      %v4065 = vpop.f32.mrf.mxu0
      %v4066 = vadd.f32 0.0, %v4065
      %v4067 = vpop.f32.mrf.mxu0
      %4068 = vmatprep.mubr.f32.mxu0 0.0
      %4069 = vmatmul.mubr.f32.gmra.mxu0 %v3929
      %v4070 = vpop.f32.mrf.mxu0
      %v4071 = vadd.f32 0.0, %v4070
      %v4072 = vpop.f32.mrf.mxu0
      %4073 = vmatprep.mubr.f32.mxu0 0.0
      %4074 = vmatmul.mubr.f32.gmra.mxu0 %v3930
      %v4075 = vpop.f32.mrf.mxu0
      %v4076 = vadd.f32 0.0, %v4075
      %v4077 = vpop.f32.mrf.mxu0
      %4078 = vmatprep.mubr.f32.mxu0 0.0
      %4079 = vmatmul.mubr.f32.gmra.mxu0 %v3931
      %v4080 = vpop.f32.mrf.mxu0
      %v4081 = vadd.f32 0.0, %v4080
      %v4082 = vpop.f32.mrf.mxu0
      %4083 = vmatprep.mubr.f32.mxu0 0.0
      %4084 = vmatmul.mubr.f32.gmra.mxu0 %v3932
      %v4085 = vpop.f32.mrf.mxu0
      %v4086 = vadd.f32 0.0, %v4085
      %v4087 = vpop.f32.mrf.mxu0
      %4088 = vmatprep.mubr.f32.mxu0 0.0
      %4089 = vmatmul.mubr.f32.gmra.mxu0 %v3933
      %v4090 = vpop.f32.mrf.mxu0
      %v4091 = vadd.f32 0.0, %v4090
      %v4092 = vpop.f32.mrf.mxu0
      %4093 = vmatprep.mubr.f32.mxu0 0.0
      %4094 = vmatmul.mubr.f32.gmra.mxu0 %v3934
      %v4095 = vpop.f32.mrf.mxu0
      %v4096 = vadd.f32 0.0, %v4095
      %v4097 = vpop.f32.mrf.mxu0
      %4098 = vmatprep.mubr.f32.mxu0 0.0
      %4099 = vmatmul.mubr.f32.gmra.mxu0 %v3935
      %v4100 = vpop.f32.mrf.mxu0
      %v4101 = vadd.f32 0.0, %v4100
      %v4102 = vpop.f32.mrf.mxu0
      %4103 = vmatprep.mubr.f32.mxu0 0.0
      %4104 = vmatmul.mubr.f32.gmra.mxu0 %v3936
      %v4105 = vpop.f32.mrf.mxu0
      %v4106 = vadd.f32 0.0, %v4105
      %v4107 = vpop.f32.mrf.mxu0
      %4108 = vdwg.mxu0
      %v4109 = vadd.f32 %v3901, %v4021
      %v4110 = vadd.f32 %v3902, %v4026
      %v4111 = vadd.f32 %v3903, %v4031
      %v4112 = vadd.f32 %v3904, %v4036
      %v4113 = vadd.f32 %v3905, %v4041
      %v4114 = vadd.f32 %v3906, %v4046
      %v4115 = vadd.f32 %v3907, %v4051
      %v4116 = vadd.f32 %v3908, %v4056
      %v4117 = vadd.f32 %v3909, %v4061
      %v4118 = vadd.f32 %v3910, %v4066
      %v4119 = vadd.f32 %v3911, %v4071
      %v4120 = vadd.f32 %v3912, %v4076
      %v4121 = vadd.f32 %v3913, %v4081
      %v4122 = vadd.f32 %v3914, %v4086
      %v4123 = vadd.f32 %v3915, %v4091
      %v4124 = vadd.f32 %v3916, %v4096
      %v4125 = vadd.f32 %v3917, %v4101
      %v4126 = vadd.f32 %v3918, %v4106
      %v4127 = vld [vmem:[#allocation3 + $0x13] sm:$0xff]
      %v4128 = vld [vmem:[#allocation3 + $0x1b] sm:$0xff]
      %v4129 = vld [vmem:[#allocation3 + $0x23] sm:$0xff]
      %v4130 = vld [vmem:[#allocation3 + $0x2b] sm:$0xff]
      %v4131 = vld [vmem:[#allocation3 + $0x33] sm:$0xff]
      %v4132 = vld [vmem:[#allocation3 + $0x3b] sm:$0xff]
      %v4133 = vld [vmem:[#allocation3 + $0x43] sm:$0xff]
      %v4134 = vld [vmem:[#allocation3 + $0x4b] sm:$0xff]
      %v4135 = vld [vmem:[#allocation3 + $0x53] sm:$0xff]
      %v4136 = vld [vmem:[#allocation3 + $0x5b] sm:$0xff]
      %v4137 = vld [vmem:[#allocation3 + $0x63] sm:$0xff]
      %v4138 = vld [vmem:[#allocation3 + $0x6b] sm:$0xff]
      %v4139 = vld [vmem:[#allocation3 + $0x73] sm:$0xff]
      %v4140 = vld [vmem:[#allocation3 + $0x7b] sm:$0xff]
      %v4141 = vld [vmem:[#allocation3 + $0x83] sm:$0xff]
      %v4142 = vld [vmem:[#allocation3 + $0x8b] sm:$0xff]
      %v4143 = vld [vmem:[#allocation3 + $0x93] sm:$0xff]
      %v4144 = vld [vmem:[#allocation3 + $0x9b] sm:$0xff]
      %s4145 = scalar_lea.vmem %s4, 512
      %v4146 = vld [vmem:[%s4145] sm:$0xff]
      %v4147 = vld [vmem:[%s4145 + $0x8] sm:$0xff]
      %v4148 = vld [vmem:[%s4145 + $0x10] sm:$0xff]
      %v4149 = vld [vmem:[%s4145 + $0x18] sm:$0xff]
      %v4150 = vld [vmem:[%s4145 + $0x20] sm:$0xff]
      %v4151 = vld [vmem:[%s4145 + $0x28] sm:$0xff]
      %v4152 = vld [vmem:[%s4145 + $0x30] sm:$0xff]
      %v4153 = vld [vmem:[%s4145 + $0x38] sm:$0xff]
      %v4154 = vld [vmem:[%s4145 + $0x40] sm:$0xff]
      %v4155 = vld [vmem:[%s4145 + $0x48] sm:$0xff]
      %v4156 = vld [vmem:[%s4145 + $0x50] sm:$0xff]
      %v4157 = vld [vmem:[%s4145 + $0x58] sm:$0xff]
      %v4158 = vld [vmem:[%s4145 + $0x60] sm:$0xff]
      %v4159 = vld [vmem:[%s4145 + $0x68] sm:$0xff]
      %v4160 = vld [vmem:[%s4145 + $0x70] sm:$0xff]
      %v4161 = vld [vmem:[%s4145 + $0x78] sm:$0xff]
      %4162 = vmatprep.subr.mxu0 0.0
      %4163 = vmatpush1.msra.mxu0 %v4161
      %4164 = vmatprep.subr.mxu0 0.0
      %4165 = vmatpush1.msra.mxu0 %v4160
      %4166 = vmatprep.subr.mxu0 0.0
      %4167 = vmatpush1.msra.mxu0 %v4159
      %4168 = vmatprep.subr.mxu0 0.0
      %4169 = vmatpush1.msra.mxu0 %v4158
      %4170 = vmatprep.subr.mxu0 0.0
      %4171 = vmatpush1.msra.mxu0 %v4157
      %4172 = vmatprep.subr.mxu0 0.0
      %4173 = vmatpush1.msra.mxu0 %v4156
      %4174 = vmatprep.subr.mxu0 0.0
      %4175 = vmatpush1.msra.mxu0 %v4155
      %4176 = vmatprep.subr.mxu0 0.0
      %4177 = vmatpush1.msra.mxu0 %v4154
      %4178 = vmatprep.subr.mxu0 0.0
      %4179 = vmatpush1.msra.mxu0 %v4153
      %4180 = vmatprep.subr.mxu0 0.0
      %4181 = vmatpush1.msra.mxu0 %v4152
      %4182 = vmatprep.subr.mxu0 0.0
      %4183 = vmatpush1.msra.mxu0 %v4151
      %4184 = vmatprep.subr.mxu0 0.0
      %4185 = vmatpush1.msra.mxu0 %v4150
      %4186 = vmatprep.subr.mxu0 0.0
      %4187 = vmatpush1.msra.mxu0 %v4149
      %4188 = vmatprep.subr.mxu0 0.0
      %4189 = vmatpush1.msra.mxu0 %v4148
      %4190 = vmatprep.subr.mxu0 0.0
      %4191 = vmatpush1.msra.mxu0 %v4147
      %4192 = vmatprep.subr.mxu0 0.0
      %4193 = vmatpush1.msra.mxu0 %v4146
      %4194 = vmatprep.subr.mxu0 0.0
      %4195 = vmatpush2.msra.mxu0 0.0
      %4196 = vmatprep.subr.mxu0 0.0
      %4197 = vmatpush2.msra.mxu0 0.0
      %4198 = vmatprep.subr.mxu0 0.0
      %4199 = vmatpush2.msra.mxu0 0.0
      %4200 = vmatprep.subr.mxu0 0.0
      %4201 = vmatpush2.msra.mxu0 0.0
      %4202 = vmatprep.subr.mxu0 0.0
      %4203 = vmatpush2.msra.mxu0 0.0
      %4204 = vmatprep.subr.mxu0 0.0
      %4205 = vmatpush2.msra.mxu0 0.0
      %4206 = vmatprep.subr.mxu0 0.0
      %4207 = vmatpush2.msra.mxu0 0.0
      %4208 = vmatprep.subr.mxu0 0.0
      %4209 = vmatpush2.msra.mxu0 0.0
      %4210 = vmatprep.subr.mxu0 0.0
      %4211 = vmatpush2.msra.mxu0 0.0
      %4212 = vmatprep.subr.mxu0 0.0
      %4213 = vmatpush2.msra.mxu0 0.0
      %4214 = vmatprep.subr.mxu0 0.0
      %4215 = vmatpush2.msra.mxu0 0.0
      %4216 = vmatprep.subr.mxu0 0.0
      %4217 = vmatpush2.msra.mxu0 0.0
      %4218 = vmatprep.subr.mxu0 0.0
      %4219 = vmatpush2.msra.mxu0 0.0
      %4220 = vmatprep.subr.mxu0 0.0
      %4221 = vmatpush2.msra.mxu0 0.0
      %4222 = vmatprep.subr.mxu0 0.0
      %4223 = vmatpush2.msra.mxu0 0.0
      %4224 = vmatprep.subr.mxu0 0.0
      %4225 = vmatpush2.msra.mxu0 0.0
      %4226 = vmatprep.mubr.f32.mxu0 0.0
      %4227 = vmatmul.mubr.f32.gmra.mxu0 %v4127
      %v4228 = vpop.f32.mrf.mxu0
      %v4229 = vadd.f32 0.0, %v4228
      %v4230 = vpop.f32.mrf.mxu0
      %4231 = vmatprep.mubr.f32.mxu0 0.0
      %4232 = vmatmul.mubr.f32.gmra.mxu0 %v4128
      %v4233 = vpop.f32.mrf.mxu0
      %v4234 = vadd.f32 0.0, %v4233
      %v4235 = vpop.f32.mrf.mxu0
      %4236 = vmatprep.mubr.f32.mxu0 0.0
      %4237 = vmatmul.mubr.f32.gmra.mxu0 %v4129
      %v4238 = vpop.f32.mrf.mxu0
      %v4239 = vadd.f32 0.0, %v4238
      %v4240 = vpop.f32.mrf.mxu0
      %4241 = vmatprep.mubr.f32.mxu0 0.0
      %4242 = vmatmul.mubr.f32.gmra.mxu0 %v4130
      %v4243 = vpop.f32.mrf.mxu0
      %v4244 = vadd.f32 0.0, %v4243
      %v4245 = vpop.f32.mrf.mxu0
      %4246 = vmatprep.mubr.f32.mxu0 0.0
      %4247 = vmatmul.mubr.f32.gmra.mxu0 %v4131
      %v4248 = vpop.f32.mrf.mxu0
      %v4249 = vadd.f32 0.0, %v4248
      %v4250 = vpop.f32.mrf.mxu0
      %4251 = vmatprep.mubr.f32.mxu0 0.0
      %4252 = vmatmul.mubr.f32.gmra.mxu0 %v4132
      %v4253 = vpop.f32.mrf.mxu0
      %v4254 = vadd.f32 0.0, %v4253
      %v4255 = vpop.f32.mrf.mxu0
      %4256 = vmatprep.mubr.f32.mxu0 0.0
      %4257 = vmatmul.mubr.f32.gmra.mxu0 %v4133
      %v4258 = vpop.f32.mrf.mxu0
      %v4259 = vadd.f32 0.0, %v4258
      %v4260 = vpop.f32.mrf.mxu0
      %4261 = vmatprep.mubr.f32.mxu0 0.0
      %4262 = vmatmul.mubr.f32.gmra.mxu0 %v4134
      %v4263 = vpop.f32.mrf.mxu0
      %v4264 = vadd.f32 0.0, %v4263
      %v4265 = vpop.f32.mrf.mxu0
      %4266 = vmatprep.mubr.f32.mxu0 0.0
      %4267 = vmatmul.mubr.f32.gmra.mxu0 %v4135
      %v4268 = vpop.f32.mrf.mxu0
      %v4269 = vadd.f32 0.0, %v4268
      %v4270 = vpop.f32.mrf.mxu0
      %4271 = vmatprep.mubr.f32.mxu0 0.0
      %4272 = vmatmul.mubr.f32.gmra.mxu0 %v4136
      %v4273 = vpop.f32.mrf.mxu0
      %v4274 = vadd.f32 0.0, %v4273
      %v4275 = vpop.f32.mrf.mxu0
      %4276 = vmatprep.mubr.f32.mxu0 0.0
      %4277 = vmatmul.mubr.f32.gmra.mxu0 %v4137
      %v4278 = vpop.f32.mrf.mxu0
      %v4279 = vadd.f32 0.0, %v4278
      %v4280 = vpop.f32.mrf.mxu0
      %4281 = vmatprep.mubr.f32.mxu0 0.0
      %4282 = vmatmul.mubr.f32.gmra.mxu0 %v4138
      %v4283 = vpop.f32.mrf.mxu0
      %v4284 = vadd.f32 0.0, %v4283
      %v4285 = vpop.f32.mrf.mxu0
      %4286 = vmatprep.mubr.f32.mxu0 0.0
      %4287 = vmatmul.mubr.f32.gmra.mxu0 %v4139
      %v4288 = vpop.f32.mrf.mxu0
      %v4289 = vadd.f32 0.0, %v4288
      %v4290 = vpop.f32.mrf.mxu0
      %4291 = vmatprep.mubr.f32.mxu0 0.0
      %4292 = vmatmul.mubr.f32.gmra.mxu0 %v4140
      %v4293 = vpop.f32.mrf.mxu0
      %v4294 = vadd.f32 0.0, %v4293
      %v4295 = vpop.f32.mrf.mxu0
      %4296 = vmatprep.mubr.f32.mxu0 0.0
      %4297 = vmatmul.mubr.f32.gmra.mxu0 %v4141
      %v4298 = vpop.f32.mrf.mxu0
      %v4299 = vadd.f32 0.0, %v4298
      %v4300 = vpop.f32.mrf.mxu0
      %4301 = vmatprep.mubr.f32.mxu0 0.0
      %4302 = vmatmul.mubr.f32.gmra.mxu0 %v4142
      %v4303 = vpop.f32.mrf.mxu0
      %v4304 = vadd.f32 0.0, %v4303
      %v4305 = vpop.f32.mrf.mxu0
      %4306 = vmatprep.mubr.f32.mxu0 0.0
      %4307 = vmatmul.mubr.f32.gmra.mxu0 %v4143
      %v4308 = vpop.f32.mrf.mxu0
      %v4309 = vadd.f32 0.0, %v4308
      %v4310 = vpop.f32.mrf.mxu0
      %4311 = vmatprep.mubr.f32.mxu0 0.0
      %4312 = vmatmul.mubr.f32.gmra.mxu0 %v4144
      %v4313 = vpop.f32.mrf.mxu0
      %v4314 = vadd.f32 0.0, %v4313
      %v4315 = vpop.f32.mrf.mxu0
      %4316 = vdwg.mxu0
      %v4317 = vadd.f32 %v4109, %v4229
      %v4318 = vadd.f32 %v4110, %v4234
      %v4319 = vadd.f32 %v4111, %v4239
      %v4320 = vadd.f32 %v4112, %v4244
      %v4321 = vadd.f32 %v4113, %v4249
      %v4322 = vadd.f32 %v4114, %v4254
      %v4323 = vadd.f32 %v4115, %v4259
      %v4324 = vadd.f32 %v4116, %v4264
      %v4325 = vadd.f32 %v4117, %v4269
      %v4326 = vadd.f32 %v4118, %v4274
      %v4327 = vadd.f32 %v4119, %v4279
      %v4328 = vadd.f32 %v4120, %v4284
      %v4329 = vadd.f32 %v4121, %v4289
      %v4330 = vadd.f32 %v4122, %v4294
      %v4331 = vadd.f32 %v4123, %v4299
      %v4332 = vadd.f32 %v4124, %v4304
      %v4333 = vadd.f32 %v4125, %v4309
      %v4334 = vadd.f32 %v4126, %v4314
      %v4335 = vld [vmem:[#allocation3 + $0x14] sm:$0xff]
      %v4336 = vld [vmem:[#allocation3 + $0x1c] sm:$0xff]
      %v4337 = vld [vmem:[#allocation3 + $0x24] sm:$0xff]
      %v4338 = vld [vmem:[#allocation3 + $0x2c] sm:$0xff]
      %v4339 = vld [vmem:[#allocation3 + $0x34] sm:$0xff]
      %v4340 = vld [vmem:[#allocation3 + $0x3c] sm:$0xff]
      %v4341 = vld [vmem:[#allocation3 + $0x44] sm:$0xff]
      %v4342 = vld [vmem:[#allocation3 + $0x4c] sm:$0xff]
      %v4343 = vld [vmem:[#allocation3 + $0x54] sm:$0xff]
      %v4344 = vld [vmem:[#allocation3 + $0x5c] sm:$0xff]
      %v4345 = vld [vmem:[#allocation3 + $0x64] sm:$0xff]
      %v4346 = vld [vmem:[#allocation3 + $0x6c] sm:$0xff]
      %v4347 = vld [vmem:[#allocation3 + $0x74] sm:$0xff]
      %v4348 = vld [vmem:[#allocation3 + $0x7c] sm:$0xff]
      %v4349 = vld [vmem:[#allocation3 + $0x84] sm:$0xff]
      %v4350 = vld [vmem:[#allocation3 + $0x8c] sm:$0xff]
      %v4351 = vld [vmem:[#allocation3 + $0x94] sm:$0xff]
      %v4352 = vld [vmem:[#allocation3 + $0x9c] sm:$0xff]
      %s4353 = scalar_lea.vmem %s4, 640
      %v4354 = vld [vmem:[%s4353] sm:$0xff]
      %v4355 = vld [vmem:[%s4353 + $0x8] sm:$0xff]
      %v4356 = vld [vmem:[%s4353 + $0x10] sm:$0xff]
      %v4357 = vld [vmem:[%s4353 + $0x18] sm:$0xff]
      %v4358 = vld [vmem:[%s4353 + $0x20] sm:$0xff]
      %v4359 = vld [vmem:[%s4353 + $0x28] sm:$0xff]
      %v4360 = vld [vmem:[%s4353 + $0x30] sm:$0xff]
      %v4361 = vld [vmem:[%s4353 + $0x38] sm:$0xff]
      %v4362 = vld [vmem:[%s4353 + $0x40] sm:$0xff]
      %v4363 = vld [vmem:[%s4353 + $0x48] sm:$0xff]
      %v4364 = vld [vmem:[%s4353 + $0x50] sm:$0xff]
      %v4365 = vld [vmem:[%s4353 + $0x58] sm:$0xff]
      %v4366 = vld [vmem:[%s4353 + $0x60] sm:$0xff]
      %v4367 = vld [vmem:[%s4353 + $0x68] sm:$0xff]
      %v4368 = vld [vmem:[%s4353 + $0x70] sm:$0xff]
      %v4369 = vld [vmem:[%s4353 + $0x78] sm:$0xff]
      %4370 = vmatprep.subr.mxu0 0.0
      %4371 = vmatpush1.msra.mxu0 %v4369
      %4372 = vmatprep.subr.mxu0 0.0
      %4373 = vmatpush1.msra.mxu0 %v4368
      %4374 = vmatprep.subr.mxu0 0.0
      %4375 = vmatpush1.msra.mxu0 %v4367
      %4376 = vmatprep.subr.mxu0 0.0
      %4377 = vmatpush1.msra.mxu0 %v4366
      %4378 = vmatprep.subr.mxu0 0.0
      %4379 = vmatpush1.msra.mxu0 %v4365
      %4380 = vmatprep.subr.mxu0 0.0
      %4381 = vmatpush1.msra.mxu0 %v4364
      %4382 = vmatprep.subr.mxu0 0.0
      %4383 = vmatpush1.msra.mxu0 %v4363
      %4384 = vmatprep.subr.mxu0 0.0
      %4385 = vmatpush1.msra.mxu0 %v4362
      %4386 = vmatprep.subr.mxu0 0.0
      %4387 = vmatpush1.msra.mxu0 %v4361
      %4388 = vmatprep.subr.mxu0 0.0
      %4389 = vmatpush1.msra.mxu0 %v4360
      %4390 = vmatprep.subr.mxu0 0.0
      %4391 = vmatpush1.msra.mxu0 %v4359
      %4392 = vmatprep.subr.mxu0 0.0
      %4393 = vmatpush1.msra.mxu0 %v4358
      %4394 = vmatprep.subr.mxu0 0.0
      %4395 = vmatpush1.msra.mxu0 %v4357
      %4396 = vmatprep.subr.mxu0 0.0
      %4397 = vmatpush1.msra.mxu0 %v4356
      %4398 = vmatprep.subr.mxu0 0.0
      %4399 = vmatpush1.msra.mxu0 %v4355
      %4400 = vmatprep.subr.mxu0 0.0
      %4401 = vmatpush1.msra.mxu0 %v4354
      %4402 = vmatprep.subr.mxu0 0.0
      %4403 = vmatpush2.msra.mxu0 0.0
      %4404 = vmatprep.subr.mxu0 0.0
      %4405 = vmatpush2.msra.mxu0 0.0
      %4406 = vmatprep.subr.mxu0 0.0
      %4407 = vmatpush2.msra.mxu0 0.0
      %4408 = vmatprep.subr.mxu0 0.0
      %4409 = vmatpush2.msra.mxu0 0.0
      %4410 = vmatprep.subr.mxu0 0.0
      %4411 = vmatpush2.msra.mxu0 0.0
      %4412 = vmatprep.subr.mxu0 0.0
      %4413 = vmatpush2.msra.mxu0 0.0
      %4414 = vmatprep.subr.mxu0 0.0
      %4415 = vmatpush2.msra.mxu0 0.0
      %4416 = vmatprep.subr.mxu0 0.0
      %4417 = vmatpush2.msra.mxu0 0.0
      %4418 = vmatprep.subr.mxu0 0.0
      %4419 = vmatpush2.msra.mxu0 0.0
      %4420 = vmatprep.subr.mxu0 0.0
      %4421 = vmatpush2.msra.mxu0 0.0
      %4422 = vmatprep.subr.mxu0 0.0
      %4423 = vmatpush2.msra.mxu0 0.0
      %4424 = vmatprep.subr.mxu0 0.0
      %4425 = vmatpush2.msra.mxu0 0.0
      %4426 = vmatprep.subr.mxu0 0.0
      %4427 = vmatpush2.msra.mxu0 0.0
      %4428 = vmatprep.subr.mxu0 0.0
      %4429 = vmatpush2.msra.mxu0 0.0
      %4430 = vmatprep.subr.mxu0 0.0
      %4431 = vmatpush2.msra.mxu0 0.0
      %4432 = vmatprep.subr.mxu0 0.0
      %4433 = vmatpush2.msra.mxu0 0.0
      %4434 = vmatprep.mubr.f32.mxu0 0.0
      %4435 = vmatmul.mubr.f32.gmra.mxu0 %v4335
      %v4436 = vpop.f32.mrf.mxu0
      %v4437 = vadd.f32 0.0, %v4436
      %v4438 = vpop.f32.mrf.mxu0
      %4439 = vmatprep.mubr.f32.mxu0 0.0
      %4440 = vmatmul.mubr.f32.gmra.mxu0 %v4336
      %v4441 = vpop.f32.mrf.mxu0
      %v4442 = vadd.f32 0.0, %v4441
      %v4443 = vpop.f32.mrf.mxu0
      %4444 = vmatprep.mubr.f32.mxu0 0.0
      %4445 = vmatmul.mubr.f32.gmra.mxu0 %v4337
      %v4446 = vpop.f32.mrf.mxu0
      %v4447 = vadd.f32 0.0, %v4446
      %v4448 = vpop.f32.mrf.mxu0
      %4449 = vmatprep.mubr.f32.mxu0 0.0
      %4450 = vmatmul.mubr.f32.gmra.mxu0 %v4338
      %v4451 = vpop.f32.mrf.mxu0
      %v4452 = vadd.f32 0.0, %v4451
      %v4453 = vpop.f32.mrf.mxu0
      %4454 = vmatprep.mubr.f32.mxu0 0.0
      %4455 = vmatmul.mubr.f32.gmra.mxu0 %v4339
      %v4456 = vpop.f32.mrf.mxu0
      %v4457 = vadd.f32 0.0, %v4456
      %v4458 = vpop.f32.mrf.mxu0
      %4459 = vmatprep.mubr.f32.mxu0 0.0
      %4460 = vmatmul.mubr.f32.gmra.mxu0 %v4340
      %v4461 = vpop.f32.mrf.mxu0
      %v4462 = vadd.f32 0.0, %v4461
      %v4463 = vpop.f32.mrf.mxu0
      %4464 = vmatprep.mubr.f32.mxu0 0.0
      %4465 = vmatmul.mubr.f32.gmra.mxu0 %v4341
      %v4466 = vpop.f32.mrf.mxu0
      %v4467 = vadd.f32 0.0, %v4466
      %v4468 = vpop.f32.mrf.mxu0
      %4469 = vmatprep.mubr.f32.mxu0 0.0
      %4470 = vmatmul.mubr.f32.gmra.mxu0 %v4342
      %v4471 = vpop.f32.mrf.mxu0
      %v4472 = vadd.f32 0.0, %v4471
      %v4473 = vpop.f32.mrf.mxu0
      %4474 = vmatprep.mubr.f32.mxu0 0.0
      %4475 = vmatmul.mubr.f32.gmra.mxu0 %v4343
      %v4476 = vpop.f32.mrf.mxu0
      %v4477 = vadd.f32 0.0, %v4476
      %v4478 = vpop.f32.mrf.mxu0
      %4479 = vmatprep.mubr.f32.mxu0 0.0
      %4480 = vmatmul.mubr.f32.gmra.mxu0 %v4344
      %v4481 = vpop.f32.mrf.mxu0
      %v4482 = vadd.f32 0.0, %v4481
      %v4483 = vpop.f32.mrf.mxu0
      %4484 = vmatprep.mubr.f32.mxu0 0.0
      %4485 = vmatmul.mubr.f32.gmra.mxu0 %v4345
      %v4486 = vpop.f32.mrf.mxu0
      %v4487 = vadd.f32 0.0, %v4486
      %v4488 = vpop.f32.mrf.mxu0
      %4489 = vmatprep.mubr.f32.mxu0 0.0
      %4490 = vmatmul.mubr.f32.gmra.mxu0 %v4346
      %v4491 = vpop.f32.mrf.mxu0
      %v4492 = vadd.f32 0.0, %v4491
      %v4493 = vpop.f32.mrf.mxu0
      %4494 = vmatprep.mubr.f32.mxu0 0.0
      %4495 = vmatmul.mubr.f32.gmra.mxu0 %v4347
      %v4496 = vpop.f32.mrf.mxu0
      %v4497 = vadd.f32 0.0, %v4496
      %v4498 = vpop.f32.mrf.mxu0
      %4499 = vmatprep.mubr.f32.mxu0 0.0
      %4500 = vmatmul.mubr.f32.gmra.mxu0 %v4348
      %v4501 = vpop.f32.mrf.mxu0
      %v4502 = vadd.f32 0.0, %v4501
      %v4503 = vpop.f32.mrf.mxu0
      %4504 = vmatprep.mubr.f32.mxu0 0.0
      %4505 = vmatmul.mubr.f32.gmra.mxu0 %v4349
      %v4506 = vpop.f32.mrf.mxu0
      %v4507 = vadd.f32 0.0, %v4506
      %v4508 = vpop.f32.mrf.mxu0
      %4509 = vmatprep.mubr.f32.mxu0 0.0
      %4510 = vmatmul.mubr.f32.gmra.mxu0 %v4350
      %v4511 = vpop.f32.mrf.mxu0
      %v4512 = vadd.f32 0.0, %v4511
      %v4513 = vpop.f32.mrf.mxu0
      %4514 = vmatprep.mubr.f32.mxu0 0.0
      %4515 = vmatmul.mubr.f32.gmra.mxu0 %v4351
      %v4516 = vpop.f32.mrf.mxu0
      %v4517 = vadd.f32 0.0, %v4516
      %v4518 = vpop.f32.mrf.mxu0
      %4519 = vmatprep.mubr.f32.mxu0 0.0
      %4520 = vmatmul.mubr.f32.gmra.mxu0 %v4352
      %v4521 = vpop.f32.mrf.mxu0
      %v4522 = vadd.f32 0.0, %v4521
      %v4523 = vpop.f32.mrf.mxu0
      %4524 = vdwg.mxu0
      %v4525 = vadd.f32 %v4317, %v4437
      %v4526 = vadd.f32 %v4318, %v4442
      %v4527 = vadd.f32 %v4319, %v4447
      %v4528 = vadd.f32 %v4320, %v4452
      %v4529 = vadd.f32 %v4321, %v4457
      %v4530 = vadd.f32 %v4322, %v4462
      %v4531 = vadd.f32 %v4323, %v4467
      %v4532 = vadd.f32 %v4324, %v4472
      %v4533 = vadd.f32 %v4325, %v4477
      %v4534 = vadd.f32 %v4326, %v4482
      %v4535 = vadd.f32 %v4327, %v4487
      %v4536 = vadd.f32 %v4328, %v4492
      %v4537 = vadd.f32 %v4329, %v4497
      %v4538 = vadd.f32 %v4330, %v4502
      %v4539 = vadd.f32 %v4331, %v4507
      %v4540 = vadd.f32 %v4332, %v4512
      %v4541 = vadd.f32 %v4333, %v4517
      %v4542 = vadd.f32 %v4334, %v4522
      %v4543 = vld [vmem:[#allocation3 + $0x24] sm:$0xff]
      %v4544 = vld [vmem:[#allocation3 + $0x2c] sm:$0xff]
      %v4545 = vld [vmem:[#allocation3 + $0x34] sm:$0xff]
      %v4546 = vld [vmem:[#allocation3 + $0x3c] sm:$0xff]
      %v4547 = vld [vmem:[#allocation3 + $0x44] sm:$0xff]
      %v4548 = vld [vmem:[#allocation3 + $0x4c] sm:$0xff]
      %v4549 = vld [vmem:[#allocation3 + $0x54] sm:$0xff]
      %v4550 = vld [vmem:[#allocation3 + $0x5c] sm:$0xff]
      %v4551 = vld [vmem:[#allocation3 + $0x64] sm:$0xff]
      %v4552 = vld [vmem:[#allocation3 + $0x6c] sm:$0xff]
      %v4553 = vld [vmem:[#allocation3 + $0x74] sm:$0xff]
      %v4554 = vld [vmem:[#allocation3 + $0x7c] sm:$0xff]
      %v4555 = vld [vmem:[#allocation3 + $0x84] sm:$0xff]
      %v4556 = vld [vmem:[#allocation3 + $0x8c] sm:$0xff]
      %v4557 = vld [vmem:[#allocation3 + $0x94] sm:$0xff]
      %v4558 = vld [vmem:[#allocation3 + $0x9c] sm:$0xff]
      %v4559 = vld [vmem:[#allocation3 + $0xa4] sm:$0xff]
      %v4560 = vld [vmem:[#allocation3 + $0xac] sm:$0xff]
      %s4561 = scalar_lea.vmem %s4, 768
      %v4562 = vld [vmem:[%s4561] sm:$0xff]
      %v4563 = vld [vmem:[%s4561 + $0x8] sm:$0xff]
      %v4564 = vld [vmem:[%s4561 + $0x10] sm:$0xff]
      %v4565 = vld [vmem:[%s4561 + $0x18] sm:$0xff]
      %v4566 = vld [vmem:[%s4561 + $0x20] sm:$0xff]
      %v4567 = vld [vmem:[%s4561 + $0x28] sm:$0xff]
      %v4568 = vld [vmem:[%s4561 + $0x30] sm:$0xff]
      %v4569 = vld [vmem:[%s4561 + $0x38] sm:$0xff]
      %v4570 = vld [vmem:[%s4561 + $0x40] sm:$0xff]
      %v4571 = vld [vmem:[%s4561 + $0x48] sm:$0xff]
      %v4572 = vld [vmem:[%s4561 + $0x50] sm:$0xff]
      %v4573 = vld [vmem:[%s4561 + $0x58] sm:$0xff]
      %v4574 = vld [vmem:[%s4561 + $0x60] sm:$0xff]
      %v4575 = vld [vmem:[%s4561 + $0x68] sm:$0xff]
      %v4576 = vld [vmem:[%s4561 + $0x70] sm:$0xff]
      %v4577 = vld [vmem:[%s4561 + $0x78] sm:$0xff]
      %4578 = vmatprep.subr.mxu0 0.0
      %4579 = vmatpush1.msra.mxu0 %v4577
      %4580 = vmatprep.subr.mxu0 0.0
      %4581 = vmatpush1.msra.mxu0 %v4576
      %4582 = vmatprep.subr.mxu0 0.0
      %4583 = vmatpush1.msra.mxu0 %v4575
      %4584 = vmatprep.subr.mxu0 0.0
      %4585 = vmatpush1.msra.mxu0 %v4574
      %4586 = vmatprep.subr.mxu0 0.0
      %4587 = vmatpush1.msra.mxu0 %v4573
      %4588 = vmatprep.subr.mxu0 0.0
      %4589 = vmatpush1.msra.mxu0 %v4572
      %4590 = vmatprep.subr.mxu0 0.0
      %4591 = vmatpush1.msra.mxu0 %v4571
      %4592 = vmatprep.subr.mxu0 0.0
      %4593 = vmatpush1.msra.mxu0 %v4570
      %4594 = vmatprep.subr.mxu0 0.0
      %4595 = vmatpush1.msra.mxu0 %v4569
      %4596 = vmatprep.subr.mxu0 0.0
      %4597 = vmatpush1.msra.mxu0 %v4568
      %4598 = vmatprep.subr.mxu0 0.0
      %4599 = vmatpush1.msra.mxu0 %v4567
      %4600 = vmatprep.subr.mxu0 0.0
      %4601 = vmatpush1.msra.mxu0 %v4566
      %4602 = vmatprep.subr.mxu0 0.0
      %4603 = vmatpush1.msra.mxu0 %v4565
      %4604 = vmatprep.subr.mxu0 0.0
      %4605 = vmatpush1.msra.mxu0 %v4564
      %4606 = vmatprep.subr.mxu0 0.0
      %4607 = vmatpush1.msra.mxu0 %v4563
      %4608 = vmatprep.subr.mxu0 0.0
      %4609 = vmatpush1.msra.mxu0 %v4562
      %4610 = vmatprep.subr.mxu0 0.0
      %4611 = vmatpush2.msra.mxu0 0.0
      %4612 = vmatprep.subr.mxu0 0.0
      %4613 = vmatpush2.msra.mxu0 0.0
      %4614 = vmatprep.subr.mxu0 0.0
      %4615 = vmatpush2.msra.mxu0 0.0
      %4616 = vmatprep.subr.mxu0 0.0
      %4617 = vmatpush2.msra.mxu0 0.0
      %4618 = vmatprep.subr.mxu0 0.0
      %4619 = vmatpush2.msra.mxu0 0.0
      %4620 = vmatprep.subr.mxu0 0.0
      %4621 = vmatpush2.msra.mxu0 0.0
      %4622 = vmatprep.subr.mxu0 0.0
      %4623 = vmatpush2.msra.mxu0 0.0
      %4624 = vmatprep.subr.mxu0 0.0
      %4625 = vmatpush2.msra.mxu0 0.0
      %4626 = vmatprep.subr.mxu0 0.0
      %4627 = vmatpush2.msra.mxu0 0.0
      %4628 = vmatprep.subr.mxu0 0.0
      %4629 = vmatpush2.msra.mxu0 0.0
      %4630 = vmatprep.subr.mxu0 0.0
      %4631 = vmatpush2.msra.mxu0 0.0
      %4632 = vmatprep.subr.mxu0 0.0
      %4633 = vmatpush2.msra.mxu0 0.0
      %4634 = vmatprep.subr.mxu0 0.0
      %4635 = vmatpush2.msra.mxu0 0.0
      %4636 = vmatprep.subr.mxu0 0.0
      %4637 = vmatpush2.msra.mxu0 0.0
      %4638 = vmatprep.subr.mxu0 0.0
      %4639 = vmatpush2.msra.mxu0 0.0
      %4640 = vmatprep.subr.mxu0 0.0
      %4641 = vmatpush2.msra.mxu0 0.0
      %4642 = vmatprep.mubr.f32.mxu0 0.0
      %4643 = vmatmul.mubr.f32.gmra.mxu0 %v4543
      %v4644 = vpop.f32.mrf.mxu0
      %v4645 = vadd.f32 0.0, %v4644
      %v4646 = vpop.f32.mrf.mxu0
      %4647 = vmatprep.mubr.f32.mxu0 0.0
      %4648 = vmatmul.mubr.f32.gmra.mxu0 %v4544
      %v4649 = vpop.f32.mrf.mxu0
      %v4650 = vadd.f32 0.0, %v4649
      %v4651 = vpop.f32.mrf.mxu0
      %4652 = vmatprep.mubr.f32.mxu0 0.0
      %4653 = vmatmul.mubr.f32.gmra.mxu0 %v4545
      %v4654 = vpop.f32.mrf.mxu0
      %v4655 = vadd.f32 0.0, %v4654
      %v4656 = vpop.f32.mrf.mxu0
      %4657 = vmatprep.mubr.f32.mxu0 0.0
      %4658 = vmatmul.mubr.f32.gmra.mxu0 %v4546
      %v4659 = vpop.f32.mrf.mxu0
      %v4660 = vadd.f32 0.0, %v4659
      %v4661 = vpop.f32.mrf.mxu0
      %4662 = vmatprep.mubr.f32.mxu0 0.0
      %4663 = vmatmul.mubr.f32.gmra.mxu0 %v4547
      %v4664 = vpop.f32.mrf.mxu0
      %v4665 = vadd.f32 0.0, %v4664
      %v4666 = vpop.f32.mrf.mxu0
      %4667 = vmatprep.mubr.f32.mxu0 0.0
      %4668 = vmatmul.mubr.f32.gmra.mxu0 %v4548
      %v4669 = vpop.f32.mrf.mxu0
      %v4670 = vadd.f32 0.0, %v4669
      %v4671 = vpop.f32.mrf.mxu0
      %4672 = vmatprep.mubr.f32.mxu0 0.0
      %4673 = vmatmul.mubr.f32.gmra.mxu0 %v4549
      %v4674 = vpop.f32.mrf.mxu0
      %v4675 = vadd.f32 0.0, %v4674
      %v4676 = vpop.f32.mrf.mxu0
      %4677 = vmatprep.mubr.f32.mxu0 0.0
      %4678 = vmatmul.mubr.f32.gmra.mxu0 %v4550
      %v4679 = vpop.f32.mrf.mxu0
      %v4680 = vadd.f32 0.0, %v4679
      %v4681 = vpop.f32.mrf.mxu0
      %4682 = vmatprep.mubr.f32.mxu0 0.0
      %4683 = vmatmul.mubr.f32.gmra.mxu0 %v4551
      %v4684 = vpop.f32.mrf.mxu0
      %v4685 = vadd.f32 0.0, %v4684
      %v4686 = vpop.f32.mrf.mxu0
      %4687 = vmatprep.mubr.f32.mxu0 0.0
      %4688 = vmatmul.mubr.f32.gmra.mxu0 %v4552
      %v4689 = vpop.f32.mrf.mxu0
      %v4690 = vadd.f32 0.0, %v4689
      %v4691 = vpop.f32.mrf.mxu0
      %4692 = vmatprep.mubr.f32.mxu0 0.0
      %4693 = vmatmul.mubr.f32.gmra.mxu0 %v4553
      %v4694 = vpop.f32.mrf.mxu0
      %v4695 = vadd.f32 0.0, %v4694
      %v4696 = vpop.f32.mrf.mxu0
      %4697 = vmatprep.mubr.f32.mxu0 0.0
      %4698 = vmatmul.mubr.f32.gmra.mxu0 %v4554
      %v4699 = vpop.f32.mrf.mxu0
      %v4700 = vadd.f32 0.0, %v4699
      %v4701 = vpop.f32.mrf.mxu0
      %4702 = vmatprep.mubr.f32.mxu0 0.0
      %4703 = vmatmul.mubr.f32.gmra.mxu0 %v4555
      %v4704 = vpop.f32.mrf.mxu0
      %v4705 = vadd.f32 0.0, %v4704
      %v4706 = vpop.f32.mrf.mxu0
      %4707 = vmatprep.mubr.f32.mxu0 0.0
      %4708 = vmatmul.mubr.f32.gmra.mxu0 %v4556
      %v4709 = vpop.f32.mrf.mxu0
      %v4710 = vadd.f32 0.0, %v4709
      %v4711 = vpop.f32.mrf.mxu0
      %4712 = vmatprep.mubr.f32.mxu0 0.0
      %4713 = vmatmul.mubr.f32.gmra.mxu0 %v4557
      %v4714 = vpop.f32.mrf.mxu0
      %v4715 = vadd.f32 0.0, %v4714
      %v4716 = vpop.f32.mrf.mxu0
      %4717 = vmatprep.mubr.f32.mxu0 0.0
      %4718 = vmatmul.mubr.f32.gmra.mxu0 %v4558
      %v4719 = vpop.f32.mrf.mxu0
      %v4720 = vadd.f32 0.0, %v4719
      %v4721 = vpop.f32.mrf.mxu0
      %4722 = vmatprep.mubr.f32.mxu0 0.0
      %4723 = vmatmul.mubr.f32.gmra.mxu0 %v4559
      %v4724 = vpop.f32.mrf.mxu0
      %v4725 = vadd.f32 0.0, %v4724
      %v4726 = vpop.f32.mrf.mxu0
      %4727 = vmatprep.mubr.f32.mxu0 0.0
      %4728 = vmatmul.mubr.f32.gmra.mxu0 %v4560
      %v4729 = vpop.f32.mrf.mxu0
      %v4730 = vadd.f32 0.0, %v4729
      %v4731 = vpop.f32.mrf.mxu0
      %4732 = vdwg.mxu0
      %v4733 = vadd.f32 %v4525, %v4645
      %v4734 = vadd.f32 %v4526, %v4650
      %v4735 = vadd.f32 %v4527, %v4655
      %v4736 = vadd.f32 %v4528, %v4660
      %v4737 = vadd.f32 %v4529, %v4665
      %v4738 = vadd.f32 %v4530, %v4670
      %v4739 = vadd.f32 %v4531, %v4675
      %v4740 = vadd.f32 %v4532, %v4680
      %v4741 = vadd.f32 %v4533, %v4685
      %v4742 = vadd.f32 %v4534, %v4690
      %v4743 = vadd.f32 %v4535, %v4695
      %v4744 = vadd.f32 %v4536, %v4700
      %v4745 = vadd.f32 %v4537, %v4705
      %v4746 = vadd.f32 %v4538, %v4710
      %v4747 = vadd.f32 %v4539, %v4715
      %v4748 = vadd.f32 %v4540, %v4720
      %v4749 = vadd.f32 %v4541, %v4725
      %v4750 = vadd.f32 %v4542, %v4730
      %v4751 = vld [vmem:[#allocation3 + $0x25] sm:$0xff]
      %v4752 = vld [vmem:[#allocation3 + $0x2d] sm:$0xff]
      %v4753 = vld [vmem:[#allocation3 + $0x35] sm:$0xff]
      %v4754 = vld [vmem:[#allocation3 + $0x3d] sm:$0xff]
      %v4755 = vld [vmem:[#allocation3 + $0x45] sm:$0xff]
      %v4756 = vld [vmem:[#allocation3 + $0x4d] sm:$0xff]
      %v4757 = vld [vmem:[#allocation3 + $0x55] sm:$0xff]
      %v4758 = vld [vmem:[#allocation3 + $0x5d] sm:$0xff]
      %v4759 = vld [vmem:[#allocation3 + $0x65] sm:$0xff]
      %v4760 = vld [vmem:[#allocation3 + $0x6d] sm:$0xff]
      %v4761 = vld [vmem:[#allocation3 + $0x75] sm:$0xff]
      %v4762 = vld [vmem:[#allocation3 + $0x7d] sm:$0xff]
      %v4763 = vld [vmem:[#allocation3 + $0x85] sm:$0xff]
      %v4764 = vld [vmem:[#allocation3 + $0x8d] sm:$0xff]
      %v4765 = vld [vmem:[#allocation3 + $0x95] sm:$0xff]
      %v4766 = vld [vmem:[#allocation3 + $0x9d] sm:$0xff]
      %v4767 = vld [vmem:[#allocation3 + $0xa5] sm:$0xff]
      %v4768 = vld [vmem:[#allocation3 + $0xad] sm:$0xff]
      %s4769 = scalar_lea.vmem %s4, 896
      %v4770 = vld [vmem:[%s4769] sm:$0xff]
      %v4771 = vld [vmem:[%s4769 + $0x8] sm:$0xff]
      %v4772 = vld [vmem:[%s4769 + $0x10] sm:$0xff]
      %v4773 = vld [vmem:[%s4769 + $0x18] sm:$0xff]
      %v4774 = vld [vmem:[%s4769 + $0x20] sm:$0xff]
      %v4775 = vld [vmem:[%s4769 + $0x28] sm:$0xff]
      %v4776 = vld [vmem:[%s4769 + $0x30] sm:$0xff]
      %v4777 = vld [vmem:[%s4769 + $0x38] sm:$0xff]
      %v4778 = vld [vmem:[%s4769 + $0x40] sm:$0xff]
      %v4779 = vld [vmem:[%s4769 + $0x48] sm:$0xff]
      %v4780 = vld [vmem:[%s4769 + $0x50] sm:$0xff]
      %v4781 = vld [vmem:[%s4769 + $0x58] sm:$0xff]
      %v4782 = vld [vmem:[%s4769 + $0x60] sm:$0xff]
      %v4783 = vld [vmem:[%s4769 + $0x68] sm:$0xff]
      %v4784 = vld [vmem:[%s4769 + $0x70] sm:$0xff]
      %v4785 = vld [vmem:[%s4769 + $0x78] sm:$0xff]
      %4786 = vmatprep.subr.mxu0 0.0
      %4787 = vmatpush1.msra.mxu0 %v4785
      %4788 = vmatprep.subr.mxu0 0.0
      %4789 = vmatpush1.msra.mxu0 %v4784
      %4790 = vmatprep.subr.mxu0 0.0
      %4791 = vmatpush1.msra.mxu0 %v4783
      %4792 = vmatprep.subr.mxu0 0.0
      %4793 = vmatpush1.msra.mxu0 %v4782
      %4794 = vmatprep.subr.mxu0 0.0
      %4795 = vmatpush1.msra.mxu0 %v4781
      %4796 = vmatprep.subr.mxu0 0.0
      %4797 = vmatpush1.msra.mxu0 %v4780
      %4798 = vmatprep.subr.mxu0 0.0
      %4799 = vmatpush1.msra.mxu0 %v4779
      %4800 = vmatprep.subr.mxu0 0.0
      %4801 = vmatpush1.msra.mxu0 %v4778
      %4802 = vmatprep.subr.mxu0 0.0
      %4803 = vmatpush1.msra.mxu0 %v4777
      %4804 = vmatprep.subr.mxu0 0.0
      %4805 = vmatpush1.msra.mxu0 %v4776
      %4806 = vmatprep.subr.mxu0 0.0
      %4807 = vmatpush1.msra.mxu0 %v4775
      %4808 = vmatprep.subr.mxu0 0.0
      %4809 = vmatpush1.msra.mxu0 %v4774
      %4810 = vmatprep.subr.mxu0 0.0
      %4811 = vmatpush1.msra.mxu0 %v4773
      %4812 = vmatprep.subr.mxu0 0.0
      %4813 = vmatpush1.msra.mxu0 %v4772
      %4814 = vmatprep.subr.mxu0 0.0
      %4815 = vmatpush1.msra.mxu0 %v4771
      %4816 = vmatprep.subr.mxu0 0.0
      %4817 = vmatpush1.msra.mxu0 %v4770
      %4818 = vmatprep.subr.mxu0 0.0
      %4819 = vmatpush2.msra.mxu0 0.0
      %4820 = vmatprep.subr.mxu0 0.0
      %4821 = vmatpush2.msra.mxu0 0.0
      %4822 = vmatprep.subr.mxu0 0.0
      %4823 = vmatpush2.msra.mxu0 0.0
      %4824 = vmatprep.subr.mxu0 0.0
      %4825 = vmatpush2.msra.mxu0 0.0
      %4826 = vmatprep.subr.mxu0 0.0
      %4827 = vmatpush2.msra.mxu0 0.0
      %4828 = vmatprep.subr.mxu0 0.0
      %4829 = vmatpush2.msra.mxu0 0.0
      %4830 = vmatprep.subr.mxu0 0.0
      %4831 = vmatpush2.msra.mxu0 0.0
      %4832 = vmatprep.subr.mxu0 0.0
      %4833 = vmatpush2.msra.mxu0 0.0
      %4834 = vmatprep.subr.mxu0 0.0
      %4835 = vmatpush2.msra.mxu0 0.0
      %4836 = vmatprep.subr.mxu0 0.0
      %4837 = vmatpush2.msra.mxu0 0.0
      %4838 = vmatprep.subr.mxu0 0.0
      %4839 = vmatpush2.msra.mxu0 0.0
      %4840 = vmatprep.subr.mxu0 0.0
      %4841 = vmatpush2.msra.mxu0 0.0
      %4842 = vmatprep.subr.mxu0 0.0
      %4843 = vmatpush2.msra.mxu0 0.0
      %4844 = vmatprep.subr.mxu0 0.0
      %4845 = vmatpush2.msra.mxu0 0.0
      %4846 = vmatprep.subr.mxu0 0.0
      %4847 = vmatpush2.msra.mxu0 0.0
      %4848 = vmatprep.subr.mxu0 0.0
      %4849 = vmatpush2.msra.mxu0 0.0
      %4850 = vmatprep.mubr.f32.mxu0 0.0
      %4851 = vmatmul.mubr.f32.gmra.mxu0 %v4751
      %v4852 = vpop.f32.mrf.mxu0
      %v4853 = vadd.f32 0.0, %v4852
      %v4854 = vpop.f32.mrf.mxu0
      %4855 = vmatprep.mubr.f32.mxu0 0.0
      %4856 = vmatmul.mubr.f32.gmra.mxu0 %v4752
      %v4857 = vpop.f32.mrf.mxu0
      %v4858 = vadd.f32 0.0, %v4857
      %v4859 = vpop.f32.mrf.mxu0
      %4860 = vmatprep.mubr.f32.mxu0 0.0
      %4861 = vmatmul.mubr.f32.gmra.mxu0 %v4753
      %v4862 = vpop.f32.mrf.mxu0
      %v4863 = vadd.f32 0.0, %v4862
      %v4864 = vpop.f32.mrf.mxu0
      %4865 = vmatprep.mubr.f32.mxu0 0.0
      %4866 = vmatmul.mubr.f32.gmra.mxu0 %v4754
      %v4867 = vpop.f32.mrf.mxu0
      %v4868 = vadd.f32 0.0, %v4867
      %v4869 = vpop.f32.mrf.mxu0
      %4870 = vmatprep.mubr.f32.mxu0 0.0
      %4871 = vmatmul.mubr.f32.gmra.mxu0 %v4755
      %v4872 = vpop.f32.mrf.mxu0
      %v4873 = vadd.f32 0.0, %v4872
      %v4874 = vpop.f32.mrf.mxu0
      %4875 = vmatprep.mubr.f32.mxu0 0.0
      %4876 = vmatmul.mubr.f32.gmra.mxu0 %v4756
      %v4877 = vpop.f32.mrf.mxu0
      %v4878 = vadd.f32 0.0, %v4877
      %v4879 = vpop.f32.mrf.mxu0
      %4880 = vmatprep.mubr.f32.mxu0 0.0
      %4881 = vmatmul.mubr.f32.gmra.mxu0 %v4757
      %v4882 = vpop.f32.mrf.mxu0
      %v4883 = vadd.f32 0.0, %v4882
      %v4884 = vpop.f32.mrf.mxu0
      %4885 = vmatprep.mubr.f32.mxu0 0.0
      %4886 = vmatmul.mubr.f32.gmra.mxu0 %v4758
      %v4887 = vpop.f32.mrf.mxu0
      %v4888 = vadd.f32 0.0, %v4887
      %v4889 = vpop.f32.mrf.mxu0
      %4890 = vmatprep.mubr.f32.mxu0 0.0
      %4891 = vmatmul.mubr.f32.gmra.mxu0 %v4759
      %v4892 = vpop.f32.mrf.mxu0
      %v4893 = vadd.f32 0.0, %v4892
      %v4894 = vpop.f32.mrf.mxu0
      %4895 = vmatprep.mubr.f32.mxu0 0.0
      %4896 = vmatmul.mubr.f32.gmra.mxu0 %v4760
      %v4897 = vpop.f32.mrf.mxu0
      %v4898 = vadd.f32 0.0, %v4897
      %v4899 = vpop.f32.mrf.mxu0
      %4900 = vmatprep.mubr.f32.mxu0 0.0
      %4901 = vmatmul.mubr.f32.gmra.mxu0 %v4761
      %v4902 = vpop.f32.mrf.mxu0
      %v4903 = vadd.f32 0.0, %v4902
      %v4904 = vpop.f32.mrf.mxu0
      %4905 = vmatprep.mubr.f32.mxu0 0.0
      %4906 = vmatmul.mubr.f32.gmra.mxu0 %v4762
      %v4907 = vpop.f32.mrf.mxu0
      %v4908 = vadd.f32 0.0, %v4907
      %v4909 = vpop.f32.mrf.mxu0
      %4910 = vmatprep.mubr.f32.mxu0 0.0
      %4911 = vmatmul.mubr.f32.gmra.mxu0 %v4763
      %v4912 = vpop.f32.mrf.mxu0
      %v4913 = vadd.f32 0.0, %v4912
      %v4914 = vpop.f32.mrf.mxu0
      %4915 = vmatprep.mubr.f32.mxu0 0.0
      %4916 = vmatmul.mubr.f32.gmra.mxu0 %v4764
      %v4917 = vpop.f32.mrf.mxu0
      %v4918 = vadd.f32 0.0, %v4917
      %v4919 = vpop.f32.mrf.mxu0
      %4920 = vmatprep.mubr.f32.mxu0 0.0
      %4921 = vmatmul.mubr.f32.gmra.mxu0 %v4765
      %v4922 = vpop.f32.mrf.mxu0
      %v4923 = vadd.f32 0.0, %v4922
      %v4924 = vpop.f32.mrf.mxu0
      %4925 = vmatprep.mubr.f32.mxu0 0.0
      %4926 = vmatmul.mubr.f32.gmra.mxu0 %v4766
      %v4927 = vpop.f32.mrf.mxu0
      %v4928 = vadd.f32 0.0, %v4927
      %v4929 = vpop.f32.mrf.mxu0
      %4930 = vmatprep.mubr.f32.mxu0 0.0
      %4931 = vmatmul.mubr.f32.gmra.mxu0 %v4767
      %v4932 = vpop.f32.mrf.mxu0
      %v4933 = vadd.f32 0.0, %v4932
      %v4934 = vpop.f32.mrf.mxu0
      %4935 = vmatprep.mubr.f32.mxu0 0.0
      %4936 = vmatmul.mubr.f32.gmra.mxu0 %v4768
      %v4937 = vpop.f32.mrf.mxu0
      %v4938 = vadd.f32 0.0, %v4937
      %v4939 = vpop.f32.mrf.mxu0
      %4940 = vdwg.mxu0
      %v4941 = vadd.f32 %v4733, %v4853
      %v4942 = vadd.f32 %v4734, %v4858
      %v4943 = vadd.f32 %v4735, %v4863
      %v4944 = vadd.f32 %v4736, %v4868
      %v4945 = vadd.f32 %v4737, %v4873
      %v4946 = vadd.f32 %v4738, %v4878
      %v4947 = vadd.f32 %v4739, %v4883
      %v4948 = vadd.f32 %v4740, %v4888
      %v4949 = vadd.f32 %v4741, %v4893
      %v4950 = vadd.f32 %v4742, %v4898
      %v4951 = vadd.f32 %v4743, %v4903
      %v4952 = vadd.f32 %v4744, %v4908
      %v4953 = vadd.f32 %v4745, %v4913
      %v4954 = vadd.f32 %v4746, %v4918
      %v4955 = vadd.f32 %v4747, %v4923
      %v4956 = vadd.f32 %v4748, %v4928
      %v4957 = vadd.f32 %v4749, %v4933
      %v4958 = vadd.f32 %v4750, %v4938
      %v4959 = vld [vmem:[#allocation3 + $0x26] sm:$0xff]
      %v4960 = vld [vmem:[#allocation3 + $0x2e] sm:$0xff]
      %v4961 = vld [vmem:[#allocation3 + $0x36] sm:$0xff]
      %v4962 = vld [vmem:[#allocation3 + $0x3e] sm:$0xff]
      %v4963 = vld [vmem:[#allocation3 + $0x46] sm:$0xff]
      %v4964 = vld [vmem:[#allocation3 + $0x4e] sm:$0xff]
      %v4965 = vld [vmem:[#allocation3 + $0x56] sm:$0xff]
      %v4966 = vld [vmem:[#allocation3 + $0x5e] sm:$0xff]
      %v4967 = vld [vmem:[#allocation3 + $0x66] sm:$0xff]
      %v4968 = vld [vmem:[#allocation3 + $0x6e] sm:$0xff]
      %v4969 = vld [vmem:[#allocation3 + $0x76] sm:$0xff]
      %v4970 = vld [vmem:[#allocation3 + $0x7e] sm:$0xff]
      %v4971 = vld [vmem:[#allocation3 + $0x86] sm:$0xff]
      %v4972 = vld [vmem:[#allocation3 + $0x8e] sm:$0xff]
      %v4973 = vld [vmem:[#allocation3 + $0x96] sm:$0xff]
      %v4974 = vld [vmem:[#allocation3 + $0x9e] sm:$0xff]
      %v4975 = vld [vmem:[#allocation3 + $0xa6] sm:$0xff]
      %v4976 = vld [vmem:[#allocation3 + $0xae] sm:$0xff]
      %s4977 = scalar_lea.vmem %s4, 1024
      %v4978 = vld [vmem:[%s4977] sm:$0xff]
      %v4979 = vld [vmem:[%s4977 + $0x8] sm:$0xff]
      %v4980 = vld [vmem:[%s4977 + $0x10] sm:$0xff]
      %v4981 = vld [vmem:[%s4977 + $0x18] sm:$0xff]
      %v4982 = vld [vmem:[%s4977 + $0x20] sm:$0xff]
      %v4983 = vld [vmem:[%s4977 + $0x28] sm:$0xff]
      %v4984 = vld [vmem:[%s4977 + $0x30] sm:$0xff]
      %v4985 = vld [vmem:[%s4977 + $0x38] sm:$0xff]
      %v4986 = vld [vmem:[%s4977 + $0x40] sm:$0xff]
      %v4987 = vld [vmem:[%s4977 + $0x48] sm:$0xff]
      %v4988 = vld [vmem:[%s4977 + $0x50] sm:$0xff]
      %v4989 = vld [vmem:[%s4977 + $0x58] sm:$0xff]
      %v4990 = vld [vmem:[%s4977 + $0x60] sm:$0xff]
      %v4991 = vld [vmem:[%s4977 + $0x68] sm:$0xff]
      %v4992 = vld [vmem:[%s4977 + $0x70] sm:$0xff]
      %v4993 = vld [vmem:[%s4977 + $0x78] sm:$0xff]
      %4994 = vmatprep.subr.mxu0 0.0
      %4995 = vmatpush1.msra.mxu0 %v4993
      %4996 = vmatprep.subr.mxu0 0.0
      %4997 = vmatpush1.msra.mxu0 %v4992
      %4998 = vmatprep.subr.mxu0 0.0
      %4999 = vmatpush1.msra.mxu0 %v4991
      %5000 = vmatprep.subr.mxu0 0.0
      %5001 = vmatpush1.msra.mxu0 %v4990
      %5002 = vmatprep.subr.mxu0 0.0
      %5003 = vmatpush1.msra.mxu0 %v4989
      %5004 = vmatprep.subr.mxu0 0.0
      %5005 = vmatpush1.msra.mxu0 %v4988
      %5006 = vmatprep.subr.mxu0 0.0
      %5007 = vmatpush1.msra.mxu0 %v4987
      %5008 = vmatprep.subr.mxu0 0.0
      %5009 = vmatpush1.msra.mxu0 %v4986
      %5010 = vmatprep.subr.mxu0 0.0
      %5011 = vmatpush1.msra.mxu0 %v4985
      %5012 = vmatprep.subr.mxu0 0.0
      %5013 = vmatpush1.msra.mxu0 %v4984
      %5014 = vmatprep.subr.mxu0 0.0
      %5015 = vmatpush1.msra.mxu0 %v4983
      %5016 = vmatprep.subr.mxu0 0.0
      %5017 = vmatpush1.msra.mxu0 %v4982
      %5018 = vmatprep.subr.mxu0 0.0
      %5019 = vmatpush1.msra.mxu0 %v4981
      %5020 = vmatprep.subr.mxu0 0.0
      %5021 = vmatpush1.msra.mxu0 %v4980
      %5022 = vmatprep.subr.mxu0 0.0
      %5023 = vmatpush1.msra.mxu0 %v4979
      %5024 = vmatprep.subr.mxu0 0.0
      %5025 = vmatpush1.msra.mxu0 %v4978
      %5026 = vmatprep.subr.mxu0 0.0
      %5027 = vmatpush2.msra.mxu0 0.0
      %5028 = vmatprep.subr.mxu0 0.0
      %5029 = vmatpush2.msra.mxu0 0.0
      %5030 = vmatprep.subr.mxu0 0.0
      %5031 = vmatpush2.msra.mxu0 0.0
      %5032 = vmatprep.subr.mxu0 0.0
      %5033 = vmatpush2.msra.mxu0 0.0
      %5034 = vmatprep.subr.mxu0 0.0
      %5035 = vmatpush2.msra.mxu0 0.0
      %5036 = vmatprep.subr.mxu0 0.0
      %5037 = vmatpush2.msra.mxu0 0.0
      %5038 = vmatprep.subr.mxu0 0.0
      %5039 = vmatpush2.msra.mxu0 0.0
      %5040 = vmatprep.subr.mxu0 0.0
      %5041 = vmatpush2.msra.mxu0 0.0
      %5042 = vmatprep.subr.mxu0 0.0
      %5043 = vmatpush2.msra.mxu0 0.0
      %5044 = vmatprep.subr.mxu0 0.0
      %5045 = vmatpush2.msra.mxu0 0.0
      %5046 = vmatprep.subr.mxu0 0.0
      %5047 = vmatpush2.msra.mxu0 0.0
      %5048 = vmatprep.subr.mxu0 0.0
      %5049 = vmatpush2.msra.mxu0 0.0
      %5050 = vmatprep.subr.mxu0 0.0
      %5051 = vmatpush2.msra.mxu0 0.0
      %5052 = vmatprep.subr.mxu0 0.0
      %5053 = vmatpush2.msra.mxu0 0.0
      %5054 = vmatprep.subr.mxu0 0.0
      %5055 = vmatpush2.msra.mxu0 0.0
      %5056 = vmatprep.subr.mxu0 0.0
      %5057 = vmatpush2.msra.mxu0 0.0
      %5058 = vmatprep.mubr.f32.mxu0 0.0
      %5059 = vmatmul.mubr.f32.gmra.mxu0 %v4959
      %v5060 = vpop.f32.mrf.mxu0
      %v5061 = vadd.f32 0.0, %v5060
      %v5062 = vpop.f32.mrf.mxu0
      %5063 = vmatprep.mubr.f32.mxu0 0.0
      %5064 = vmatmul.mubr.f32.gmra.mxu0 %v4960
      %v5065 = vpop.f32.mrf.mxu0
      %v5066 = vadd.f32 0.0, %v5065
      %v5067 = vpop.f32.mrf.mxu0
      %5068 = vmatprep.mubr.f32.mxu0 0.0
      %5069 = vmatmul.mubr.f32.gmra.mxu0 %v4961
      %v5070 = vpop.f32.mrf.mxu0
      %v5071 = vadd.f32 0.0, %v5070
      %v5072 = vpop.f32.mrf.mxu0
      %5073 = vmatprep.mubr.f32.mxu0 0.0
      %5074 = vmatmul.mubr.f32.gmra.mxu0 %v4962
      %v5075 = vpop.f32.mrf.mxu0
      %v5076 = vadd.f32 0.0, %v5075
      %v5077 = vpop.f32.mrf.mxu0
      %5078 = vmatprep.mubr.f32.mxu0 0.0
      %5079 = vmatmul.mubr.f32.gmra.mxu0 %v4963
      %v5080 = vpop.f32.mrf.mxu0
      %v5081 = vadd.f32 0.0, %v5080
      %v5082 = vpop.f32.mrf.mxu0
      %5083 = vmatprep.mubr.f32.mxu0 0.0
      %5084 = vmatmul.mubr.f32.gmra.mxu0 %v4964
      %v5085 = vpop.f32.mrf.mxu0
      %v5086 = vadd.f32 0.0, %v5085
      %v5087 = vpop.f32.mrf.mxu0
      %5088 = vmatprep.mubr.f32.mxu0 0.0
      %5089 = vmatmul.mubr.f32.gmra.mxu0 %v4965
      %v5090 = vpop.f32.mrf.mxu0
      %v5091 = vadd.f32 0.0, %v5090
      %v5092 = vpop.f32.mrf.mxu0
      %5093 = vmatprep.mubr.f32.mxu0 0.0
      %5094 = vmatmul.mubr.f32.gmra.mxu0 %v4966
      %v5095 = vpop.f32.mrf.mxu0
      %v5096 = vadd.f32 0.0, %v5095
      %v5097 = vpop.f32.mrf.mxu0
      %5098 = vmatprep.mubr.f32.mxu0 0.0
      %5099 = vmatmul.mubr.f32.gmra.mxu0 %v4967
      %v5100 = vpop.f32.mrf.mxu0
      %v5101 = vadd.f32 0.0, %v5100
      %v5102 = vpop.f32.mrf.mxu0
      %5103 = vmatprep.mubr.f32.mxu0 0.0
      %5104 = vmatmul.mubr.f32.gmra.mxu0 %v4968
      %v5105 = vpop.f32.mrf.mxu0
      %v5106 = vadd.f32 0.0, %v5105
      %v5107 = vpop.f32.mrf.mxu0
      %5108 = vmatprep.mubr.f32.mxu0 0.0
      %5109 = vmatmul.mubr.f32.gmra.mxu0 %v4969
      %v5110 = vpop.f32.mrf.mxu0
      %v5111 = vadd.f32 0.0, %v5110
      %v5112 = vpop.f32.mrf.mxu0
      %5113 = vmatprep.mubr.f32.mxu0 0.0
      %5114 = vmatmul.mubr.f32.gmra.mxu0 %v4970
      %v5115 = vpop.f32.mrf.mxu0
      %v5116 = vadd.f32 0.0, %v5115
      %v5117 = vpop.f32.mrf.mxu0
      %5118 = vmatprep.mubr.f32.mxu0 0.0
      %5119 = vmatmul.mubr.f32.gmra.mxu0 %v4971
      %v5120 = vpop.f32.mrf.mxu0
      %v5121 = vadd.f32 0.0, %v5120
      %v5122 = vpop.f32.mrf.mxu0
      %5123 = vmatprep.mubr.f32.mxu0 0.0
      %5124 = vmatmul.mubr.f32.gmra.mxu0 %v4972
      %v5125 = vpop.f32.mrf.mxu0
      %v5126 = vadd.f32 0.0, %v5125
      %v5127 = vpop.f32.mrf.mxu0
      %5128 = vmatprep.mubr.f32.mxu0 0.0
      %5129 = vmatmul.mubr.f32.gmra.mxu0 %v4973
      %v5130 = vpop.f32.mrf.mxu0
      %v5131 = vadd.f32 0.0, %v5130
      %v5132 = vpop.f32.mrf.mxu0
      %5133 = vmatprep.mubr.f32.mxu0 0.0
      %5134 = vmatmul.mubr.f32.gmra.mxu0 %v4974
      %v5135 = vpop.f32.mrf.mxu0
      %v5136 = vadd.f32 0.0, %v5135
      %v5137 = vpop.f32.mrf.mxu0
      %5138 = vmatprep.mubr.f32.mxu0 0.0
      %5139 = vmatmul.mubr.f32.gmra.mxu0 %v4975
      %v5140 = vpop.f32.mrf.mxu0
      %v5141 = vadd.f32 0.0, %v5140
      %v5142 = vpop.f32.mrf.mxu0
      %5143 = vmatprep.mubr.f32.mxu0 0.0
      %5144 = vmatmul.mubr.f32.gmra.mxu0 %v4976
      %v5145 = vpop.f32.mrf.mxu0
      %v5146 = vadd.f32 0.0, %v5145
      %v5147 = vpop.f32.mrf.mxu0
      %5148 = vdwg.mxu0
      %v5149 = vadd.f32 %v4941, %v5061
      %v5150 = vadd.f32 %v4942, %v5066
      %v5151 = vadd.f32 %v4943, %v5071
      %v5152 = vadd.f32 %v4944, %v5076
      %v5153 = vadd.f32 %v4945, %v5081
      %v5154 = vadd.f32 %v4946, %v5086
      %v5155 = vadd.f32 %v4947, %v5091
      %v5156 = vadd.f32 %v4948, %v5096
      %v5157 = vadd.f32 %v4949, %v5101
      %v5158 = vadd.f32 %v4950, %v5106
      %v5159 = vadd.f32 %v4951, %v5111
      %v5160 = vadd.f32 %v4952, %v5116
      %v5161 = vadd.f32 %v4953, %v5121
      %v5162 = vadd.f32 %v4954, %v5126
      %v5163 = vadd.f32 %v4955, %v5131
      %v5164 = vadd.f32 %v4956, %v5136
      %v5165 = vadd.f32 %v4957, %v5141
      %v5166 = vadd.f32 %v4958, %v5146
      %v5167 = vld [vmem:[%s5] sm:$0x1]
      %v5169 = vlaneseq
      %v5170 = vshrl.u32 %v5169, 7
      %v5171 = vsub.s32 0, %v5170
      %v5172 = vrot.slane %v5167, %v5171
      %v5174 = vmul.f32 %v5149, %v5172
      %v5175 = vmul.f32 %v5150, %v5172
      %v5176 = vmul.f32 %v5151, %v5172
      %v5177 = vmul.f32 %v5152, %v5172
      %v5178 = vmul.f32 %v5153, %v5172
      %v5179 = vmul.f32 %v5154, %v5172
      %v5180 = vmul.f32 %v5155, %v5172
      %v5181 = vmul.f32 %v5156, %v5172
      %v5182 = vmul.f32 %v5157, %v5172
      %v5183 = vmul.f32 %v5158, %v5172
      %v5184 = vmul.f32 %v5159, %v5172
      %v5185 = vmul.f32 %v5160, %v5172
      %v5186 = vmul.f32 %v5161, %v5172
      %v5187 = vmul.f32 %v5162, %v5172
      %v5188 = vmul.f32 %v5163, %v5172
      %v5189 = vmul.f32 %v5164, %v5172
      %v5190 = vmul.f32 %v5165, %v5172
      %v5191 = vmul.f32 %v5166, %v5172
      %v5192 = vld [vmem:[%s6] sm:$0x1]
      %v5194 = vlaneseq
      %v5195 = vshrl.u32 %v5194, 7
      %v5196 = vsub.s32 0, %v5195
      %v5197 = vrot.slane %v5192, %v5196
      %v5199 = vadd.f32 %v5174, %v5197
      %v5200 = vadd.f32 %v5175, %v5197
      %v5201 = vadd.f32 %v5176, %v5197
      %v5202 = vadd.f32 %v5177, %v5197
      %v5203 = vadd.f32 %v5178, %v5197
      %v5204 = vadd.f32 %v5179, %v5197
      %v5205 = vadd.f32 %v5180, %v5197
      %v5206 = vadd.f32 %v5181, %v5197
      %v5207 = vadd.f32 %v5182, %v5197
      %v5208 = vadd.f32 %v5183, %v5197
      %v5209 = vadd.f32 %v5184, %v5197
      %v5210 = vadd.f32 %v5185, %v5197
      %v5211 = vadd.f32 %v5186, %v5197
      %v5212 = vadd.f32 %v5187, %v5197
      %v5213 = vadd.f32 %v5188, %v5197
      %v5214 = vadd.f32 %v5189, %v5197
      %v5215 = vadd.f32 %v5190, %v5197
      %v5216 = vadd.f32 %v5191, %v5197
      %v5217 = vxor.u32 %v5199, 2147483648
      %v5218 = vxor.u32 %v5200, 2147483648
      %v5219 = vxor.u32 %v5201, 2147483648
      %v5220 = vxor.u32 %v5202, 2147483648
      %v5221 = vxor.u32 %v5203, 2147483648
      %v5222 = vxor.u32 %v5204, 2147483648
      %v5223 = vxor.u32 %v5205, 2147483648
      %v5224 = vxor.u32 %v5206, 2147483648
      %v5225 = vxor.u32 %v5207, 2147483648
      %v5226 = vxor.u32 %v5208, 2147483648
      %v5227 = vxor.u32 %v5209, 2147483648
      %v5228 = vxor.u32 %v5210, 2147483648
      %v5229 = vxor.u32 %v5211, 2147483648
      %v5230 = vxor.u32 %v5212, 2147483648
      %v5231 = vxor.u32 %v5213, 2147483648
      %v5232 = vxor.u32 %v5214, 2147483648
      %v5233 = vxor.u32 %v5215, 2147483648
      %v5234 = vxor.u32 %v5216, 2147483648
      %v5235 = vmul.f32 %v5217, 1.442695
      %v5236 = vpow.pop %v5235
      %v5237 = vmul.f32 %v5218, 1.442695
      %v5238 = vpow.pop %v5237
      %v5239 = vmul.f32 %v5219, 1.442695
      %v5240 = vpow.pop %v5239
      %v5241 = vmul.f32 %v5220, 1.442695
      %v5242 = vpow.pop %v5241
      %v5243 = vmul.f32 %v5221, 1.442695
      %v5244 = vpow.pop %v5243
      %v5245 = vmul.f32 %v5222, 1.442695
      %v5246 = vpow.pop %v5245
      %v5247 = vmul.f32 %v5223, 1.442695
      %v5248 = vpow.pop %v5247
      %v5249 = vmul.f32 %v5224, 1.442695
      %v5250 = vpow.pop %v5249
      %v5251 = vmul.f32 %v5225, 1.442695
      %v5252 = vpow.pop %v5251
      %v5253 = vmul.f32 %v5226, 1.442695
      %v5254 = vpow.pop %v5253
      %v5255 = vmul.f32 %v5227, 1.442695
      %v5256 = vpow.pop %v5255
      %v5257 = vmul.f32 %v5228, 1.442695
      %v5258 = vpow.pop %v5257
      %v5259 = vmul.f32 %v5229, 1.442695
      %v5260 = vpow.pop %v5259
      %v5261 = vmul.f32 %v5230, 1.442695
      %v5262 = vpow.pop %v5261
      %v5263 = vmul.f32 %v5231, 1.442695
      %v5264 = vpow.pop %v5263
      %v5265 = vmul.f32 %v5232, 1.442695
      %v5266 = vpow.pop %v5265
      %v5267 = vmul.f32 %v5233, 1.442695
      %v5268 = vpow.pop %v5267
      %v5269 = vmul.f32 %v5234, 1.442695
      %v5270 = vpow.pop %v5269
      %v5271 = vadd.f32 %v5236, 1.0
      %v5272 = vadd.f32 %v5238, 1.0
      %v5273 = vadd.f32 %v5240, 1.0
      %v5274 = vadd.f32 %v5242, 1.0
      %v5275 = vadd.f32 %v5244, 1.0
      %v5276 = vadd.f32 %v5246, 1.0
      %v5277 = vadd.f32 %v5248, 1.0
      %v5278 = vadd.f32 %v5250, 1.0
      %v5279 = vadd.f32 %v5252, 1.0
      %v5280 = vadd.f32 %v5254, 1.0
      %v5281 = vadd.f32 %v5256, 1.0
      %v5282 = vadd.f32 %v5258, 1.0
      %v5283 = vadd.f32 %v5260, 1.0
      %v5284 = vadd.f32 %v5262, 1.0
      %v5285 = vadd.f32 %v5264, 1.0
      %v5286 = vadd.f32 %v5266, 1.0
      %v5287 = vadd.f32 %v5268, 1.0
      %v5288 = vadd.f32 %v5270, 1.0
      %v5289 = vrcp.pop %v5271
      %v5290 = vmul.f32 1.0, %v5289
      %v5291 = vrcp.pop %v5272
      %v5292 = vmul.f32 1.0, %v5291
      %v5293 = vrcp.pop %v5273
      %v5294 = vmul.f32 1.0, %v5293
      %v5295 = vrcp.pop %v5274
      %v5296 = vmul.f32 1.0, %v5295
      %v5297 = vrcp.pop %v5275
      %v5298 = vmul.f32 1.0, %v5297
      %v5299 = vrcp.pop %v5276
      %v5300 = vmul.f32 1.0, %v5299
      %v5301 = vrcp.pop %v5277
      %v5302 = vmul.f32 1.0, %v5301
      %v5303 = vrcp.pop %v5278
      %v5304 = vmul.f32 1.0, %v5303
      %v5305 = vrcp.pop %v5279
      %v5306 = vmul.f32 1.0, %v5305
      %v5307 = vrcp.pop %v5280
      %v5308 = vmul.f32 1.0, %v5307
      %v5309 = vrcp.pop %v5281
      %v5310 = vmul.f32 1.0, %v5309
      %v5311 = vrcp.pop %v5282
      %v5312 = vmul.f32 1.0, %v5311
      %v5313 = vrcp.pop %v5283
      %v5314 = vmul.f32 1.0, %v5313
      %v5315 = vrcp.pop %v5284
      %v5316 = vmul.f32 1.0, %v5315
      %v5317 = vrcp.pop %v5285
      %v5318 = vmul.f32 1.0, %v5317
      %v5319 = vrcp.pop %v5286
      %v5320 = vmul.f32 1.0, %v5319
      %v5321 = vrcp.pop %v5287
      %v5322 = vmul.f32 1.0, %v5321
      %v5323 = vrcp.pop %v5288
      %v5324 = vmul.f32 1.0, %v5323
      %v5325 = vmul.f32 %v5199, %v5290
      %v5326 = vmul.f32 %v5200, %v5292
      %v5327 = vmul.f32 %v5201, %v5294
      %v5328 = vmul.f32 %v5202, %v5296
      %v5329 = vmul.f32 %v5203, %v5298
      %v5330 = vmul.f32 %v5204, %v5300
      %v5331 = vmul.f32 %v5205, %v5302
      %v5332 = vmul.f32 %v5206, %v5304
      %v5333 = vmul.f32 %v5207, %v5306
      %v5334 = vmul.f32 %v5208, %v5308
      %v5335 = vmul.f32 %v5209, %v5310
      %v5336 = vmul.f32 %v5210, %v5312
      %v5337 = vmul.f32 %v5211, %v5314
      %v5338 = vmul.f32 %v5212, %v5316
      %v5339 = vmul.f32 %v5213, %v5318
      %v5340 = vmul.f32 %v5214, %v5320
      %v5341 = vmul.f32 %v5215, %v5322
      %v5342 = vmul.f32 %v5216, %v5324
      %v5343 = vld [vmem:[#allocation2 + $0x25] sm:$0xff]
      %v5344 = vld [vmem:[#allocation2 + $0x2d] sm:$0xff]
      %v5345 = vld [vmem:[#allocation2 + $0x35] sm:$0xff]
      %v5346 = vld [vmem:[#allocation2 + $0x3d] sm:$0xff]
      %v5347 = vld [vmem:[#allocation2 + $0x45] sm:$0xff]
      %v5348 = vld [vmem:[#allocation2 + $0x4d] sm:$0xff]
      %v5349 = vld [vmem:[#allocation2 + $0x55] sm:$0xff]
      %v5350 = vld [vmem:[#allocation2 + $0x5d] sm:$0xff]
      %v5351 = vld [vmem:[#allocation2 + $0x65] sm:$0xff]
      %v5352 = vld [vmem:[#allocation2 + $0x6d] sm:$0xff]
      %v5353 = vld [vmem:[#allocation2 + $0x75] sm:$0xff]
      %v5354 = vld [vmem:[#allocation2 + $0x7d] sm:$0xff]
      %v5355 = vld [vmem:[#allocation2 + $0x85] sm:$0xff]
      %v5356 = vld [vmem:[#allocation2 + $0x8d] sm:$0xff]
      %v5357 = vld [vmem:[#allocation2 + $0x95] sm:$0xff]
      %v5358 = vld [vmem:[#allocation2 + $0x9d] sm:$0xff]
      %v5359 = vld [vmem:[#allocation2 + $0xa5] sm:$0xff]
      %v5360 = vld [vmem:[#allocation2 + $0xad] sm:$0xff]
      %v5361 = vadd.f32 %v5325, %v5343
      %v5362 = vadd.f32 %v5326, %v5344
      %v5363 = vadd.f32 %v5327, %v5345
      %v5364 = vadd.f32 %v5328, %v5346
      %v5365 = vadd.f32 %v5329, %v5347
      %v5366 = vadd.f32 %v5330, %v5348
      %v5367 = vadd.f32 %v5331, %v5349
      %v5368 = vadd.f32 %v5332, %v5350
      %v5369 = vadd.f32 %v5333, %v5351
      %v5370 = vadd.f32 %v5334, %v5352
      %v5371 = vadd.f32 %v5335, %v5353
      %v5372 = vadd.f32 %v5336, %v5354
      %v5373 = vadd.f32 %v5337, %v5355
      %v5374 = vadd.f32 %v5338, %v5356
      %v5375 = vadd.f32 %v5339, %v5357
      %v5376 = vadd.f32 %v5340, %v5358
      %v5377 = vadd.f32 %v5341, %v5359
      %v5378 = vadd.f32 %v5342, %v5360
      %5379 = vst [vmem:[%s254] sm:$0xff] %v5361
      %5380 = vst [vmem:[%s254 + $0x8] sm:$0xff] %v5362
      %5381 = vst [vmem:[%s254 + $0x10] sm:$0xff] %v5363
      %5382 = vst [vmem:[%s254 + $0x18] sm:$0xff] %v5364
      %5383 = vst [vmem:[%s254 + $0x20] sm:$0xff] %v5365
      %5384 = vst [vmem:[%s254 + $0x28] sm:$0xff] %v5366
      %5385 = vst [vmem:[%s254 + $0x30] sm:$0xff] %v5367
      %5386 = vst [vmem:[%s254 + $0x38] sm:$0xff] %v5368
      %5387 = vst [vmem:[%s254 + $0x40] sm:$0xff] %v5369
      %5388 = vst [vmem:[%s254 + $0x48] sm:$0xff] %v5370
      %5389 = vst [vmem:[%s254 + $0x50] sm:$0xff] %v5371
      %5390 = vst [vmem:[%s254 + $0x58] sm:$0xff] %v5372
      %5391 = vst [vmem:[%s254 + $0x60] sm:$0xff] %v5373
      %5392 = vst [vmem:[%s254 + $0x68] sm:$0xff] %v5374
      %5393 = vst [vmem:[%s254 + $0x70] sm:$0xff] %v5375
      %5394 = vst [vmem:[%s254 + $0x78] sm:$0xff] %v5376
      %5395 = vst [vmem:[%s254 + $0x80] sm:$0xff] %v5377
      %5396 = vst [vmem:[%s254 + $0x88] sm:$0xff] %v5378
      %s5397 = smul.u32 18, %s23
      %p5398 = scmp.lt.s32.totalorder %s22, 1
      %s5399 = scalar_select %p5398, %s22, 1
      %p5400 = scmp.lt.s32.totalorder %s5397, 35
      %s5401 = scalar_select %p5400, %s5397, 35
      %s5402 = smul.addr %s5399, 36
      %s5403 = sadd.s32 %s5401, %s5402
      %s5404 = smul.addr %s5403, 8
      %s5405 = scalar_lea.vmem %s7, %s5404
      // Predicated region
      $region79: #{bottleneck_forward.1} parent=43 // pred_check
        %p5406 = pneg %p176
      $region80: #{bottleneck_forward.1} parent=43 // pred_check_branch
        %5408 = sbr.rel (%p5406) target = $region82
      $region81: #{bottleneck_forward.1} parent=43 // pred_region
        %s5409 = smul.u32 18, %s23
      $region82: #{bottleneck_forward.1} parent=43 // pred_fallthru
        _
    $region44: #{bottleneck_forward.1} parent=5 // pred_fallthru
      _
    %p5410 = scmp.le.s32.totalorder 2, %s13
    // Predicated region
    $region83: #{bottleneck_forward.1} parent=5 // pred_check
      %p5411 = pneg %p5410
    $region84: #{bottleneck_forward.1} parent=5 // pred_check_branch
      %5413 = sbr.rel (%p5411) target = $region86
    $region85: #{bottleneck_forward.1} parent=5 // pred_region
      %s5414 = ssub.s32 %s13, 2
      // Predicated region
      $region87: #{bottleneck_forward.1} parent=85 // pred_check
        %p5415 = pneg %p182
      $region88: #{bottleneck_forward.1} parent=85 // pred_check_branch
        %5417 = sbr.rel (%p5415) target = $region90
      $region89: #{bottleneck_forward.1} parent=85 // pred_region
        %s5418 = smul.u32 18, %s25
        %p5419 = scmp.lt.s32.totalorder %s24, 1
        %s5420 = scalar_select %p5419, %s24, 1
        %p5421 = scmp.lt.s32.totalorder %s5418, 35
        %s5422 = scalar_select %p5421, %s5418, 35
        %s5423 = smul.addr %s5420, 36
        %s5424 = sadd.s32 %s5422, %s5423
        %s5425 = smul.addr %s5424, 8
        %s5426 = scalar_lea.vmem %s7, %s5425
      $region90: #{bottleneck_forward.1} parent=85 // pred_fallthru
        _
    $region86: #{bottleneck_forward.1} parent=5 // pred_fallthru
      _
  $region6: #{bottleneck_forward.1} parent=0 // loop_footer
    %s17 = sadd.s32 1, %s13
  $region7: #{bottleneck_forward.1} parent=0 // loop_footer_branch
    %12 = sbr.rel target = $region3
  $region8: #{bottleneck_forward.1} parent=0 // loop_exit
    _
  %5427 = vsyncmov [#allocation4]
  %s5428 = vpop.sfrf %5427
  %p5429 = scmp.eq.s32.totalorder %s5428, 0
  %p5430 = pneg %p5429
  %5432 = shalt.err (%p5430)

</llo_original>
